<compile_context>
chip_gen: v5e
topology: v5e:2x2
jax: 0.10.0
libtpu: 0.0.40
codegen_flags: <defaults>
</compile_context>

<pallas_src>
import functools

import jax
import jax.numpy as jnp
from jax.experimental import pallas as pl
from jax.experimental.pallas import tpu as pltpu


_CIN_PAD = 8  # pad the 3 RGB input channels to a sublane-aligned 8


# --------------------------------------------------------------------------
# In-kernel helpers (channel-major layout; TB images concatenated along lanes)
# --------------------------------------------------------------------------

def _conv3x3_relu(pad_ref, cin, w_ref, b_ref, masks, W, width):
    """3x3 'same' conv + bias + ReLU as a single deep-K matmul.

    pad_ref : VMEM scratch whose interior [m, m+width) holds the activation
              (cin rows); TB images are concatenated along the lane dim.
    masks   : (9, width) 0/1 f32, one row per tap (row 4 == all ones); zeroes
              every tap that would read an image border, a neighbouring image
              or the buffer margins.
    returns : (Cout, width) float32.
    """
    m = W + 1
    pieces = []
    for kh in range(3):
        for kw in range(3):
            k = kh * 3 + kw
            s = (kh - 1) * W + (kw - 1)
            win = pad_ref[0:cin, m + s:m + s + width]      # static-offset slice
            if k != 4:                                     # centre tap: no mask
                win = win * masks[k:k + 1, :]
            pieces.append(win)
    patch = jnp.concatenate(pieces, axis=0)                # (9*cin, width)
    acc = jnp.dot(w_ref[...], patch, preferred_element_type=jnp.float32)
    return jnp.maximum(acc + b_ref[...], 0.0)


def _maxpool2x2(pad_ref, cin, sel_ref, W, width):
    """2x2 / stride-2 max pool: max of 4 shifted slices + 0/1 selection matmul.

    Anchor lanes (the only columns the block-diagonal selection matrix keeps)
    never read margins or a neighbouring image, so no masking is needed.
    """
    m = W + 1
    p00 = pad_ref[0:cin, m:m + width]
    p01 = pad_ref[0:cin, m + 1:m + 1 + width]
    p10 = pad_ref[0:cin, m + W:m + W + width]
    p11 = pad_ref[0:cin, m + W + 1:m + W + 1 + width]
    mx = jnp.maximum(jnp.maximum(p00, p01), jnp.maximum(p10, p11))
    return jnp.dot(mx, sel_ref[...], preferred_element_type=jnp.float32)


def _mini_unet_kernel(x_ref, w1_ref, b1_ref, w2_ref, b2_ref, w3_ref, b3_ref,
                      w4_ref, b4_ref, sel_ref, up_ref, mhi_ref, mlo_ref,
                      o_ref, pad_hi, pad_lo, *, H, W, TB):
    """TB batch elements per grid step; everything resident in VMEM."""
    n = H * W
    Hh, Wh = H // 2, W // 2
    nl = Hh * Wh
    wf, wl = TB * n, TB * nl
    m_hi, m_lo = W + 1, Wh + 1

    cin = x_ref.shape[1]
    c1, c2 = w1_ref.shape[0], w2_ref.shape[0]
    c3, c4 = w3_ref.shape[0], w4_ref.shape[0]

    # Zero ONLY the margin strips, once per grid step.  Every invalid tap is
    # masked to zero anyway, but uninitialised scratch could hold NaN/Inf and
    # 0 * NaN would poison the matmuls.
    rhi, rlo = pad_hi.shape[0], pad_lo.shape[0]
    pad_hi[:, 0:m_hi] = jnp.zeros((rhi, m_hi), jnp.float32)
    pad_hi[:, m_hi + wf:m_hi + wf + m_hi] = jnp.zeros((rhi, m_hi), jnp.float32)
    pad_lo[:, 0:m_lo] = jnp.zeros((rlo, m_lo), jnp.float32)
    pad_lo[:, m_lo + wl:m_lo + wl + m_lo] = jnp.zeros((rlo, m_lo), jnp.float32)

    mhi = mhi_ref[...]                                     # (9, wf)
    mlo = mlo_ref[...]                                     # (9, wl)

    # Stage the TB input images side by side in the full-res pad buffer.
    for t in range(TB):
        pad_hi[0:cin, m_hi + t * n:m_hi + (t + 1) * n] = x_ref[t]

    x1 = _conv3x3_relu(pad_hi, cin, w1_ref, b1_ref, mhi, W, wf)    # (16, wf)
    pad_hi[0:c1, m_hi:m_hi + wf] = x1
    x2 = _conv3x3_relu(pad_hi, c1, w2_ref, b2_ref, mhi, W, wf)     # (16, wf)
    pad_hi[0:c2, m_hi:m_hi + wf] = x2                              # for pool
    x3 = _maxpool2x2(pad_hi, c2, sel_ref, W, wf)                   # (16, wl)
    pad_lo[0:c2, m_lo:m_lo + wl] = x3
    x4 = _conv3x3_relu(pad_lo, c2, w3_ref, b3_ref, mlo, Wh, wl)    # (32, wl)
    pad_lo[0:c3, m_lo:m_lo + wl] = x4
    x5 = _conv3x3_relu(pad_lo, c3, w4_ref, b4_ref, mlo, Wh, wl)    # (32, wl)

    # Bilinear 2x upsample (align_corners=True) as one lane-dense matmul.
    x6 = jnp.dot(x5, up_ref[...], preferred_element_type=jnp.float32)  # (32, wf)

    # Write back per image; lane slices are multiples of 256 -> aligned stores.
    for t in range(TB):
        lo, hi = t * n, (t + 1) * n
        o_ref[t, 0:c4, :] = x6[:, lo:hi]                   # upsampled channels
        o_ref[t, c4:c4 + c2, :] = x2[:, lo:hi]             # skip connection


# --------------------------------------------------------------------------
# Host-side constant builders
# --------------------------------------------------------------------------

def _bilinear_matrix(n_out, n_in, dtype=jnp.float32):
    """A with (A @ v) = 1-D bilinear resize of v, align_corners=True."""
    if n_in == 1:
        return jnp.ones((n_out, 1), dtype)
    if n_out == 1:
        return jnp.zeros((1, n_in), dtype).at[0, 0].set(1.0)
    src = jnp.arange(n_out, dtype=jnp.float32) * (n_in - 1) / (n_out - 1)
    i0 = jnp.clip(jnp.floor(src).astype(jnp.int32), 0, n_in - 1)
    i1 = jnp.clip(i0 + 1, 0, n_in - 1)
    frac = src - i0.astype(jnp.float32)
    rows = jnp.arange(n_out)
    a = jnp.zeros((n_out, n_in), dtype)
    a = a.at[rows, i0].add((1.0 - frac).astype(dtype))
    a = a.at[rows, i1].add(frac.astype(dtype))
    return a


def _pool_select_matrix(H, W):
    """S (H*W, H*W//4): S[i, j] = 1 iff flat index i is the top-left anchor
    of output element j of a 2x2/stride-2 pooling grid."""
    Hh, Wh = H // 2, W // 2
    j = jnp.arange(Hh * Wh)
    anchors = (2 * (j // Wh)) * W + 2 * (j % Wh)
    return jnp.zeros((H * W, Hh * Wh), jnp.float32).at[anchors, j].set(1.0)


def _tap_masks(H, W, TB):
    """(9, TB*H*W) 0/1 masks, one per 3x3 tap, over TB lane-concatenated
    images.  Zero wherever the tap would read outside its own image."""
    n = H * W
    f = jnp.arange(TB * n, dtype=jnp.int32)
    q = f % n
    r = q // W
    c = q % W
    rows = []
    for kh in range(3):
        for kw in range(3):
            ok = jnp.ones((TB * n,), bool)
            if kh == 0:
                ok = ok & (r != 0)
            if kh == 2:
                ok = ok & (r != H - 1)
            if kw == 0:
                ok = ok & (c != 0)
            if kw == 2:
                ok = ok & (c != W - 1)
            rows.append(ok.astype(jnp.float32))
    return jnp.stack(rows, axis=0)


def _prep_conv(w_oihw, b, cin_pad=None):
    """OIHW weight -> (Cout, 9*Cin_pad) with column = (kh*3+kw)*Cin_pad + c."""
    cout, cin = w_oihw.shape[0], w_oihw.shape[1]
    cin_p = cin if cin_pad is None else cin_pad
    w = jnp.transpose(w_oihw, (0, 2, 3, 1))                # (Cout, kh, kw, Cin)
    if cin_p != cin:
        w = jnp.pad(w, ((0, 0), (0, 0), (0, 0), (0, cin_p - cin)))
    return w.reshape(cout, 9 * cin_p), b.reshape(cout, 1)


# --------------------------------------------------------------------------
# Full forward (single fused pallas_call)
# --------------------------------------------------------------------------

@functools.partial(jax.jit, static_argnames=("tb",))
def mini_unet_forward(x_nchw, params, tb=4):
    B, cin, H, W = x_nchw.shape
    assert H % 2 == 0 and W % 2 == 0
    n = H * W
    Hh, Wh = H // 2, W // 2
    nl = Hh * Wh

    tb = max(1, min(tb, B))
    G = -(-B // tb)                       # ceil(B / tb); grid length
    Bp = G * tb

    # NCHW -> channel-major flat (Bp, 8, n); channel pad keeps every im2col
    # slice sublane-aligned, batch pad makes B a multiple of the batch tile.
    x_flat = jnp.pad(x_nchw.reshape(B, cin, n),
                     ((0, Bp - B), (0, _CIN_PAD - cin), (0, 0)))

    w1, b1 = _prep_conv(*params["conv1"], cin_pad=_CIN_PAD)   # (16, 72)
    w2, b2 = _prep_conv(*params["conv2"])                     # (16, 144)
    w3, b3 = _prep_conv(*params["conv3"])                     # (32, 144)
    w4, b4 = _prep_conv(*params["conv4"])                     # (32, 288)

    eye = jnp.eye(tb, dtype=jnp.float32)
    # TODO(synk): replace these dense block-diagonal operators with separable
    # row/column versions before scaling H, W beyond ~48-64 (quadratic growth).
    sel = jnp.kron(eye, _pool_select_matrix(H, W))            # (tb*n, tb*nl)
    a_up = jnp.kron(eye, jnp.kron(_bilinear_matrix(H, Hh),
                                  _bilinear_matrix(W, Wh)).T)  # (tb*nl, tb*n)

    mask_hi = _tap_masks(H, W, tb)                            # (9, tb*n)
    mask_lo = _tap_masks(Hh, Wh, tb)                          # (9, tb*nl)

    c_out = w4.shape[0] + w2.shape[0]                         # 32 + 16 = 48
    rows_hi = max(_CIN_PAD, w1.shape[0], w2.shape[0])         # 16
    rows_lo = max(w2.shape[0], w3.shape[0])                   # 32

    def _resident(a):
        return pl.BlockSpec(a.shape, lambda i, _nd=a.ndim: (0,) * _nd)

    kernel = functools.partial(_mini_unet_kernel, H=H, W=W, TB=tb)

    out_flat = pl.pallas_call(
        kernel,
        out_shape=jax.ShapeDtypeStruct((Bp, c_out, n), jnp.float32),
        grid=(G,),
        in_specs=[
            pl.BlockSpec((tb, _CIN_PAD, n), lambda i: (i, 0, 0)),
            _resident(w1), _resident(b1),
            _resident(w2), _resident(b2),
            _resident(w3), _resident(b3),
            _resident(w4), _resident(b4),
            _resident(sel), _resident(a_up),
            _resident(mask_hi), _resident(mask_lo),
        ],
        out_specs=pl.BlockSpec((tb, c_out, n), lambda i: (i, 0, 0)),
        scratch_shapes=[
            pltpu.VMEM((rows_hi, tb * n + 2 * (W + 1)), jnp.float32),
            pltpu.VMEM((rows_lo, tb * nl + 2 * (Wh + 1)), jnp.float32),
        ],
        compiler_params=pltpu.CompilerParams(
            dimension_semantics=("parallel",)),
    )(x_flat, w1, b1, w2, b2, w3, b3, w4, b4, sel, a_up, mask_hi, mask_lo)

    # (B, 48, H*W) is row-major identical to NCHW -> free reshape.
    return out_flat[:B].reshape(B, c_out, H, W)


# --------------------------------------------------------------------------
# Parameters (deterministic, PyTorch-style OIHW weights + bias)
# --------------------------------------------------------------------------

def init_params(key):
    def conv_init(k, cin, cout):
        kw, kb = jax.random.split(k)
        bound = 1.0 / (cin * 9) ** 0.5
        w = jax.random.uniform(kw, (cout, cin, 3, 3), jnp.float32, -bound, bound)
        b = jax.random.uniform(kb, (cout,), jnp.float32, -bound, bound)
        return w, b
    k1, k2, k3, k4 = jax.random.split(key, 4)
    return {
        "conv1": conv_init(k1, 3, 16),
        "conv2": conv_init(k2, 16, 16),
        "conv3": conv_init(k3, 16, 32),
        "conv4": conv_init(k4, 32, 32),
    }


# --------------------------------------------------------------------------
# Pure-JAX reference (correctness check only)
# --------------------------------------------------------------------------

def mini_unet_reference(x_nchw, params):
    hp = jax.lax.Precision.HIGHEST
    x = jnp.transpose(x_nchw, (0, 2, 3, 1))

    def conv_relu(y, w, b):
        w_hwio = jnp.transpose(w, (2, 3, 1, 0))
        z = jax.lax.conv_general_dilated(
            y, w_hwio, window_strides=(1, 1), padding="SAME",
            dimension_numbers=("NHWC", "HWIO", "NHWC"), precision=hp)
        return jnp.maximum(z + b, 0.0)

    x1 = conv_relu(x, *params["conv1"])
    x2 = conv_relu(x1, *params["conv2"])
    x3 = jax.lax.reduce_window(x2, -jnp.inf, jax.lax.max,
                               (1, 2, 2, 1), (1, 2, 2, 1), "VALID")
    x4 = conv_relu(x3, *params["conv3"])
    x5 = conv_relu(x4, *params["conv4"])
    _, hh, wh, _ = x5.shape
    a_h = _bilinear_matrix(2 * hh, hh)
    a_w = _bilinear_matrix(2 * wh, wh)
    x6 = jnp.einsum("hH,wW,bHWc->bhwc", a_h, a_w, x5, precision=hp)
    x7 = jnp.concatenate([x6, x2], axis=-1)
    return jnp.transpose(x7, (0, 3, 1, 2))


if __name__ == "__main__":
    key = jax.random.PRNGKey(0)
    kx, kp = jax.random.split(key)
    x = jax.random.normal(kx, (8, 3, 16, 16), jnp.float32)
    params = init_params(kp)

    out = jax.block_until_ready(mini_unet_forward(x, params))
    assert out.shape == (8, 48, 16, 16), out.shape

    ref = mini_unet_reference(x, params)
    max_err = float(jnp.max(jnp.abs(out - ref)))
    assert max_err < 1e-3, f"max abs err {max_err}"

    print("KERNEL_OK")
</pallas_src>

<mosaic_0001>
module attributes {stable_mosaic.version = 11 : i64} {
  func.func @_mini_unet_kernel(%arg0: i32, %arg1: memref<4x8x256xf32, #tpu.memory_space<vmem>>, %arg2: memref<16x72xf32, #tpu.memory_space<vmem>>, %arg3: memref<16x1xf32, #tpu.memory_space<vmem>>, %arg4: memref<16x144xf32, #tpu.memory_space<vmem>>, %arg5: memref<16x1xf32, #tpu.memory_space<vmem>>, %arg6: memref<32x144xf32, #tpu.memory_space<vmem>>, %arg7: memref<32x1xf32, #tpu.memory_space<vmem>>, %arg8: memref<32x288xf32, #tpu.memory_space<vmem>>, %arg9: memref<32x1xf32, #tpu.memory_space<vmem>>, %arg10: memref<1024x256xf32, #tpu.memory_space<vmem>>, %arg11: memref<256x1024xf32, #tpu.memory_space<vmem>>, %arg12: memref<9x1024xf32, #tpu.memory_space<vmem>>, %arg13: memref<9x256xf32, #tpu.memory_space<vmem>>, %arg14: memref<4x48x256xf32, #tpu.memory_space<vmem>>, %arg15: memref<16x1058xf32, #tpu.memory_space<vmem>>, %arg16: memref<32x274xf32, #tpu.memory_space<vmem>>) attributes {dimension_semantics = [#tpu.dimension_semantics<parallel>], iteration_bounds = array<i64: 2>, scalar_prefetch = 0 : i64, scratch_operands = 2 : i64, tpu.core_type = #tpu.core_type<tc>, window_params = [{transform_indices = @transform_0, window_bounds = array<i64: 4, 8, 256>}, {pipeline_mode = #tpu.pipeline_mode<synchronous>, transform_indices = @transform_1, window_bounds = array<i64: 16, 72>}, {pipeline_mode = #tpu.pipeline_mode<synchronous>, transform_indices = @transform_2, window_bounds = array<i64: 16, 1>}, {pipeline_mode = #tpu.pipeline_mode<synchronous>, transform_indices = @transform_3, window_bounds = array<i64: 16, 144>}, {pipeline_mode = #tpu.pipeline_mode<synchronous>, transform_indices = @transform_4, window_bounds = array<i64: 16, 1>}, {pipeline_mode = #tpu.pipeline_mode<synchronous>, transform_indices = @transform_5, window_bounds = array<i64: 32, 144>}, {pipeline_mode = #tpu.pipeline_mode<synchronous>, transform_indices = @transform_6, window_bounds = array<i64: 32, 1>}, {pipeline_mode = #tpu.pipeline_mode<synchronous>, transform_indices = @transform_7, window_bounds = array<i64: 32, 288>}, {pipeline_mode = #tpu.pipeline_mode<synchronous>, transform_indices = @transform_8, window_bounds = array<i64: 32, 1>}, {pipeline_mode = #tpu.pipeline_mode<synchronous>, transform_indices = @transform_9, window_bounds = array<i64: 1024, 256>}, {pipeline_mode = #tpu.pipeline_mode<synchronous>, transform_indices = @transform_10, window_bounds = array<i64: 256, 1024>}, {pipeline_mode = #tpu.pipeline_mode<synchronous>, transform_indices = @transform_11, window_bounds = array<i64: 9, 1024>}, {pipeline_mode = #tpu.pipeline_mode<synchronous>, transform_indices = @transform_12, window_bounds = array<i64: 9, 256>}, {transform_indices = @transform_13, window_bounds = array<i64: 4, 48, 256>}]} {
    %cst = arith.constant 0.000000e+00 : f32
    %0 = vector.broadcast %cst : f32 to vector<16x17xf32>
    %c0 = arith.constant 0 : index
    %c0_0 = arith.constant 0 : index
    %1 = vector.load %arg15[%c0, %c0_0] : memref<16x1058xf32, #tpu.memory_space<vmem>>, vector<16x17xf32>
    tpu.vector_store %arg15[%c0, %c0_0], %0 {strides = array<i32>} : memref<16x1058xf32, #tpu.memory_space<vmem>>, vector<16x17xf32>,
    %cst_1 = arith.constant 0.000000e+00 : f32
    %2 = vector.broadcast %cst_1 : f32 to vector<16x17xf32>
    %c0_2 = arith.constant 0 : index
    %c1041 = arith.constant 1041 : index
    %3 = vector.load %arg15[%c0_2, %c1041] : memref<16x1058xf32, #tpu.memory_space<vmem>>, vector<16x17xf32>
    tpu.vector_store %arg15[%c0_2, %c1041], %2 {strides = array<i32>} : memref<16x1058xf32, #tpu.memory_space<vmem>>, vector<16x17xf32>,
    %cst_3 = arith.constant 0.000000e+00 : f32
    %4 = vector.broadcast %cst_3 : f32 to vector<32x9xf32>
    %c0_4 = arith.constant 0 : index
    %c0_5 = arith.constant 0 : index
    %5 = vector.load %arg16[%c0_4, %c0_5] : memref<32x274xf32, #tpu.memory_space<vmem>>, vector<32x9xf32>
    tpu.vector_store %arg16[%c0_4, %c0_5], %4 {strides = array<i32>} : memref<32x274xf32, #tpu.memory_space<vmem>>, vector<32x9xf32>,
    %cst_6 = arith.constant 0.000000e+00 : f32
    %6 = vector.broadcast %cst_6 : f32 to vector<32x9xf32>
    %c0_7 = arith.constant 0 : index
    %c265 = arith.constant 265 : index
    %7 = vector.load %arg16[%c0_7, %c265] : memref<32x274xf32, #tpu.memory_space<vmem>>, vector<32x9xf32>
    tpu.vector_store %arg16[%c0_7, %c265], %6 {strides = array<i32>} : memref<32x274xf32, #tpu.memory_space<vmem>>, vector<32x9xf32>,
    %c0_8 = arith.constant 0 : index
    %c0_9 = arith.constant 0 : index
    %8 = vector.load %arg12[%c0_8, %c0_9] : memref<9x1024xf32, #tpu.memory_space<vmem>>, vector<9x1024xf32>
    %c0_10 = arith.constant 0 : index
    %c0_11 = arith.constant 0 : index
    %9 = vector.load %arg13[%c0_10, %c0_11] : memref<9x256xf32, #tpu.memory_space<vmem>>, vector<9x256xf32>
    %c0_12 = arith.constant 0 : index
    %c0_13 = arith.constant 0 : index
    %c0_14 = arith.constant 0 : index
    %10 = vector.load %arg1[%c0_12, %c0_13, %c0_14] : memref<4x8x256xf32, #tpu.memory_space<vmem>>, vector<1x8x256xf32>
    %11 = vector.shape_cast %10 : vector<1x8x256xf32> to vector<8x256xf32>
    %c0_15 = arith.constant 0 : index
    %c17 = arith.constant 17 : index
    %12 = vector.load %arg15[%c0_15, %c17] : memref<16x1058xf32, #tpu.memory_space<vmem>>, vector<8x256xf32>
    tpu.vector_store %arg15[%c0_15, %c17], %11 {strides = array<i32>} : memref<16x1058xf32, #tpu.memory_space<vmem>>, vector<8x256xf32>,
    %c1 = arith.constant 1 : index
    %c0_16 = arith.constant 0 : index
    %c0_17 = arith.constant 0 : index
    %13 = vector.load %arg1[%c1, %c0_16, %c0_17] : memref<4x8x256xf32, #tpu.memory_space<vmem>>, vector<1x8x256xf32>
    %14 = vector.shape_cast %13 : vector<1x8x256xf32> to vector<8x256xf32>
    %c0_18 = arith.constant 0 : index
    %c273 = arith.constant 273 : index
    %15 = vector.load %arg15[%c0_18, %c273] : memref<16x1058xf32, #tpu.memory_space<vmem>>, vector<8x256xf32>
    tpu.vector_store %arg15[%c0_18, %c273], %14 {strides = array<i32>} : memref<16x1058xf32, #tpu.memory_space<vmem>>, vector<8x256xf32>,
    %c2 = arith.constant 2 : index
    %c0_19 = arith.constant 0 : index
    %c0_20 = arith.constant 0 : index
    %16 = vector.load %arg1[%c2, %c0_19, %c0_20] : memref<4x8x256xf32, #tpu.memory_space<vmem>>, vector<1x8x256xf32>
    %17 = vector.shape_cast %16 : vector<1x8x256xf32> to vector<8x256xf32>
    %c0_21 = arith.constant 0 : index
    %c529 = arith.constant 529 : index
    %18 = vector.load %arg15[%c0_21, %c529] : memref<16x1058xf32, #tpu.memory_space<vmem>>, vector<8x256xf32>
    tpu.vector_store %arg15[%c0_21, %c529], %17 {strides = array<i32>} : memref<16x1058xf32, #tpu.memory_space<vmem>>, vector<8x256xf32>,
    %c3 = arith.constant 3 : index
    %c0_22 = arith.constant 0 : index
    %c0_23 = arith.constant 0 : index
    %19 = vector.load %arg1[%c3, %c0_22, %c0_23] : memref<4x8x256xf32, #tpu.memory_space<vmem>>, vector<1x8x256xf32>
    %20 = vector.shape_cast %19 : vector<1x8x256xf32> to vector<8x256xf32>
    %c0_24 = arith.constant 0 : index
    %c785 = arith.constant 785 : index
    %21 = vector.load %arg15[%c0_24, %c785] : memref<16x1058xf32, #tpu.memory_space<vmem>>, vector<8x256xf32>
    tpu.vector_store %arg15[%c0_24, %c785], %20 {strides = array<i32>} : memref<16x1058xf32, #tpu.memory_space<vmem>>, vector<8x256xf32>,
    %c0_25 = arith.constant 0 : index
    %c0_26 = arith.constant 0 : index
    %22 = vector.load %arg15[%c0_25, %c0_26] : memref<16x1058xf32, #tpu.memory_space<vmem>>, vector<8x1024xf32>
    %23 = vector.extract_strided_slice %8 {offsets = [0, 0], sizes = [1, 1024], strides = [1, 1]} : vector<9x1024xf32> to vector<1x1024xf32>
    %24 = vector.broadcast %23 : vector<1x1024xf32> to vector<8x1024xf32>
    %25 = arith.mulf %22, %24 : vector<8x1024xf32>
    %c0_27 = arith.constant 0 : index
    %c1_28 = arith.constant 1 : index
    %26 = vector.load %arg15[%c0_27, %c1_28] : memref<16x1058xf32, #tpu.memory_space<vmem>>, vector<8x1024xf32>
    %27 = vector.extract_strided_slice %8 {offsets = [1, 0], sizes = [1, 1024], strides = [1, 1]} : vector<9x1024xf32> to vector<1x1024xf32>
    %28 = vector.broadcast %27 : vector<1x1024xf32> to vector<8x1024xf32>
    %29 = arith.mulf %26, %28 : vector<8x1024xf32>
    %c0_29 = arith.constant 0 : index
    %c2_30 = arith.constant 2 : index
    %30 = vector.load %arg15[%c0_29, %c2_30] : memref<16x1058xf32, #tpu.memory_space<vmem>>, vector<8x1024xf32>
    %31 = vector.extract_strided_slice %8 {offsets = [2, 0], sizes = [1, 1024], strides = [1, 1]} : vector<9x1024xf32> to vector<1x1024xf32>
    %32 = vector.broadcast %31 : vector<1x1024xf32> to vector<8x1024xf32>
    %33 = arith.mulf %30, %32 : vector<8x1024xf32>
    %c0_31 = arith.constant 0 : index
    %c16 = arith.constant 16 : index
    %34 = vector.load %arg15[%c0_31, %c16] : memref<16x1058xf32, #tpu.memory_space<vmem>>, vector<8x1024xf32>
    %35 = vector.extract_strided_slice %8 {offsets = [3, 0], sizes = [1, 1024], strides = [1, 1]} : vector<9x1024xf32> to vector<1x1024xf32>
    %36 = vector.broadcast %35 : vector<1x1024xf32> to vector<8x1024xf32>
    %37 = arith.mulf %34, %36 : vector<8x1024xf32>
    %c0_32 = arith.constant 0 : index
    %c17_33 = arith.constant 17 : index
    %38 = vector.load %arg15[%c0_32, %c17_33] : memref<16x1058xf32, #tpu.memory_space<vmem>>, vector<8x1024xf32>
    %c0_34 = arith.constant 0 : index
    %c18 = arith.constant 18 : index
    %39 = vector.load %arg15[%c0_34, %c18] : memref<16x1058xf32, #tpu.memory_space<vmem>>, vector<8x1024xf32>
    %40 = vector.extract_strided_slice %8 {offsets = [5, 0], sizes = [1, 1024], strides = [1, 1]} : vector<9x1024xf32> to vector<1x1024xf32>
    %41 = vector.broadcast %40 : vector<1x1024xf32> to vector<8x1024xf32>
    %42 = arith.mulf %39, %41 : vector<8x1024xf32>
    %c0_35 = arith.constant 0 : index
    %c32 = arith.constant 32 : index
    %43 = vector.load %arg15[%c0_35, %c32] : memref<16x1058xf32, #tpu.memory_space<vmem>>, vector<8x1024xf32>
    %44 = vector.extract_strided_slice %8 {offsets = [6, 0], sizes = [1, 1024], strides = [1, 1]} : vector<9x1024xf32> to vector<1x1024xf32>
    %45 = vector.broadcast %44 : vector<1x1024xf32> to vector<8x1024xf32>
    %46 = arith.mulf %43, %45 : vector<8x1024xf32>
    %c0_36 = arith.constant 0 : index
    %c33 = arith.constant 33 : index
    %47 = vector.load %arg15[%c0_36, %c33] : memref<16x1058xf32, #tpu.memory_space<vmem>>, vector<8x1024xf32>
    %48 = vector.extract_strided_slice %8 {offsets = [7, 0], sizes = [1, 1024], strides = [1, 1]} : vector<9x1024xf32> to vector<1x1024xf32>
    %49 = vector.broadcast %48 : vector<1x1024xf32> to vector<8x1024xf32>
    %50 = arith.mulf %47, %49 : vector<8x1024xf32>
    %c0_37 = arith.constant 0 : index
    %c34 = arith.constant 34 : index
    %51 = vector.load %arg15[%c0_37, %c34] : memref<16x1058xf32, #tpu.memory_space<vmem>>, vector<8x1024xf32>
    %52 = vector.extract_strided_slice %8 {offsets = [8, 0], sizes = [1, 1024], strides = [1, 1]} : vector<9x1024xf32> to vector<1x1024xf32>
    %53 = vector.broadcast %52 : vector<1x1024xf32> to vector<8x1024xf32>
    %54 = arith.mulf %51, %53 : vector<8x1024xf32>
    %55 = tpu.concatenate %25, %29, %33, %37, %38, %42, %46, %50, %54 in 0 : vector<8x1024xf32>, vector<8x1024xf32>, vector<8x1024xf32>, vector<8x1024xf32>, vector<8x1024xf32>, vector<8x1024xf32>, vector<8x1024xf32>, vector<8x1024xf32>, vector<8x1024xf32> -> vector<72x1024xf32>
    %c0_38 = arith.constant 0 : index
    %c0_39 = arith.constant 0 : index
    %56 = vector.load %arg2[%c0_38, %c0_39] : memref<16x72xf32, #tpu.memory_space<vmem>>, vector<16x72xf32>
    %cst_40 = arith.constant dense<0.000000e+00> : vector<16x1024xf32>
    %57 = tpu.matmul %56, %55, %cst_40 {dimension_numbers = #tpu.dot_dimension_numbers<[1], [0], [0], [1], [0, 0, 1, 1], [], []>} : vector<16x72xf32>, vector<72x1024xf32>, vector<16x1024xf32> -> vector<16x1024xf32>
    %c0_41 = arith.constant 0 : index
    %c0_42 = arith.constant 0 : index
    %58 = vector.load %arg3[%c0_41, %c0_42] : memref<16x1xf32, #tpu.memory_space<vmem>>, vector<16x1xf32>
    %59 = vector.broadcast %58 : vector<16x1xf32> to vector<16x1024xf32>
    %60 = arith.addf %57, %59 : vector<16x1024xf32>
    %cst_43 = arith.constant 0.000000e+00 : f32
    %61 = vector.broadcast %cst_43 : f32 to vector<16x1024xf32>
    %62 = arith.maximumf %60, %61 : vector<16x1024xf32>
    %c0_44 = arith.constant 0 : index
    %c17_45 = arith.constant 17 : index
    %63 = vector.load %arg15[%c0_44, %c17_45] : memref<16x1058xf32, #tpu.memory_space<vmem>>, vector<16x1024xf32>
    tpu.vector_store %arg15[%c0_44, %c17_45], %62 {strides = array<i32>} : memref<16x1058xf32, #tpu.memory_space<vmem>>, vector<16x1024xf32>,
    %c0_46 = arith.constant 0 : index
    %c0_47 = arith.constant 0 : index
    %64 = vector.load %arg15[%c0_46, %c0_47] : memref<16x1058xf32, #tpu.memory_space<vmem>>, vector<16x1024xf32>
    %65 = vector.extract_strided_slice %8 {offsets = [0, 0], sizes = [1, 1024], strides = [1, 1]} : vector<9x1024xf32> to vector<1x1024xf32>
    %66 = vector.broadcast %65 : vector<1x1024xf32> to vector<16x1024xf32>
    %67 = arith.mulf %64, %66 : vector<16x1024xf32>
    %c0_48 = arith.constant 0 : index
    %c1_49 = arith.constant 1 : index
    %68 = vector.load %arg15[%c0_48, %c1_49] : memref<16x1058xf32, #tpu.memory_space<vmem>>, vector<16x1024xf32>
    %69 = vector.extract_strided_slice %8 {offsets = [1, 0], sizes = [1, 1024], strides = [1, 1]} : vector<9x1024xf32> to vector<1x1024xf32>
    %70 = vector.broadcast %69 : vector<1x1024xf32> to vector<16x1024xf32>
    %71 = arith.mulf %68, %70 : vector<16x1024xf32>
    %c0_50 = arith.constant 0 : index
    %c2_51 = arith.constant 2 : index
    %72 = vector.load %arg15[%c0_50, %c2_51] : memref<16x1058xf32, #tpu.memory_space<vmem>>, vector<16x1024xf32>
    %73 = vector.extract_strided_slice %8 {offsets = [2, 0], sizes = [1, 1024], strides = [1, 1]} : vector<9x1024xf32> to vector<1x1024xf32>
    %74 = vector.broadcast %73 : vector<1x1024xf32> to vector<16x1024xf32>
    %75 = arith.mulf %72, %74 : vector<16x1024xf32>
    %c0_52 = arith.constant 0 : index
    %c16_53 = arith.constant 16 : index
    %76 = vector.load %arg15[%c0_52, %c16_53] : memref<16x1058xf32, #tpu.memory_space<vmem>>, vector<16x1024xf32>
    %77 = vector.extract_strided_slice %8 {offsets = [3, 0], sizes = [1, 1024], strides = [1, 1]} : vector<9x1024xf32> to vector<1x1024xf32>
    %78 = vector.broadcast %77 : vector<1x1024xf32> to vector<16x1024xf32>
    %79 = arith.mulf %76, %78 : vector<16x1024xf32>
    %c0_54 = arith.constant 0 : index
    %c17_55 = arith.constant 17 : index
    %80 = vector.load %arg15[%c0_54, %c17_55] : memref<16x1058xf32, #tpu.memory_space<vmem>>, vector<16x1024xf32>
    %c0_56 = arith.constant 0 : index
    %c18_57 = arith.constant 18 : index
    %81 = vector.load %arg15[%c0_56, %c18_57] : memref<16x1058xf32, #tpu.memory_space<vmem>>, vector<16x1024xf32>
    %82 = vector.extract_strided_slice %8 {offsets = [5, 0], sizes = [1, 1024], strides = [1, 1]} : vector<9x1024xf32> to vector<1x1024xf32>
    %83 = vector.broadcast %82 : vector<1x1024xf32> to vector<16x1024xf32>
    %84 = arith.mulf %81, %83 : vector<16x1024xf32>
    %c0_58 = arith.constant 0 : index
    %c32_59 = arith.constant 32 : index
    %85 = vector.load %arg15[%c0_58, %c32_59] : memref<16x1058xf32, #tpu.memory_space<vmem>>, vector<16x1024xf32>
    %86 = vector.extract_strided_slice %8 {offsets = [6, 0], sizes = [1, 1024], strides = [1, 1]} : vector<9x1024xf32> to vector<1x1024xf32>
    %87 = vector.broadcast %86 : vector<1x1024xf32> to vector<16x1024xf32>
    %88 = arith.mulf %85, %87 : vector<16x1024xf32>
    %c0_60 = arith.constant 0 : index
    %c33_61 = arith.constant 33 : index
    %89 = vector.load %arg15[%c0_60, %c33_61] : memref<16x1058xf32, #tpu.memory_space<vmem>>, vector<16x1024xf32>
    %90 = vector.extract_strided_slice %8 {offsets = [7, 0], sizes = [1, 1024], strides = [1, 1]} : vector<9x1024xf32> to vector<1x1024xf32>
    %91 = vector.broadcast %90 : vector<1x1024xf32> to vector<16x1024xf32>
    %92 = arith.mulf %89, %91 : vector<16x1024xf32>
    %c0_62 = arith.constant 0 : index
    %c34_63 = arith.constant 34 : index
    %93 = vector.load %arg15[%c0_62, %c34_63] : memref<16x1058xf32, #tpu.memory_space<vmem>>, vector<16x1024xf32>
    %94 = vector.extract_strided_slice %8 {offsets = [8, 0], sizes = [1, 1024], strides = [1, 1]} : vector<9x1024xf32> to vector<1x1024xf32>
    %95 = vector.broadcast %94 : vector<1x1024xf32> to vector<16x1024xf32>
    %96 = arith.mulf %93, %95 : vector<16x1024xf32>
    %97 = tpu.concatenate %67, %71, %75, %79, %80, %84, %88, %92, %96 in 0 : vector<16x1024xf32>, vector<16x1024xf32>, vector<16x1024xf32>, vector<16x1024xf32>, vector<16x1024xf32>, vector<16x1024xf32>, vector<16x1024xf32>, vector<16x1024xf32>, vector<16x1024xf32> -> vector<144x1024xf32>
    %c0_64 = arith.constant 0 : index
    %c0_65 = arith.constant 0 : index
    %98 = vector.load %arg4[%c0_64, %c0_65] : memref<16x144xf32, #tpu.memory_space<vmem>>, vector<16x144xf32>
    %cst_66 = arith.constant dense<0.000000e+00> : vector<16x1024xf32>
    %99 = tpu.matmul %98, %97, %cst_66 {dimension_numbers = #tpu.dot_dimension_numbers<[1], [0], [0], [1], [0, 0, 1, 1], [], []>} : vector<16x144xf32>, vector<144x1024xf32>, vector<16x1024xf32> -> vector<16x1024xf32>
    %c0_67 = arith.constant 0 : index
    %c0_68 = arith.constant 0 : index
    %100 = vector.load %arg5[%c0_67, %c0_68] : memref<16x1xf32, #tpu.memory_space<vmem>>, vector<16x1xf32>
    %101 = vector.broadcast %100 : vector<16x1xf32> to vector<16x1024xf32>
    %102 = arith.addf %99, %101 : vector<16x1024xf32>
    %cst_69 = arith.constant 0.000000e+00 : f32
    %103 = vector.broadcast %cst_69 : f32 to vector<16x1024xf32>
    %104 = arith.maximumf %102, %103 : vector<16x1024xf32>
    %c0_70 = arith.constant 0 : index
    %c17_71 = arith.constant 17 : index
    %105 = vector.load %arg15[%c0_70, %c17_71] : memref<16x1058xf32, #tpu.memory_space<vmem>>, vector<16x1024xf32>
    tpu.vector_store %arg15[%c0_70, %c17_71], %104 {strides = array<i32>} : memref<16x1058xf32, #tpu.memory_space<vmem>>, vector<16x1024xf32>,
    %c0_72 = arith.constant 0 : index
    %c17_73 = arith.constant 17 : index
    %106 = vector.load %arg15[%c0_72, %c17_73] : memref<16x1058xf32, #tpu.memory_space<vmem>>, vector<16x1024xf32>
    %c0_74 = arith.constant 0 : index
    %c18_75 = arith.constant 18 : index
    %107 = vector.load %arg15[%c0_74, %c18_75] : memref<16x1058xf32, #tpu.memory_space<vmem>>, vector<16x1024xf32>
    %c0_76 = arith.constant 0 : index
    %c33_77 = arith.constant 33 : index
    %108 = vector.load %arg15[%c0_76, %c33_77] : memref<16x1058xf32, #tpu.memory_space<vmem>>, vector<16x1024xf32>
    %c0_78 = arith.constant 0 : index
    %c34_79 = arith.constant 34 : index
    %109 = vector.load %arg15[%c0_78, %c34_79] : memref<16x1058xf32, #tpu.memory_space<vmem>>, vector<16x1024xf32>
    %110 = arith.maximumf %106, %107 : vector<16x1024xf32>
    %111 = arith.maximumf %108, %109 : vector<16x1024xf32>
    %112 = arith.maximumf %110, %111 : vector<16x1024xf32>
    %c0_80 = arith.constant 0 : index
    %c0_81 = arith.constant 0 : index
    %113 = vector.load %arg10[%c0_80, %c0_81] : memref<1024x256xf32, #tpu.memory_space<vmem>>, vector<1024x256xf32>
    %cst_82 = arith.constant dense<0.000000e+00> : vector<16x256xf32>
    %114 = tpu.matmul %112, %113, %cst_82 {dimension_numbers = #tpu.dot_dimension_numbers<[1], [0], [0], [1], [0, 0, 1, 1], [], []>} : vector<16x1024xf32>, vector<1024x256xf32>, vector<16x256xf32> -> vector<16x256xf32>
    %c0_83 = arith.constant 0 : index
    %c9 = arith.constant 9 : index
    %115 = vector.load %arg16[%c0_83, %c9] : memref<32x274xf32, #tpu.memory_space<vmem>>, vector<16x256xf32>
    tpu.vector_store %arg16[%c0_83, %c9], %114 {strides = array<i32>} : memref<32x274xf32, #tpu.memory_space<vmem>>, vector<16x256xf32>,
    %c0_84 = arith.constant 0 : index
    %c0_85 = arith.constant 0 : index
    %116 = vector.load %arg16[%c0_84, %c0_85] : memref<32x274xf32, #tpu.memory_space<vmem>>, vector<16x256xf32>
    %117 = vector.extract_strided_slice %9 {offsets = [0, 0], sizes = [1, 256], strides = [1, 1]} : vector<9x256xf32> to vector<1x256xf32>
    %118 = vector.broadcast %117 : vector<1x256xf32> to vector<16x256xf32>
    %119 = arith.mulf %116, %118 : vector<16x256xf32>
    %c0_86 = arith.constant 0 : index
    %c1_87 = arith.constant 1 : index
    %120 = vector.load %arg16[%c0_86, %c1_87] : memref<32x274xf32, #tpu.memory_space<vmem>>, vector<16x256xf32>
    %121 = vector.extract_strided_slice %9 {offsets = [1, 0], sizes = [1, 256], strides = [1, 1]} : vector<9x256xf32> to vector<1x256xf32>
    %122 = vector.broadcast %121 : vector<1x256xf32> to vector<16x256xf32>
    %123 = arith.mulf %120, %122 : vector<16x256xf32>
    %c0_88 = arith.constant 0 : index
    %c2_89 = arith.constant 2 : index
    %124 = vector.load %arg16[%c0_88, %c2_89] : memref<32x274xf32, #tpu.memory_space<vmem>>, vector<16x256xf32>
    %125 = vector.extract_strided_slice %9 {offsets = [2, 0], sizes = [1, 256], strides = [1, 1]} : vector<9x256xf32> to vector<1x256xf32>
    %126 = vector.broadcast %125 : vector<1x256xf32> to vector<16x256xf32>
    %127 = arith.mulf %124, %126 : vector<16x256xf32>
    %c0_90 = arith.constant 0 : index
    %c8 = arith.constant 8 : index
    %128 = vector.load %arg16[%c0_90, %c8] : memref<32x274xf32, #tpu.memory_space<vmem>>, vector<16x256xf32>
    %129 = vector.extract_strided_slice %9 {offsets = [3, 0], sizes = [1, 256], strides = [1, 1]} : vector<9x256xf32> to vector<1x256xf32>
    %130 = vector.broadcast %129 : vector<1x256xf32> to vector<16x256xf32>
    %131 = arith.mulf %128, %130 : vector<16x256xf32>
    %c0_91 = arith.constant 0 : index
    %c9_92 = arith.constant 9 : index
    %132 = vector.load %arg16[%c0_91, %c9_92] : memref<32x274xf32, #tpu.memory_space<vmem>>, vector<16x256xf32>
    %c0_93 = arith.constant 0 : index
    %c10 = arith.constant 10 : index
    %133 = vector.load %arg16[%c0_93, %c10] : memref<32x274xf32, #tpu.memory_space<vmem>>, vector<16x256xf32>
    %134 = vector.extract_strided_slice %9 {offsets = [5, 0], sizes = [1, 256], strides = [1, 1]} : vector<9x256xf32> to vector<1x256xf32>
    %135 = vector.broadcast %134 : vector<1x256xf32> to vector<16x256xf32>
    %136 = arith.mulf %133, %135 : vector<16x256xf32>
    %c0_94 = arith.constant 0 : index
    %c16_95 = arith.constant 16 : index
    %137 = vector.load %arg16[%c0_94, %c16_95] : memref<32x274xf32, #tpu.memory_space<vmem>>, vector<16x256xf32>
    %138 = vector.extract_strided_slice %9 {offsets = [6, 0], sizes = [1, 256], strides = [1, 1]} : vector<9x256xf32> to vector<1x256xf32>
    %139 = vector.broadcast %138 : vector<1x256xf32> to vector<16x256xf32>
    %140 = arith.mulf %137, %139 : vector<16x256xf32>
    %c0_96 = arith.constant 0 : index
    %c17_97 = arith.constant 17 : index
    %141 = vector.load %arg16[%c0_96, %c17_97] : memref<32x274xf32, #tpu.memory_space<vmem>>, vector<16x256xf32>
    %142 = vector.extract_strided_slice %9 {offsets = [7, 0], sizes = [1, 256], strides = [1, 1]} : vector<9x256xf32> to vector<1x256xf32>
    %143 = vector.broadcast %142 : vector<1x256xf32> to vector<16x256xf32>
    %144 = arith.mulf %141, %143 : vector<16x256xf32>
    %c0_98 = arith.constant 0 : index
    %c18_99 = arith.constant 18 : index
    %145 = vector.load %arg16[%c0_98, %c18_99] : memref<32x274xf32, #tpu.memory_space<vmem>>, vector<16x256xf32>
    %146 = vector.extract_strided_slice %9 {offsets = [8, 0], sizes = [1, 256], strides = [1, 1]} : vector<9x256xf32> to vector<1x256xf32>
    %147 = vector.broadcast %146 : vector<1x256xf32> to vector<16x256xf32>
    %148 = arith.mulf %145, %147 : vector<16x256xf32>
    %149 = tpu.concatenate %119, %123, %127, %131, %132, %136, %140, %144, %148 in 0 : vector<16x256xf32>, vector<16x256xf32>, vector<16x256xf32>, vector<16x256xf32>, vector<16x256xf32>, vector<16x256xf32>, vector<16x256xf32>, vector<16x256xf32>, vector<16x256xf32> -> vector<144x256xf32>
    %c0_100 = arith.constant 0 : index
    %c0_101 = arith.constant 0 : index
    %150 = vector.load %arg6[%c0_100, %c0_101] : memref<32x144xf32, #tpu.memory_space<vmem>>, vector<32x144xf32>
    %cst_102 = arith.constant dense<0.000000e+00> : vector<32x256xf32>
    %151 = tpu.matmul %150, %149, %cst_102 {dimension_numbers = #tpu.dot_dimension_numbers<[1], [0], [0], [1], [0, 0, 1, 1], [], []>} : vector<32x144xf32>, vector<144x256xf32>, vector<32x256xf32> -> vector<32x256xf32>
    %c0_103 = arith.constant 0 : index
    %c0_104 = arith.constant 0 : index
    %152 = vector.load %arg7[%c0_103, %c0_104] : memref<32x1xf32, #tpu.memory_space<vmem>>, vector<32x1xf32>
    %153 = vector.broadcast %152 : vector<32x1xf32> to vector<32x256xf32>
    %154 = arith.addf %151, %153 : vector<32x256xf32>
    %cst_105 = arith.constant 0.000000e+00 : f32
    %155 = vector.broadcast %cst_105 : f32 to vector<32x256xf32>
    %156 = arith.maximumf %154, %155 : vector<32x256xf32>
    %c0_106 = arith.constant 0 : index
    %c9_107 = arith.constant 9 : index
    %157 = vector.load %arg16[%c0_106, %c9_107] : memref<32x274xf32, #tpu.memory_space<vmem>>, vector<32x256xf32>
    tpu.vector_store %arg16[%c0_106, %c9_107], %156 {strides = array<i32>} : memref<32x274xf32, #tpu.memory_space<vmem>>, vector<32x256xf32>,
    %c0_108 = arith.constant 0 : index
    %c0_109 = arith.constant 0 : index
    %158 = vector.load %arg16[%c0_108, %c0_109] : memref<32x274xf32, #tpu.memory_space<vmem>>, vector<32x256xf32>
    %159 = vector.extract_strided_slice %9 {offsets = [0, 0], sizes = [1, 256], strides = [1, 1]} : vector<9x256xf32> to vector<1x256xf32>
    %160 = vector.broadcast %159 : vector<1x256xf32> to vector<32x256xf32>
    %161 = arith.mulf %158, %160 : vector<32x256xf32>
    %c0_110 = arith.constant 0 : index
    %c1_111 = arith.constant 1 : index
    %162 = vector.load %arg16[%c0_110, %c1_111] : memref<32x274xf32, #tpu.memory_space<vmem>>, vector<32x256xf32>
    %163 = vector.extract_strided_slice %9 {offsets = [1, 0], sizes = [1, 256], strides = [1, 1]} : vector<9x256xf32> to vector<1x256xf32>
    %164 = vector.broadcast %163 : vector<1x256xf32> to vector<32x256xf32>
    %165 = arith.mulf %162, %164 : vector<32x256xf32>
    %c0_112 = arith.constant 0 : index
    %c2_113 = arith.constant 2 : index
    %166 = vector.load %arg16[%c0_112, %c2_113] : memref<32x274xf32, #tpu.memory_space<vmem>>, vector<32x256xf32>
    %167 = vector.extract_strided_slice %9 {offsets = [2, 0], sizes = [1, 256], strides = [1, 1]} : vector<9x256xf32> to vector<1x256xf32>
    %168 = vector.broadcast %167 : vector<1x256xf32> to vector<32x256xf32>
    %169 = arith.mulf %166, %168 : vector<32x256xf32>
    %c0_114 = arith.constant 0 : index
    %c8_115 = arith.constant 8 : index
    %170 = vector.load %arg16[%c0_114, %c8_115] : memref<32x274xf32, #tpu.memory_space<vmem>>, vector<32x256xf32>
    %171 = vector.extract_strided_slice %9 {offsets = [3, 0], sizes = [1, 256], strides = [1, 1]} : vector<9x256xf32> to vector<1x256xf32>
    %172 = vector.broadcast %171 : vector<1x256xf32> to vector<32x256xf32>
    %173 = arith.mulf %170, %172 : vector<32x256xf32>
    %c0_116 = arith.constant 0 : index
    %c9_117 = arith.constant 9 : index
    %174 = vector.load %arg16[%c0_116, %c9_117] : memref<32x274xf32, #tpu.memory_space<vmem>>, vector<32x256xf32>
    %c0_118 = arith.constant 0 : index
    %c10_119 = arith.constant 10 : index
    %175 = vector.load %arg16[%c0_118, %c10_119] : memref<32x274xf32, #tpu.memory_space<vmem>>, vector<32x256xf32>
    %176 = vector.extract_strided_slice %9 {offsets = [5, 0], sizes = [1, 256], strides = [1, 1]} : vector<9x256xf32> to vector<1x256xf32>
    %177 = vector.broadcast %176 : vector<1x256xf32> to vector<32x256xf32>
    %178 = arith.mulf %175, %177 : vector<32x256xf32>
    %c0_120 = arith.constant 0 : index
    %c16_121 = arith.constant 16 : index
    %179 = vector.load %arg16[%c0_120, %c16_121] : memref<32x274xf32, #tpu.memory_space<vmem>>, vector<32x256xf32>
    %180 = vector.extract_strided_slice %9 {offsets = [6, 0], sizes = [1, 256], strides = [1, 1]} : vector<9x256xf32> to vector<1x256xf32>
    %181 = vector.broadcast %180 : vector<1x256xf32> to vector<32x256xf32>
    %182 = arith.mulf %179, %181 : vector<32x256xf32>
    %c0_122 = arith.constant 0 : index
    %c17_123 = arith.constant 17 : index
    %183 = vector.load %arg16[%c0_122, %c17_123] : memref<32x274xf32, #tpu.memory_space<vmem>>, vector<32x256xf32>
    %184 = vector.extract_strided_slice %9 {offsets = [7, 0], sizes = [1, 256], strides = [1, 1]} : vector<9x256xf32> to vector<1x256xf32>
    %185 = vector.broadcast %184 : vector<1x256xf32> to vector<32x256xf32>
    %186 = arith.mulf %183, %185 : vector<32x256xf32>
    %c0_124 = arith.constant 0 : index
    %c18_125 = arith.constant 18 : index
    %187 = vector.load %arg16[%c0_124, %c18_125] : memref<32x274xf32, #tpu.memory_space<vmem>>, vector<32x256xf32>
    %188 = vector.extract_strided_slice %9 {offsets = [8, 0], sizes = [1, 256], strides = [1, 1]} : vector<9x256xf32> to vector<1x256xf32>
    %189 = vector.broadcast %188 : vector<1x256xf32> to vector<32x256xf32>
    %190 = arith.mulf %187, %189 : vector<32x256xf32>
    %191 = tpu.concatenate %161, %165, %169, %173, %174, %178, %182, %186, %190 in 0 : vector<32x256xf32>, vector<32x256xf32>, vector<32x256xf32>, vector<32x256xf32>, vector<32x256xf32>, vector<32x256xf32>, vector<32x256xf32>, vector<32x256xf32>, vector<32x256xf32> -> vector<288x256xf32>
    %c0_126 = arith.constant 0 : index
    %c0_127 = arith.constant 0 : index
    %192 = vector.load %arg8[%c0_126, %c0_127] : memref<32x288xf32, #tpu.memory_space<vmem>>, vector<32x288xf32>
    %cst_128 = arith.constant dense<0.000000e+00> : vector<32x256xf32>
    %193 = tpu.matmul %192, %191, %cst_128 {dimension_numbers = #tpu.dot_dimension_numbers<[1], [0], [0], [1], [0, 0, 1, 1], [], []>} : vector<32x288xf32>, vector<288x256xf32>, vector<32x256xf32> -> vector<32x256xf32>
    %c0_129 = arith.constant 0 : index
    %c0_130 = arith.constant 0 : index
    %194 = vector.load %arg9[%c0_129, %c0_130] : memref<32x1xf32, #tpu.memory_space<vmem>>, vector<32x1xf32>
    %195 = vector.broadcast %194 : vector<32x1xf32> to vector<32x256xf32>
    %196 = arith.addf %193, %195 : vector<32x256xf32>
    %cst_131 = arith.constant 0.000000e+00 : f32
    %197 = vector.broadcast %cst_131 : f32 to vector<32x256xf32>
    %198 = arith.maximumf %196, %197 : vector<32x256xf32>
    %c0_132 = arith.constant 0 : index
    %c0_133 = arith.constant 0 : index
    %199 = vector.load %arg11[%c0_132, %c0_133] : memref<256x1024xf32, #tpu.memory_space<vmem>>, vector<256x1024xf32>
    %cst_134 = arith.constant dense<0.000000e+00> : vector<32x1024xf32>
    %200 = tpu.matmul %198, %199, %cst_134 {dimension_numbers = #tpu.dot_dimension_numbers<[1], [0], [0], [1], [0, 0, 1, 1], [], []>} : vector<32x256xf32>, vector<256x1024xf32>, vector<32x1024xf32> -> vector<32x1024xf32>
    %201 = vector.extract_strided_slice %200 {offsets = [0, 0], sizes = [32, 256], strides = [1, 1]} : vector<32x1024xf32> to vector<32x256xf32>
    %c0_135 = arith.constant 0 : index
    %c0_136 = arith.constant 0 : index
    %c0_137 = arith.constant 0 : index
    %202 = vector.load %arg14[%c0_135, %c0_136, %c0_137] : memref<4x48x256xf32, #tpu.memory_space<vmem>>, vector<1x32x256xf32>
    %203 = vector.shape_cast %202 : vector<1x32x256xf32> to vector<32x256xf32>
    %204 = vector.shape_cast %201 : vector<32x256xf32> to vector<1x32x256xf32>
    tpu.vector_store %arg14[%c0_135, %c0_136, %c0_137], %204 {strides = array<i32>} : memref<4x48x256xf32, #tpu.memory_space<vmem>>, vector<1x32x256xf32>,
    %205 = vector.extract_strided_slice %104 {offsets = [0, 0], sizes = [16, 256], strides = [1, 1]} : vector<16x1024xf32> to vector<16x256xf32>
    %c0_138 = arith.constant 0 : index
    %c32_139 = arith.constant 32 : index
    %c0_140 = arith.constant 0 : index
    %206 = vector.load %arg14[%c0_138, %c32_139, %c0_140] : memref<4x48x256xf32, #tpu.memory_space<vmem>>, vector<1x16x256xf32>
    %207 = vector.shape_cast %206 : vector<1x16x256xf32> to vector<16x256xf32>
    %208 = vector.shape_cast %205 : vector<16x256xf32> to vector<1x16x256xf32>
    tpu.vector_store %arg14[%c0_138, %c32_139, %c0_140], %208 {strides = array<i32>} : memref<4x48x256xf32, #tpu.memory_space<vmem>>, vector<1x16x256xf32>,
    %209 = vector.extract_strided_slice %200 {offsets = [0, 256], sizes = [32, 256], strides = [1, 1]} : vector<32x1024xf32> to vector<32x256xf32>
    %c1_141 = arith.constant 1 : index
    %c0_142 = arith.constant 0 : index
    %c0_143 = arith.constant 0 : index
    %210 = vector.load %arg14[%c1_141, %c0_142, %c0_143] : memref<4x48x256xf32, #tpu.memory_space<vmem>>, vector<1x32x256xf32>
    %211 = vector.shape_cast %210 : vector<1x32x256xf32> to vector<32x256xf32>
    %212 = vector.shape_cast %209 : vector<32x256xf32> to vector<1x32x256xf32>
    tpu.vector_store %arg14[%c1_141, %c0_142, %c0_143], %212 {strides = array<i32>} : memref<4x48x256xf32, #tpu.memory_space<vmem>>, vector<1x32x256xf32>,
    %213 = vector.extract_strided_slice %104 {offsets = [0, 256], sizes = [16, 256], strides = [1, 1]} : vector<16x1024xf32> to vector<16x256xf32>
    %c1_144 = arith.constant 1 : index
    %c32_145 = arith.constant 32 : index
    %c0_146 = arith.constant 0 : index
    %214 = vector.load %arg14[%c1_144, %c32_145, %c0_146] : memref<4x48x256xf32, #tpu.memory_space<vmem>>, vector<1x16x256xf32>
    %215 = vector.shape_cast %214 : vector<1x16x256xf32> to vector<16x256xf32>
    %216 = vector.shape_cast %213 : vector<16x256xf32> to vector<1x16x256xf32>
    tpu.vector_store %arg14[%c1_144, %c32_145, %c0_146], %216 {strides = array<i32>} : memref<4x48x256xf32, #tpu.memory_space<vmem>>, vector<1x16x256xf32>,
    %217 = vector.extract_strided_slice %200 {offsets = [0, 512], sizes = [32, 256], strides = [1, 1]} : vector<32x1024xf32> to vector<32x256xf32>
    %c2_147 = arith.constant 2 : index
    %c0_148 = arith.constant 0 : index
    %c0_149 = arith.constant 0 : index
    %218 = vector.load %arg14[%c2_147, %c0_148, %c0_149] : memref<4x48x256xf32, #tpu.memory_space<vmem>>, vector<1x32x256xf32>
    %219 = vector.shape_cast %218 : vector<1x32x256xf32> to vector<32x256xf32>
    %220 = vector.shape_cast %217 : vector<32x256xf32> to vector<1x32x256xf32>
    tpu.vector_store %arg14[%c2_147, %c0_148, %c0_149], %220 {strides = array<i32>} : memref<4x48x256xf32, #tpu.memory_space<vmem>>, vector<1x32x256xf32>,
    %221 = vector.extract_strided_slice %104 {offsets = [0, 512], sizes = [16, 256], strides = [1, 1]} : vector<16x1024xf32> to vector<16x256xf32>
    %c2_150 = arith.constant 2 : index
    %c32_151 = arith.constant 32 : index
    %c0_152 = arith.constant 0 : index
    %222 = vector.load %arg14[%c2_150, %c32_151, %c0_152] : memref<4x48x256xf32, #tpu.memory_space<vmem>>, vector<1x16x256xf32>
    %223 = vector.shape_cast %222 : vector<1x16x256xf32> to vector<16x256xf32>
    %224 = vector.shape_cast %221 : vector<16x256xf32> to vector<1x16x256xf32>
    tpu.vector_store %arg14[%c2_150, %c32_151, %c0_152], %224 {strides = array<i32>} : memref<4x48x256xf32, #tpu.memory_space<vmem>>, vector<1x16x256xf32>,
    %225 = vector.extract_strided_slice %200 {offsets = [0, 768], sizes = [32, 256], strides = [1, 1]} : vector<32x1024xf32> to vector<32x256xf32>
    %c3_153 = arith.constant 3 : index
    %c0_154 = arith.constant 0 : index
    %c0_155 = arith.constant 0 : index
    %226 = vector.load %arg14[%c3_153, %c0_154, %c0_155] : memref<4x48x256xf32, #tpu.memory_space<vmem>>, vector<1x32x256xf32>
    %227 = vector.shape_cast %226 : vector<1x32x256xf32> to vector<32x256xf32>
    %228 = vector.shape_cast %225 : vector<32x256xf32> to vector<1x32x256xf32>
    tpu.vector_store %arg14[%c3_153, %c0_154, %c0_155], %228 {strides = array<i32>} : memref<4x48x256xf32, #tpu.memory_space<vmem>>, vector<1x32x256xf32>,
    %229 = vector.extract_strided_slice %104 {offsets = [0, 768], sizes = [16, 256], strides = [1, 1]} : vector<16x1024xf32> to vector<16x256xf32>
    %c3_156 = arith.constant 3 : index
    %c32_157 = arith.constant 32 : index
    %c0_158 = arith.constant 0 : index
    %230 = vector.load %arg14[%c3_156, %c32_157, %c0_158] : memref<4x48x256xf32, #tpu.memory_space<vmem>>, vector<1x16x256xf32>
    %231 = vector.shape_cast %230 : vector<1x16x256xf32> to vector<16x256xf32>
    %232 = vector.shape_cast %229 : vector<16x256xf32> to vector<1x16x256xf32>
    tpu.vector_store %arg14[%c3_156, %c32_157, %c0_158], %232 {strides = array<i32>} : memref<4x48x256xf32, #tpu.memory_space<vmem>>, vector<1x16x256xf32>,
    return
  }
  func.func @transform_0(%arg0: i32) -> (i32, i32, i32) {
    %c0_i32 = arith.constant 0 : i32
    %c0_i32_0 = arith.constant 0 : i32
    %c0_i32_1 = arith.constant 0 : i32
    return %arg0, %c0_i32, %c0_i32_0 : i32, i32, i32
  }
  func.func @transform_1(%arg0: i32) -> (i32, i32) {
    %c0_i32 = arith.constant 0 : i32
    %c0_i32_0 = arith.constant 0 : i32
    %c0_i32_1 = arith.constant 0 : i32
    return %c0_i32, %c0_i32_0 : i32, i32
  }
  func.func @transform_2(%arg0: i32) -> (i32, i32) {
    %c0_i32 = arith.constant 0 : i32
    %c0_i32_0 = arith.constant 0 : i32
    %c0_i32_1 = arith.constant 0 : i32
    return %c0_i32, %c0_i32_0 : i32, i32
  }
  func.func @transform_3(%arg0: i32) -> (i32, i32) {
    %c0_i32 = arith.constant 0 : i32
    %c0_i32_0 = arith.constant 0 : i32
    %c0_i32_1 = arith.constant 0 : i32
    return %c0_i32, %c0_i32_0 : i32, i32
  }
  func.func @transform_4(%arg0: i32) -> (i32, i32) {
    %c0_i32 = arith.constant 0 : i32
    %c0_i32_0 = arith.constant 0 : i32
    %c0_i32_1 = arith.constant 0 : i32
    return %c0_i32, %c0_i32_0 : i32, i32
  }
  func.func @transform_5(%arg0: i32) -> (i32, i32) {
    %c0_i32 = arith.constant 0 : i32
    %c0_i32_0 = arith.constant 0 : i32
    %c0_i32_1 = arith.constant 0 : i32
    return %c0_i32, %c0_i32_0 : i32, i32
  }
  func.func @transform_6(%arg0: i32) -> (i32, i32) {
    %c0_i32 = arith.constant 0 : i32
    %c0_i32_0 = arith.constant 0 : i32
    %c0_i32_1 = arith.constant 0 : i32
    return %c0_i32, %c0_i32_0 : i32, i32
  }
  func.func @transform_7(%arg0: i32) -> (i32, i32) {
    %c0_i32 = arith.constant 0 : i32
    %c0_i32_0 = arith.constant 0 : i32
    %c0_i32_1 = arith.constant 0 : i32
    return %c0_i32, %c0_i32_0 : i32, i32
  }
  func.func @transform_8(%arg0: i32) -> (i32, i32) {
    %c0_i32 = arith.constant 0 : i32
    %c0_i32_0 = arith.constant 0 : i32
    %c0_i32_1 = arith.constant 0 : i32
    return %c0_i32, %c0_i32_0 : i32, i32
  }
  func.func @transform_9(%arg0: i32) -> (i32, i32) {
    %c0_i32 = arith.constant 0 : i32
    %c0_i32_0 = arith.constant 0 : i32
    %c0_i32_1 = arith.constant 0 : i32
    return %c0_i32, %c0_i32_0 : i32, i32
  }
  func.func @transform_10(%arg0: i32) -> (i32, i32) {
    %c0_i32 = arith.constant 0 : i32
    %c0_i32_0 = arith.constant 0 : i32
    %c0_i32_1 = arith.constant 0 : i32
    return %c0_i32, %c0_i32_0 : i32, i32
  }
  func.func @transform_11(%arg0: i32) -> (i32, i32) {
    %c0_i32 = arith.constant 0 : i32
    %c0_i32_0 = arith.constant 0 : i32
    %c0_i32_1 = arith.constant 0 : i32
    return %c0_i32, %c0_i32_0 : i32, i32
  }
  func.func @transform_12(%arg0: i32) -> (i32, i32) {
    %c0_i32 = arith.constant 0 : i32
    %c0_i32_0 = arith.constant 0 : i32
    %c0_i32_1 = arith.constant 0 : i32
    return %c0_i32, %c0_i32_0 : i32, i32
  }
  func.func @transform_13(%arg0: i32) -> (i32, i32, i32) {
    %c0_i32 = arith.constant 0 : i32
    %c0_i32_0 = arith.constant 0 : i32
    %c0_i32_1 = arith.constant 0 : i32
    return %arg0, %c0_i32, %c0_i32_0 : i32, i32, i32
  }
}

</mosaic_0001>

<llo_original>
// kernel: mini_unet_forward.1
$region0: #{mini_unet_forward.1}
  #allocation0 [shape = 'u32[]', space=smem, size = 0x4, offset = 0x4, fixed_abs, tag = 'smem constant byte address 0x4 - core index']
  #allocation1 [shape = 'u32[72,128]{1,0:T(1,128)}', space=vmem, size = 0x9000, scoped, tag = 'internal scratch']
  #allocation2 [shape = 'f32[16,1058]{1,0:T(8,128)}', space=vmem, size = 0x12000, scoped, tag = 'scratch operand']
  #allocation3 [shape = 'f32[32,274]{1,0:T(8,128)}', space=vmem, size = 0xc000, scoped, tag = 'scratch operand']
  %s0 = inlined_call_operand.vmem [shape: f32[8,8,256], index: 0, kind: input, shape index: {}]
  %s1 = inlined_call_operand.vmem [shape: f32[16,72], index: 1, kind: input, shape index: {}]
  %s2 = inlined_call_operand.vmem [shape: f32[16,1], index: 2, kind: input, shape index: {}]
  %s3 = inlined_call_operand.vmem [shape: f32[16,144], index: 3, kind: input, shape index: {}]
  %s4 = inlined_call_operand.vmem [shape: f32[16,1], index: 4, kind: input, shape index: {}]
  %s5 = inlined_call_operand.vmem [shape: f32[32,144], index: 5, kind: input, shape index: {}]
  %s6 = inlined_call_operand.vmem [shape: f32[32,1], index: 6, kind: input, shape index: {}]
  %s7 = inlined_call_operand.vmem [shape: f32[32,288], index: 7, kind: input, shape index: {}]
  %s8 = inlined_call_operand.vmem [shape: f32[32,1], index: 8, kind: input, shape index: {}]
  %s9 = inlined_call_operand.vmem [shape: f32[1024,256], index: 9, kind: input, shape index: {}]
  %s10 = inlined_call_operand.vmem [shape: f32[256,1024], index: 10, kind: input, shape index: {}]
  %s11 = inlined_call_operand.vmem [shape: f32[9,1024], index: 11, kind: input, shape index: {}]
  %s12 = inlined_call_operand.vmem [shape: f32[9,256], index: 12, kind: input, shape index: {}]
  %s13 = inlined_call_operand.vmem [shape: f32[8,48,256], index: 13, kind: output, shape index: {}]
  %s14 = sld [smem:[#allocation0]]
  $region85: #{mini_unet_forward.1} parent=0
    _
  %s16 = ssub.s32 1, %s14
  %s17 = scalar_select 0, %s16, %s14
  loop: start=0, step=1, limit=4
  $region2: #{mini_unet_forward.1} parent=0 // loop_pre_header
    _
  $region3: #{mini_unet_forward.1} parent=0 // loop_header
    %s19 = sphi 0, %s23
    %p20 = scmp.ge.s32.totalorder %s19, 4
    %s29 = sphi 0, %s31
    %s32 = sphi 0, %s29
    %s33 = sphi 0, %s32
    %s49 = sphi 0, %s33
    %s53 = sphi 0, %s53
    %s55 = sphi 0, %s53
    %s56 = sphi 0, %s55
    %s70 = sphi 0, %s56
    %s74 = sphi 0, %s74
    %s76 = sphi 0, %s74
    %s77 = sphi 0, %s76
    %s91 = sphi 0, %s77
    %s95 = sphi 0, %s95
    %s97 = sphi 0, %s95
    %s98 = sphi 0, %s97
    %s112 = sphi 0, %s98
    %s116 = sphi 0, %s116
    %s118 = sphi 0, %s116
    %s119 = sphi 0, %s118
    %s133 = sphi 0, %s119
    %s137 = sphi 0, %s137
    %s139 = sphi 0, %s137
    %s140 = sphi 0, %s139
    %s154 = sphi 0, %s140
    %s158 = sphi 0, %s158
    %s160 = sphi 0, %s158
    %s161 = sphi 0, %s160
    %s175 = sphi 0, %s161
    %s179 = sphi 0, %s179
    %s181 = sphi 0, %s179
    %s182 = sphi 0, %s181
    %s196 = sphi 0, %s182
    %s200 = sphi 0, %s200
    %s202 = sphi 0, %s200
    %s203 = sphi 0, %s202
    %s217 = sphi 0, %s203
    %s221 = sphi 0, %s221
    %s223 = sphi 0, %s221
    %s224 = sphi 0, %s223
    %s238 = sphi 0, %s224
    %s242 = sphi 0, %s242
    %s244 = sphi 0, %s242
    %s245 = sphi 0, %s244
    %s259 = sphi 0, %s245
    %s263 = sphi 0, %s263
    %s265 = sphi 0, %s263
    %s266 = sphi 0, %s265
    %s280 = sphi 0, %s266
    %s284 = sphi 0, %s284
    %s286 = sphi 0, %s284
    %s287 = sphi 0, %s286
    %s301 = sphi 0, %s287
    %s307 = sphi 0, %s309
    %s310 = sphi 0, %s307
    %s311 = sphi 0, %s310
    %s327 = sphi 0, %s311
  $region4: #{mini_unet_forward.1} parent=0 // loop_header_branch
    %22 = sbr.rel (%p20) target = $region8
  $region5: #{mini_unet_forward.1} parent=0 // loop_body
    %s24 = ssub.s32 %s19, 1
    %s25 = ssub.s32 %s19, 2
    %s26 = sadd.s32 %s19, 1
    %s27 = ssub.s32 %s19, %s26
    %p28 = scmp.eq.s32.totalorder %s27, 0
    %s30 = sadd.s32 %s29, 1
    %s31 = scalar_select %p28, %s29, %s30
    %p34 = pneg %p28
    %p35 = scmp.eq.s32.totalorder %s19, 1
    %p36 = por %p34, %p35
    %p37 = scmp.ne.s32.totalorder %s29, %s32
    %p38 = scmp.eq.s32.totalorder %s19, 0
    %p39 = por %p37, %p38
    %p40 = scmp.ne.s32.totalorder %s29, %s32
    %p41 = scmp.eq.s32.totalorder %s24, 1
    %p42 = por %p40, %p41
    %p43 = scmp.ne.s32.totalorder %s32, %s33
    %p44 = scmp.eq.s32.totalorder %s24, 0
    %p45 = por %p43, %p44
    %p46 = scmp.ne.s32.totalorder %s32, %s33
    %p47 = scmp.eq.s32.totalorder %s25, 1
    %p48 = por %p46, %p47
    %p50 = scmp.ne.s32.totalorder %s33, %s49
    %p51 = scmp.eq.s32.totalorder %s25, 0
    %p52 = por %p50, %p51
    %s54 = sadd.s32 %s53, 1
    %p57 = scmp.eq.s32.totalorder %s19, 1
    %p58 = scmp.ne.s32.totalorder %s53, %s55
    %p59 = scmp.eq.s32.totalorder %s19, 0
    %p60 = por %p58, %p59
    %p61 = scmp.ne.s32.totalorder %s53, %s55
    %p62 = scmp.eq.s32.totalorder %s24, 1
    %p63 = por %p61, %p62
    %p64 = scmp.ne.s32.totalorder %s55, %s56
    %p65 = scmp.eq.s32.totalorder %s24, 0
    %p66 = por %p64, %p65
    %p67 = scmp.ne.s32.totalorder %s55, %s56
    %p68 = scmp.eq.s32.totalorder %s25, 1
    %p69 = por %p67, %p68
    %p71 = scmp.ne.s32.totalorder %s56, %s70
    %p72 = scmp.eq.s32.totalorder %s25, 0
    %p73 = por %p71, %p72
    %s75 = sadd.s32 %s74, 1
    %p78 = scmp.eq.s32.totalorder %s19, 1
    %p79 = scmp.ne.s32.totalorder %s74, %s76
    %p80 = scmp.eq.s32.totalorder %s19, 0
    %p81 = por %p79, %p80
    %p82 = scmp.ne.s32.totalorder %s74, %s76
    %p83 = scmp.eq.s32.totalorder %s24, 1
    %p84 = por %p82, %p83
    %p85 = scmp.ne.s32.totalorder %s76, %s77
    %p86 = scmp.eq.s32.totalorder %s24, 0
    %p87 = por %p85, %p86
    %p88 = scmp.ne.s32.totalorder %s76, %s77
    %p89 = scmp.eq.s32.totalorder %s25, 1
    %p90 = por %p88, %p89
    %p92 = scmp.ne.s32.totalorder %s77, %s91
    %p93 = scmp.eq.s32.totalorder %s25, 0
    %p94 = por %p92, %p93
    %s96 = sadd.s32 %s95, 1
    %p99 = scmp.eq.s32.totalorder %s19, 1
    %p100 = scmp.ne.s32.totalorder %s95, %s97
    %p101 = scmp.eq.s32.totalorder %s19, 0
    %p102 = por %p100, %p101
    %p103 = scmp.ne.s32.totalorder %s95, %s97
    %p104 = scmp.eq.s32.totalorder %s24, 1
    %p105 = por %p103, %p104
    %p106 = scmp.ne.s32.totalorder %s97, %s98
    %p107 = scmp.eq.s32.totalorder %s24, 0
    %p108 = por %p106, %p107
    %p109 = scmp.ne.s32.totalorder %s97, %s98
    %p110 = scmp.eq.s32.totalorder %s25, 1
    %p111 = por %p109, %p110
    %p113 = scmp.ne.s32.totalorder %s98, %s112
    %p114 = scmp.eq.s32.totalorder %s25, 0
    %p115 = por %p113, %p114
    %s117 = sadd.s32 %s116, 1
    %p120 = scmp.eq.s32.totalorder %s19, 1
    %p121 = scmp.ne.s32.totalorder %s116, %s118
    %p122 = scmp.eq.s32.totalorder %s19, 0
    %p123 = por %p121, %p122
    %p124 = scmp.ne.s32.totalorder %s116, %s118
    %p125 = scmp.eq.s32.totalorder %s24, 1
    %p126 = por %p124, %p125
    %p127 = scmp.ne.s32.totalorder %s118, %s119
    %p128 = scmp.eq.s32.totalorder %s24, 0
    %p129 = por %p127, %p128
    %p130 = scmp.ne.s32.totalorder %s118, %s119
    %p131 = scmp.eq.s32.totalorder %s25, 1
    %p132 = por %p130, %p131
    %p134 = scmp.ne.s32.totalorder %s119, %s133
    %p135 = scmp.eq.s32.totalorder %s25, 0
    %p136 = por %p134, %p135
    %s138 = sadd.s32 %s137, 1
    %p141 = scmp.eq.s32.totalorder %s19, 1
    %p142 = scmp.ne.s32.totalorder %s137, %s139
    %p143 = scmp.eq.s32.totalorder %s19, 0
    %p144 = por %p142, %p143
    %p145 = scmp.ne.s32.totalorder %s137, %s139
    %p146 = scmp.eq.s32.totalorder %s24, 1
    %p147 = por %p145, %p146
    %p148 = scmp.ne.s32.totalorder %s139, %s140
    %p149 = scmp.eq.s32.totalorder %s24, 0
    %p150 = por %p148, %p149
    %p151 = scmp.ne.s32.totalorder %s139, %s140
    %p152 = scmp.eq.s32.totalorder %s25, 1
    %p153 = por %p151, %p152
    %p155 = scmp.ne.s32.totalorder %s140, %s154
    %p156 = scmp.eq.s32.totalorder %s25, 0
    %p157 = por %p155, %p156
    %s159 = sadd.s32 %s158, 1
    %p162 = scmp.eq.s32.totalorder %s19, 1
    %p163 = scmp.ne.s32.totalorder %s158, %s160
    %p164 = scmp.eq.s32.totalorder %s19, 0
    %p165 = por %p163, %p164
    %p166 = scmp.ne.s32.totalorder %s158, %s160
    %p167 = scmp.eq.s32.totalorder %s24, 1
    %p168 = por %p166, %p167
    %p169 = scmp.ne.s32.totalorder %s160, %s161
    %p170 = scmp.eq.s32.totalorder %s24, 0
    %p171 = por %p169, %p170
    %p172 = scmp.ne.s32.totalorder %s160, %s161
    %p173 = scmp.eq.s32.totalorder %s25, 1
    %p174 = por %p172, %p173
    %p176 = scmp.ne.s32.totalorder %s161, %s175
    %p177 = scmp.eq.s32.totalorder %s25, 0
    %p178 = por %p176, %p177
    %s180 = sadd.s32 %s179, 1
    %p183 = scmp.eq.s32.totalorder %s19, 1
    %p184 = scmp.ne.s32.totalorder %s179, %s181
    %p185 = scmp.eq.s32.totalorder %s19, 0
    %p186 = por %p184, %p185
    %p187 = scmp.ne.s32.totalorder %s179, %s181
    %p188 = scmp.eq.s32.totalorder %s24, 1
    %p189 = por %p187, %p188
    %p190 = scmp.ne.s32.totalorder %s181, %s182
    %p191 = scmp.eq.s32.totalorder %s24, 0
    %p192 = por %p190, %p191
    %p193 = scmp.ne.s32.totalorder %s181, %s182
    %p194 = scmp.eq.s32.totalorder %s25, 1
    %p195 = por %p193, %p194
    %p197 = scmp.ne.s32.totalorder %s182, %s196
    %p198 = scmp.eq.s32.totalorder %s25, 0
    %p199 = por %p197, %p198
    %s201 = sadd.s32 %s200, 1
    %p204 = scmp.eq.s32.totalorder %s19, 1
    %p205 = scmp.ne.s32.totalorder %s200, %s202
    %p206 = scmp.eq.s32.totalorder %s19, 0
    %p207 = por %p205, %p206
    %p208 = scmp.ne.s32.totalorder %s200, %s202
    %p209 = scmp.eq.s32.totalorder %s24, 1
    %p210 = por %p208, %p209
    %p211 = scmp.ne.s32.totalorder %s202, %s203
    %p212 = scmp.eq.s32.totalorder %s24, 0
    %p213 = por %p211, %p212
    %p214 = scmp.ne.s32.totalorder %s202, %s203
    %p215 = scmp.eq.s32.totalorder %s25, 1
    %p216 = por %p214, %p215
    %p218 = scmp.ne.s32.totalorder %s203, %s217
    %p219 = scmp.eq.s32.totalorder %s25, 0
    %p220 = por %p218, %p219
    %s222 = sadd.s32 %s221, 1
    %p225 = scmp.eq.s32.totalorder %s19, 1
    %p226 = scmp.ne.s32.totalorder %s221, %s223
    %p227 = scmp.eq.s32.totalorder %s19, 0
    %p228 = por %p226, %p227
    %p229 = scmp.ne.s32.totalorder %s221, %s223
    %p230 = scmp.eq.s32.totalorder %s24, 1
    %p231 = por %p229, %p230
    %p232 = scmp.ne.s32.totalorder %s223, %s224
    %p233 = scmp.eq.s32.totalorder %s24, 0
    %p234 = por %p232, %p233
    %p235 = scmp.ne.s32.totalorder %s223, %s224
    %p236 = scmp.eq.s32.totalorder %s25, 1
    %p237 = por %p235, %p236
    %p239 = scmp.ne.s32.totalorder %s224, %s238
    %p240 = scmp.eq.s32.totalorder %s25, 0
    %p241 = por %p239, %p240
    %s243 = sadd.s32 %s242, 1
    %p246 = scmp.eq.s32.totalorder %s19, 1
    %p247 = scmp.ne.s32.totalorder %s242, %s244
    %p248 = scmp.eq.s32.totalorder %s19, 0
    %p249 = por %p247, %p248
    %p250 = scmp.ne.s32.totalorder %s242, %s244
    %p251 = scmp.eq.s32.totalorder %s24, 1
    %p252 = por %p250, %p251
    %p253 = scmp.ne.s32.totalorder %s244, %s245
    %p254 = scmp.eq.s32.totalorder %s24, 0
    %p255 = por %p253, %p254
    %p256 = scmp.ne.s32.totalorder %s244, %s245
    %p257 = scmp.eq.s32.totalorder %s25, 1
    %p258 = por %p256, %p257
    %p260 = scmp.ne.s32.totalorder %s245, %s259
    %p261 = scmp.eq.s32.totalorder %s25, 0
    %p262 = por %p260, %p261
    %s264 = sadd.s32 %s263, 1
    %p267 = scmp.eq.s32.totalorder %s19, 1
    %p268 = scmp.ne.s32.totalorder %s263, %s265
    %p269 = scmp.eq.s32.totalorder %s19, 0
    %p270 = por %p268, %p269
    %p271 = scmp.ne.s32.totalorder %s263, %s265
    %p272 = scmp.eq.s32.totalorder %s24, 1
    %p273 = por %p271, %p272
    %p274 = scmp.ne.s32.totalorder %s265, %s266
    %p275 = scmp.eq.s32.totalorder %s24, 0
    %p276 = por %p274, %p275
    %p277 = scmp.ne.s32.totalorder %s265, %s266
    %p278 = scmp.eq.s32.totalorder %s25, 1
    %p279 = por %p277, %p278
    %p281 = scmp.ne.s32.totalorder %s266, %s280
    %p282 = scmp.eq.s32.totalorder %s25, 0
    %p283 = por %p281, %p282
    %s285 = sadd.s32 %s284, 1
    %p288 = scmp.eq.s32.totalorder %s19, 1
    %p289 = scmp.ne.s32.totalorder %s284, %s286
    %p290 = scmp.eq.s32.totalorder %s19, 0
    %p291 = por %p289, %p290
    %p292 = scmp.ne.s32.totalorder %s284, %s286
    %p293 = scmp.eq.s32.totalorder %s24, 1
    %p294 = por %p292, %p293
    %p295 = scmp.ne.s32.totalorder %s286, %s287
    %p296 = scmp.eq.s32.totalorder %s24, 0
    %p297 = por %p295, %p296
    %p298 = scmp.ne.s32.totalorder %s286, %s287
    %p299 = scmp.eq.s32.totalorder %s25, 1
    %p300 = por %p298, %p299
    %p302 = scmp.ne.s32.totalorder %s287, %s301
    %p303 = scmp.eq.s32.totalorder %s25, 0
    %p304 = por %p302, %p303
    %s305 = ssub.s32 %s19, %s26
    %p306 = scmp.eq.s32.totalorder %s305, 0
    %s308 = sadd.s32 %s307, 1
    %s309 = scalar_select %p306, %s307, %s308
    %p312 = pneg %p306
    %p313 = scmp.eq.s32.totalorder %s19, 1
    %p314 = por %p312, %p313
    %p315 = scmp.ne.s32.totalorder %s307, %s310
    %p316 = scmp.eq.s32.totalorder %s19, 0
    %p317 = por %p315, %p316
    %p318 = scmp.ne.s32.totalorder %s307, %s310
    %p319 = scmp.eq.s32.totalorder %s24, 1
    %p320 = por %p318, %p319
    %p321 = scmp.ne.s32.totalorder %s310, %s311
    %p322 = scmp.eq.s32.totalorder %s24, 0
    %p323 = por %p321, %p322
    %p324 = scmp.ne.s32.totalorder %s310, %s311
    %p325 = scmp.eq.s32.totalorder %s25, 1
    %p326 = por %p324, %p325
    %p328 = scmp.ne.s32.totalorder %s311, %s327
    %p329 = scmp.eq.s32.totalorder %s25, 0
    %p330 = por %p328, %p329
    %p331 = scmp.le.s32.totalorder 1, %s19
    %p332 = scmp.lt.s32.totalorder %s19, 3
    %p333 = pnand %p331, %p332
    %p334 = pneg %p333
    // Predicated region
    $region9: #{mini_unet_forward.1} parent=5 // pred_check
      _
    $region10: #{mini_unet_forward.1} parent=5 // pred_check_branch
      %336 = sbr.rel (%p333) target = $region12
    $region11: #{mini_unet_forward.1} parent=5 // pred_region
      %s337 = ssub.s32 %s19, 1
      // Predicated region
      $region13: #{mini_unet_forward.1} parent=11 // pred_check
        %p338 = pneg %p66
      $region14: #{mini_unet_forward.1} parent=11 // pred_check_branch
        %340 = sbr.rel (%p338) target = $region16
      $region15: #{mini_unet_forward.1} parent=11 // pred_region
        _
      $region16: #{mini_unet_forward.1} parent=11 // pred_fallthru
        _
      // Predicated region
      $region17: #{mini_unet_forward.1} parent=11 // pred_check
        %p341 = pneg %p87
      $region18: #{mini_unet_forward.1} parent=11 // pred_check_branch
        %343 = sbr.rel (%p341) target = $region20
      $region19: #{mini_unet_forward.1} parent=11 // pred_region
        _
      $region20: #{mini_unet_forward.1} parent=11 // pred_fallthru
        _
      // Predicated region
      $region21: #{mini_unet_forward.1} parent=11 // pred_check
        %p344 = pneg %p108
      $region22: #{mini_unet_forward.1} parent=11 // pred_check_branch
        %346 = sbr.rel (%p344) target = $region24
      $region23: #{mini_unet_forward.1} parent=11 // pred_region
        _
      $region24: #{mini_unet_forward.1} parent=11 // pred_fallthru
        _
      // Predicated region
      $region25: #{mini_unet_forward.1} parent=11 // pred_check
        %p347 = pneg %p129
      $region26: #{mini_unet_forward.1} parent=11 // pred_check_branch
        %349 = sbr.rel (%p347) target = $region28
      $region27: #{mini_unet_forward.1} parent=11 // pred_region
        _
      $region28: #{mini_unet_forward.1} parent=11 // pred_fallthru
        _
      // Predicated region
      $region29: #{mini_unet_forward.1} parent=11 // pred_check
        %p350 = pneg %p150
      $region30: #{mini_unet_forward.1} parent=11 // pred_check_branch
        %352 = sbr.rel (%p350) target = $region32
      $region31: #{mini_unet_forward.1} parent=11 // pred_region
        _
      $region32: #{mini_unet_forward.1} parent=11 // pred_fallthru
        _
      // Predicated region
      $region33: #{mini_unet_forward.1} parent=11 // pred_check
        %p353 = pneg %p171
      $region34: #{mini_unet_forward.1} parent=11 // pred_check_branch
        %355 = sbr.rel (%p353) target = $region36
      $region35: #{mini_unet_forward.1} parent=11 // pred_region
        _
      $region36: #{mini_unet_forward.1} parent=11 // pred_fallthru
        _
      // Predicated region
      $region37: #{mini_unet_forward.1} parent=11 // pred_check
        %p356 = pneg %p192
      $region38: #{mini_unet_forward.1} parent=11 // pred_check_branch
        %358 = sbr.rel (%p356) target = $region40
      $region39: #{mini_unet_forward.1} parent=11 // pred_region
        _
      $region40: #{mini_unet_forward.1} parent=11 // pred_fallthru
        _
      // Predicated region
      $region41: #{mini_unet_forward.1} parent=11 // pred_check
        %p359 = pneg %p213
      $region42: #{mini_unet_forward.1} parent=11 // pred_check_branch
        %361 = sbr.rel (%p359) target = $region44
      $region43: #{mini_unet_forward.1} parent=11 // pred_region
        _
      $region44: #{mini_unet_forward.1} parent=11 // pred_fallthru
        _
      // Predicated region
      $region45: #{mini_unet_forward.1} parent=11 // pred_check
        %p362 = pneg %p234
      $region46: #{mini_unet_forward.1} parent=11 // pred_check_branch
        %364 = sbr.rel (%p362) target = $region48
      $region47: #{mini_unet_forward.1} parent=11 // pred_region
        _
      $region48: #{mini_unet_forward.1} parent=11 // pred_fallthru
        _
      // Predicated region
      $region49: #{mini_unet_forward.1} parent=11 // pred_check
        %p365 = pneg %p255
      $region50: #{mini_unet_forward.1} parent=11 // pred_check_branch
        %367 = sbr.rel (%p365) target = $region52
      $region51: #{mini_unet_forward.1} parent=11 // pred_region
        _
      $region52: #{mini_unet_forward.1} parent=11 // pred_fallthru
        _
      // Predicated region
      $region53: #{mini_unet_forward.1} parent=11 // pred_check
        %p368 = pneg %p276
      $region54: #{mini_unet_forward.1} parent=11 // pred_check_branch
        %370 = sbr.rel (%p368) target = $region56
      $region55: #{mini_unet_forward.1} parent=11 // pred_region
        _
      $region56: #{mini_unet_forward.1} parent=11 // pred_fallthru
        _
      // Predicated region
      $region57: #{mini_unet_forward.1} parent=11 // pred_check
        %p371 = pneg %p297
      $region58: #{mini_unet_forward.1} parent=11 // pred_check_branch
        %373 = sbr.rel (%p371) target = $region60
      $region59: #{mini_unet_forward.1} parent=11 // pred_region
        _
      $region60: #{mini_unet_forward.1} parent=11 // pred_fallthru
        _
    $region12: #{mini_unet_forward.1} parent=5 // pred_fallthru
      _
    %p374 = scmp.lt.s32.totalorder %s19, 2
    // Predicated region
    $region61: #{mini_unet_forward.1} parent=5 // pred_check
      %p375 = pneg %p374
    $region62: #{mini_unet_forward.1} parent=5 // pred_check_branch
      %377 = sbr.rel (%p375) target = $region64
    $region63: #{mini_unet_forward.1} parent=5 // pred_region
      // Predicated region
      $region65: #{mini_unet_forward.1} parent=63 // pred_check
        %p378 = pneg %p39
      $region66: #{mini_unet_forward.1} parent=63 // pred_check_branch
        %380 = sbr.rel (%p378) target = $region68
      $region67: #{mini_unet_forward.1} parent=63 // pred_region
        %s381 = smul.u32 4, %s19
        %p382 = scmp.lt.s32.totalorder %s381, 7
        %s383 = scalar_select %p382, %s381, 7
        %s384 = smul.addr %s383, 2
        %s385 = smul.addr %s384, 8
        %s386 = scalar_lea.vmem %s0, %s385
        %s387 = smul.u32 4, %s19
      $region68: #{mini_unet_forward.1} parent=63 // pred_fallthru
        _
    $region64: #{mini_unet_forward.1} parent=5 // pred_fallthru
      _
    %p388 = scmp.le.s32.totalorder 1, %s19
    %p389 = scmp.lt.s32.totalorder %s19, 3
    %p390 = pnand %p388, %p389
    %p391 = pneg %p390
    // Predicated region
    $region69: #{mini_unet_forward.1} parent=5 // pred_check
      _
    $region70: #{mini_unet_forward.1} parent=5 // pred_check_branch
      %393 = sbr.rel (%p390) target = $region72
    $region71: #{mini_unet_forward.1} parent=5 // pred_region
      %s394 = ssub.s32 %s19, 1
      %s395 = smul.u32 4, %s24
      %p396 = scmp.lt.s32.totalorder %s395, 7
      %s397 = scalar_select %p396, %s395, 7
      %s398 = smul.addr %s397, 2
      %s399 = smul.addr %s398, 8
      %s400 = scalar_lea.vmem %s0, %s399
      %p401 = pneg %p45
      %p402 = pneg %p42
      %p403 = pneg %p66
      %p404 = pneg %p63
      %p405 = pneg %p87
      %p406 = pneg %p84
      %p407 = pneg %p108
      %p408 = pneg %p105
      %p409 = pneg %p129
      %p410 = pneg %p126
      %p411 = pneg %p150
      %p412 = pneg %p147
      %p413 = pneg %p171
      %p414 = pneg %p168
      %p415 = pneg %p192
      %p416 = pneg %p189
      %p417 = pneg %p213
      %p418 = pneg %p210
      %p419 = pneg %p234
      %p420 = pneg %p231
      %p421 = pneg %p255
      %p422 = pneg %p252
      %p423 = pneg %p276
      %p424 = pneg %p273
      %p425 = pneg %p297
      %p426 = pneg %p294
      %p427 = pneg %p323
      %p428 = pneg %p320
      %s429 = smul.u32 4, %s24
      %p430 = scmp.lt.s32.totalorder %s429, 7
      %s431 = scalar_select %p430, %s429, 7
      %s432 = smul.addr %s431, 12
      %s433 = smul.addr %s432, 8
      %s434 = scalar_lea.vmem %s13, %s433
      %s435 = smul.u32 4, %s24
      %p436 = scmp.lt.s32.totalorder %s435, 7
      %s437 = scalar_select %p436, %s435, 7
      %s438 = smul.addr %s437, 2
      %s439 = smul.addr %s438, 8
      %s440 = scalar_lea.vmem %s0, %s439
      %s441 = smul.u32 4, %s24
      %s442 = smul.u32 4, %s24
      %p443 = scmp.lt.s32.totalorder %s442, 7
      %s444 = scalar_select %p443, %s442, 7
      %s445 = smul.addr %s444, 12
      %s446 = smul.addr %s445, 8
      %s447 = scalar_lea.vmem %s13, %s446
      %s448 = smul.u32 4, %s24
      %vm449 = vcmask 138240
      %450 = vst.msk [vmem:[#allocation2] sm:$0xff] %vm449, 0.0
      %451 = vst.msk [vmem:[#allocation2 + $0x48] sm:$0xff] %vm449, 0.0
      %vm452 = vcmask 277640
      %453 = vst.msk [vmem:[#allocation2 + $0x40] sm:$0xff] %vm452, 0.0
      %454 = vst.msk [vmem:[#allocation2 + $0x88] sm:$0xff] %vm452, 0.0
      %vm455 = vcmask 72704
      %456 = vst.msk [vmem:[#allocation3] sm:$0xff] %vm455, 0.0
      %457 = vst.msk [vmem:[#allocation3 + $0x18] sm:$0xff] %vm455, 0.0
      %458 = vst.msk [vmem:[#allocation3 + $0x30] sm:$0xff] %vm455, 0.0
      %459 = vst.msk [vmem:[#allocation3 + $0x48] sm:$0xff] %vm455, 0.0
      %vm460 = vcmask 146504
      %461 = vst.msk [vmem:[#allocation3 + $0x10] sm:$0xff] %vm460, 0.0
      %462 = vst.msk [vmem:[#allocation3 + $0x28] sm:$0xff] %vm460, 0.0
      %463 = vst.msk [vmem:[#allocation3 + $0x40] sm:$0xff] %vm460, 0.0
      %464 = vst.msk [vmem:[#allocation3 + $0x58] sm:$0xff] %vm460, 0.0
      %v465 = vld [vmem:[%s11] sm:$0xff]
      %v466 = vld [vmem:[%s11 + $0x8] sm:$0xff]
      %v467 = vld [vmem:[%s11 + $0x10] sm:$0xff]
      %v468 = vld [vmem:[%s11 + $0x18] sm:$0xff]
      %v469 = vld [vmem:[%s11 + $0x20] sm:$0xff]
      %v470 = vld [vmem:[%s11 + $0x28] sm:$0xff]
      %v471 = vld [vmem:[%s11 + $0x30] sm:$0xff]
      %v472 = vld [vmem:[%s11 + $0x38] sm:$0xff]
      %v473 = vld [vmem:[%s11 + $0x40] sm:$0x1]
      %v474 = vld [vmem:[%s11 + $0x48] sm:$0x1]
      %v475 = vld [vmem:[%s11 + $0x50] sm:$0x1]
      %v476 = vld [vmem:[%s11 + $0x58] sm:$0x1]
      %v477 = vld [vmem:[%s11 + $0x60] sm:$0x1]
      %v478 = vld [vmem:[%s11 + $0x68] sm:$0x1]
      %v479 = vld [vmem:[%s11 + $0x70] sm:$0x1]
      %v480 = vld [vmem:[%s11 + $0x78] sm:$0x1]
      %v481 = vld [vmem:[%s12] sm:$0xff]
      %v482 = vld [vmem:[%s12 + $0x8] sm:$0xff]
      %v483 = vld [vmem:[%s12 + $0x10] sm:$0x1]
      %v484 = vld [vmem:[%s12 + $0x18] sm:$0x1]
      %v485 = vld [vmem:[%s440] sm:$0xff]
      %v486 = vld [vmem:[%s440 + $0x8] sm:$0xff]
      %489 = vrot.lane.b32.xlu0 %v485, 17
      %v490 = vpop.permute.xlu0 %489
      %491 = vrot.lane.b32.xlu0 %v486, 17
      %v492 = vpop.permute.xlu0 %491
      %v493 = vsel %vm449, %v490, %v492
      %vm497 = vcmask 1047688
      %498 = vst.msk [vmem:[#allocation2] sm:$0xff] %vm497, %v490
      %499 = vst [vmem:[#allocation2 + $0x8] sm:$0xff] %v493
      %500 = vst.msk [vmem:[#allocation2 + $0x10] sm:$0xff] %vm449, %v492
      %s501 = scalar_lea.vmem %s440, 16
      %v502 = vld [vmem:[%s501] sm:$0xff]
      %v503 = vld [vmem:[%s501 + $0x8] sm:$0xff]
      %506 = vrot.lane.b32.xlu0 %v502, 17
      %v507 = vpop.permute.xlu0 %506
      %508 = vrot.lane.b32.xlu0 %v503, 17
      %v509 = vpop.permute.xlu0 %508
      %v510 = vsel %vm449, %v507, %v509
      %514 = vst.msk [vmem:[#allocation2 + $0x10] sm:$0xff] %vm497, %v507
      %515 = vst [vmem:[#allocation2 + $0x18] sm:$0xff] %v510
      %516 = vst.msk [vmem:[#allocation2 + $0x20] sm:$0xff] %vm449, %v509
      %s517 = scalar_lea.vmem %s440, 32
      %v518 = vld [vmem:[%s517] sm:$0xff]
      %v519 = vld [vmem:[%s517 + $0x8] sm:$0xff]
      %522 = vrot.lane.b32.xlu0 %v518, 17
      %v523 = vpop.permute.xlu0 %522
      %524 = vrot.lane.b32.xlu0 %v519, 17
      %v525 = vpop.permute.xlu0 %524
      %v526 = vsel %vm449, %v523, %v525
      %530 = vst.msk [vmem:[#allocation2 + $0x20] sm:$0xff] %vm497, %v523
      %531 = vst [vmem:[#allocation2 + $0x28] sm:$0xff] %v526
      %532 = vst.msk [vmem:[#allocation2 + $0x30] sm:$0xff] %vm449, %v525
      %s533 = scalar_lea.vmem %s440, 48
      %v534 = vld [vmem:[%s533] sm:$0xff]
      %v535 = vld [vmem:[%s533 + $0x8] sm:$0xff]
      %538 = vrot.lane.b32.xlu0 %v534, 17
      %v539 = vpop.permute.xlu0 %538
      %540 = vrot.lane.b32.xlu0 %v535, 17
      %v541 = vpop.permute.xlu0 %540
      %v542 = vsel %vm449, %v539, %v541
      %546 = vst.msk [vmem:[#allocation2 + $0x30] sm:$0xff] %vm497, %v539
      %547 = vst [vmem:[#allocation2 + $0x38] sm:$0xff] %v542
      %548 = vst.msk [vmem:[#allocation2 + $0x40] sm:$0xff] %vm449, %v541
      %v549 = vld [vmem:[#allocation2] sm:$0xff]
      %v550 = vld [vmem:[#allocation2 + $0x8] sm:$0xff]
      %v551 = vld [vmem:[#allocation2 + $0x10] sm:$0xff]
      %v552 = vld [vmem:[#allocation2 + $0x18] sm:$0xff]
      %v553 = vld [vmem:[#allocation2 + $0x20] sm:$0xff]
      %v554 = vld [vmem:[#allocation2 + $0x28] sm:$0xff]
      %v555 = vld [vmem:[#allocation2 + $0x30] sm:$0xff]
      %v556 = vld [vmem:[#allocation2 + $0x38] sm:$0xff]
      %v557 = vperm.slane %v465, 0
      %v558 = vperm.slane %v466, 0
      %v559 = vperm.slane %v467, 0
      %v560 = vperm.slane %v468, 0
      %v561 = vperm.slane %v469, 0
      %v562 = vperm.slane %v470, 0
      %v563 = vperm.slane %v471, 0
      %v564 = vperm.slane %v472, 0
      %v565 = vmul.f32 %v549, %v557
      %v566 = vmul.f32 %v550, %v558
      %v567 = vmul.f32 %v551, %v559
      %v568 = vmul.f32 %v552, %v560
      %v569 = vmul.f32 %v553, %v561
      %v570 = vmul.f32 %v554, %v562
      %v571 = vmul.f32 %v555, %v563
      %v572 = vmul.f32 %v556, %v564
      %v573 = vld [vmem:[#allocation2 + $0x40] sm:$0xff]
      %v574 = vperm.slane %v465, 1
      %v575 = vperm.slane %v466, 1
      %v576 = vperm.slane %v467, 1
      %v577 = vperm.slane %v468, 1
      %v578 = vperm.slane %v469, 1
      %v579 = vperm.slane %v470, 1
      %v580 = vperm.slane %v471, 1
      %v581 = vperm.slane %v472, 1
      %590 = vrot.lane.b32.xlu0 %v574, 1
      %v591 = vpop.permute.xlu0 %590
      %592 = vrot.lane.b32.xlu0 %v575, 1
      %v593 = vpop.permute.xlu0 %592
      %594 = vrot.lane.b32.xlu0 %v576, 1
      %v595 = vpop.permute.xlu0 %594
      %596 = vrot.lane.b32.xlu0 %v577, 1
      %v597 = vpop.permute.xlu0 %596
      %598 = vrot.lane.b32.xlu0 %v578, 1
      %v599 = vpop.permute.xlu0 %598
      %600 = vrot.lane.b32.xlu0 %v579, 1
      %v601 = vpop.permute.xlu0 %600
      %602 = vrot.lane.b32.xlu0 %v580, 1
      %v603 = vpop.permute.xlu0 %602
      %604 = vrot.lane.b32.xlu0 %v581, 1
      %v605 = vpop.permute.xlu0 %604
      %vm606 = vcmask 7168
      %v607 = vsel %vm606, %v591, %v593
      %v608 = vsel %vm606, %v593, %v595
      %v609 = vsel %vm606, %v595, %v597
      %v610 = vsel %vm606, %v597, %v599
      %v611 = vsel %vm606, %v599, %v601
      %v612 = vsel %vm606, %v601, %v603
      %v613 = vsel %vm606, %v603, %v605
      %v623 = vmul.f32 %v549, %v591
      %v624 = vmul.f32 %v550, %v607
      %v625 = vmul.f32 %v551, %v608
      %v626 = vmul.f32 %v552, %v609
      %v627 = vmul.f32 %v553, %v610
      %v628 = vmul.f32 %v554, %v611
      %v629 = vmul.f32 %v555, %v612
      %v630 = vmul.f32 %v556, %v613
      %v631 = vmul.f32 %v573, %v605
      %v632 = vperm.slane %v465, 2
      %v633 = vperm.slane %v466, 2
      %v634 = vperm.slane %v467, 2
      %v635 = vperm.slane %v468, 2
      %v636 = vperm.slane %v469, 2
      %v637 = vperm.slane %v470, 2
      %v638 = vperm.slane %v471, 2
      %v639 = vperm.slane %v472, 2
      %648 = vrot.lane.b32.xlu0 %v632, 2
      %v649 = vpop.permute.xlu0 %648
      %650 = vrot.lane.b32.xlu0 %v633, 2
      %v651 = vpop.permute.xlu0 %650
      %652 = vrot.lane.b32.xlu0 %v634, 2
      %v653 = vpop.permute.xlu0 %652
      %654 = vrot.lane.b32.xlu0 %v635, 2
      %v655 = vpop.permute.xlu0 %654
      %656 = vrot.lane.b32.xlu0 %v636, 2
      %v657 = vpop.permute.xlu0 %656
      %658 = vrot.lane.b32.xlu0 %v637, 2
      %v659 = vpop.permute.xlu0 %658
      %660 = vrot.lane.b32.xlu0 %v638, 2
      %v661 = vpop.permute.xlu0 %660
      %662 = vrot.lane.b32.xlu0 %v639, 2
      %v663 = vpop.permute.xlu0 %662
      %vm664 = vcmask 15360
      %v665 = vsel %vm664, %v649, %v651
      %v666 = vsel %vm664, %v651, %v653
      %v667 = vsel %vm664, %v653, %v655
      %v668 = vsel %vm664, %v655, %v657
      %v669 = vsel %vm664, %v657, %v659
      %v670 = vsel %vm664, %v659, %v661
      %v671 = vsel %vm664, %v661, %v663
      %v681 = vmul.f32 %v549, %v649
      %v682 = vmul.f32 %v550, %v665
      %v683 = vmul.f32 %v551, %v666
      %v684 = vmul.f32 %v552, %v667
      %v685 = vmul.f32 %v553, %v668
      %v686 = vmul.f32 %v554, %v669
      %v687 = vmul.f32 %v555, %v670
      %v688 = vmul.f32 %v556, %v671
      %v689 = vmul.f32 %v573, %v663
      %v690 = vperm.slane %v465, 3
      %v691 = vperm.slane %v466, 3
      %v692 = vperm.slane %v467, 3
      %v693 = vperm.slane %v468, 3
      %v694 = vperm.slane %v469, 3
      %v695 = vperm.slane %v470, 3
      %v696 = vperm.slane %v471, 3
      %v697 = vperm.slane %v472, 3
      %706 = vrot.lane.b32.xlu0 %v690, 16
      %v707 = vpop.permute.xlu0 %706
      %708 = vrot.lane.b32.xlu0 %v691, 16
      %v709 = vpop.permute.xlu0 %708
      %710 = vrot.lane.b32.xlu0 %v692, 16
      %v711 = vpop.permute.xlu0 %710
      %712 = vrot.lane.b32.xlu0 %v693, 16
      %v713 = vpop.permute.xlu0 %712
      %714 = vrot.lane.b32.xlu0 %v694, 16
      %v715 = vpop.permute.xlu0 %714
      %716 = vrot.lane.b32.xlu0 %v695, 16
      %v717 = vpop.permute.xlu0 %716
      %718 = vrot.lane.b32.xlu0 %v696, 16
      %v719 = vpop.permute.xlu0 %718
      %720 = vrot.lane.b32.xlu0 %v697, 16
      %v721 = vpop.permute.xlu0 %720
      %vm722 = vcmask 130048
      %v723 = vsel %vm722, %v707, %v709
      %v724 = vsel %vm722, %v709, %v711
      %v725 = vsel %vm722, %v711, %v713
      %v726 = vsel %vm722, %v713, %v715
      %v727 = vsel %vm722, %v715, %v717
      %v728 = vsel %vm722, %v717, %v719
      %v729 = vsel %vm722, %v719, %v721
      %v739 = vmul.f32 %v549, %v707
      %v740 = vmul.f32 %v550, %v723
      %v741 = vmul.f32 %v551, %v724
      %v742 = vmul.f32 %v552, %v725
      %v743 = vmul.f32 %v553, %v726
      %v744 = vmul.f32 %v554, %v727
      %v745 = vmul.f32 %v555, %v728
      %v746 = vmul.f32 %v556, %v729
      %v747 = vmul.f32 %v573, %v721
      %v748 = vperm.slane %v465, 5
      %v749 = vperm.slane %v466, 5
      %v750 = vperm.slane %v467, 5
      %v751 = vperm.slane %v468, 5
      %v752 = vperm.slane %v469, 5
      %v753 = vperm.slane %v470, 5
      %v754 = vperm.slane %v471, 5
      %v755 = vperm.slane %v472, 5
      %764 = vrot.lane.b32.xlu0 %v748, 18
      %v765 = vpop.permute.xlu0 %764
      %766 = vrot.lane.b32.xlu0 %v749, 18
      %v767 = vpop.permute.xlu0 %766
      %768 = vrot.lane.b32.xlu0 %v750, 18
      %v769 = vpop.permute.xlu0 %768
      %770 = vrot.lane.b32.xlu0 %v751, 18
      %v771 = vpop.permute.xlu0 %770
      %772 = vrot.lane.b32.xlu0 %v752, 18
      %v773 = vpop.permute.xlu0 %772
      %774 = vrot.lane.b32.xlu0 %v753, 18
      %v775 = vpop.permute.xlu0 %774
      %776 = vrot.lane.b32.xlu0 %v754, 18
      %v777 = vpop.permute.xlu0 %776
      %778 = vrot.lane.b32.xlu0 %v755, 18
      %v779 = vpop.permute.xlu0 %778
      %vm780 = vcmask 146432
      %v781 = vsel %vm780, %v765, %v767
      %v782 = vsel %vm780, %v767, %v769
      %v783 = vsel %vm780, %v769, %v771
      %v784 = vsel %vm780, %v771, %v773
      %v785 = vsel %vm780, %v773, %v775
      %v786 = vsel %vm780, %v775, %v777
      %v787 = vsel %vm780, %v777, %v779
      %v797 = vmul.f32 %v549, %v765
      %v798 = vmul.f32 %v550, %v781
      %v799 = vmul.f32 %v551, %v782
      %v800 = vmul.f32 %v552, %v783
      %v801 = vmul.f32 %v553, %v784
      %v802 = vmul.f32 %v554, %v785
      %v803 = vmul.f32 %v555, %v786
      %v804 = vmul.f32 %v556, %v787
      %v805 = vmul.f32 %v573, %v779
      %v806 = vperm.slane %v465, 6
      %v807 = vperm.slane %v466, 6
      %v808 = vperm.slane %v467, 6
      %v809 = vperm.slane %v468, 6
      %v810 = vperm.slane %v469, 6
      %v811 = vperm.slane %v470, 6
      %v812 = vperm.slane %v471, 6
      %v813 = vperm.slane %v472, 6
      %822 = vrot.lane.b32.xlu0 %v806, 32
      %v823 = vpop.permute.xlu0 %822
      %824 = vrot.lane.b32.xlu0 %v807, 32
      %v825 = vpop.permute.xlu0 %824
      %826 = vrot.lane.b32.xlu0 %v808, 32
      %v827 = vpop.permute.xlu0 %826
      %828 = vrot.lane.b32.xlu0 %v809, 32
      %v829 = vpop.permute.xlu0 %828
      %830 = vrot.lane.b32.xlu0 %v810, 32
      %v831 = vpop.permute.xlu0 %830
      %832 = vrot.lane.b32.xlu0 %v811, 32
      %v833 = vpop.permute.xlu0 %832
      %834 = vrot.lane.b32.xlu0 %v812, 32
      %v835 = vpop.permute.xlu0 %834
      %836 = vrot.lane.b32.xlu0 %v813, 32
      %v837 = vpop.permute.xlu0 %836
      %vm838 = vcmask 261120
      %v839 = vsel %vm838, %v823, %v825
      %v840 = vsel %vm838, %v825, %v827
      %v841 = vsel %vm838, %v827, %v829
      %v842 = vsel %vm838, %v829, %v831
      %v843 = vsel %vm838, %v831, %v833
      %v844 = vsel %vm838, %v833, %v835
      %v845 = vsel %vm838, %v835, %v837
      %v855 = vmul.f32 %v549, %v823
      %v856 = vmul.f32 %v550, %v839
      %v857 = vmul.f32 %v551, %v840
      %v858 = vmul.f32 %v552, %v841
      %v859 = vmul.f32 %v553, %v842
      %v860 = vmul.f32 %v554, %v843
      %v861 = vmul.f32 %v555, %v844
      %v862 = vmul.f32 %v556, %v845
      %v863 = vmul.f32 %v573, %v837
      %v864 = vperm.slane %v465, 7
      %v865 = vperm.slane %v466, 7
      %v866 = vperm.slane %v467, 7
      %v867 = vperm.slane %v468, 7
      %v868 = vperm.slane %v469, 7
      %v869 = vperm.slane %v470, 7
      %v870 = vperm.slane %v471, 7
      %v871 = vperm.slane %v472, 7
      %880 = vrot.lane.b32.xlu0 %v864, 33
      %v881 = vpop.permute.xlu0 %880
      %882 = vrot.lane.b32.xlu0 %v865, 33
      %v883 = vpop.permute.xlu0 %882
      %884 = vrot.lane.b32.xlu0 %v866, 33
      %v885 = vpop.permute.xlu0 %884
      %886 = vrot.lane.b32.xlu0 %v867, 33
      %v887 = vpop.permute.xlu0 %886
      %888 = vrot.lane.b32.xlu0 %v868, 33
      %v889 = vpop.permute.xlu0 %888
      %890 = vrot.lane.b32.xlu0 %v869, 33
      %v891 = vpop.permute.xlu0 %890
      %892 = vrot.lane.b32.xlu0 %v870, 33
      %v893 = vpop.permute.xlu0 %892
      %894 = vrot.lane.b32.xlu0 %v871, 33
      %v895 = vpop.permute.xlu0 %894
      %vm896 = vcmask 269312
      %v897 = vsel %vm896, %v881, %v883
      %v898 = vsel %vm896, %v883, %v885
      %v899 = vsel %vm896, %v885, %v887
      %v900 = vsel %vm896, %v887, %v889
      %v901 = vsel %vm896, %v889, %v891
      %v902 = vsel %vm896, %v891, %v893
      %v903 = vsel %vm896, %v893, %v895
      %v913 = vmul.f32 %v549, %v881
      %v914 = vmul.f32 %v550, %v897
      %v915 = vmul.f32 %v551, %v898
      %v916 = vmul.f32 %v552, %v899
      %v917 = vmul.f32 %v553, %v900
      %v918 = vmul.f32 %v554, %v901
      %v919 = vmul.f32 %v555, %v902
      %v920 = vmul.f32 %v556, %v903
      %v921 = vmul.f32 %v573, %v895
      %v922 = vperm.slane %v473, 0
      %v923 = vperm.slane %v474, 0
      %v924 = vperm.slane %v475, 0
      %v925 = vperm.slane %v476, 0
      %v926 = vperm.slane %v477, 0
      %v927 = vperm.slane %v478, 0
      %v928 = vperm.slane %v479, 0
      %v929 = vperm.slane %v480, 0
      %938 = vrot.lane.b32.xlu0 %v922, 34
      %v939 = vpop.permute.xlu0 %938
      %940 = vrot.lane.b32.xlu0 %v923, 34
      %v941 = vpop.permute.xlu0 %940
      %942 = vrot.lane.b32.xlu0 %v924, 34
      %v943 = vpop.permute.xlu0 %942
      %944 = vrot.lane.b32.xlu0 %v925, 34
      %v945 = vpop.permute.xlu0 %944
      %946 = vrot.lane.b32.xlu0 %v926, 34
      %v947 = vpop.permute.xlu0 %946
      %948 = vrot.lane.b32.xlu0 %v927, 34
      %v949 = vpop.permute.xlu0 %948
      %950 = vrot.lane.b32.xlu0 %v928, 34
      %v951 = vpop.permute.xlu0 %950
      %952 = vrot.lane.b32.xlu0 %v929, 34
      %v953 = vpop.permute.xlu0 %952
      %vm954 = vcmask 277504
      %v955 = vsel %vm954, %v939, %v941
      %v956 = vsel %vm954, %v941, %v943
      %v957 = vsel %vm954, %v943, %v945
      %v958 = vsel %vm954, %v945, %v947
      %v959 = vsel %vm954, %v947, %v949
      %v960 = vsel %vm954, %v949, %v951
      %v961 = vsel %vm954, %v951, %v953
      %v971 = vmul.f32 %v549, %v939
      %v972 = vmul.f32 %v550, %v955
      %v973 = vmul.f32 %v551, %v956
      %v974 = vmul.f32 %v552, %v957
      %v975 = vmul.f32 %v553, %v958
      %v976 = vmul.f32 %v554, %v959
      %v977 = vmul.f32 %v555, %v960
      %v978 = vmul.f32 %v556, %v961
      %v979 = vmul.f32 %v573, %v953
      %989 = vrot.lane.b32.xlu0 %v623, 127
      %v990 = vpop.permute.xlu0 %989
      %991 = vrot.lane.b32.xlu0 %v624, 127
      %v992 = vpop.permute.xlu0 %991
      %993 = vrot.lane.b32.xlu0 %v625, 127
      %v994 = vpop.permute.xlu0 %993
      %995 = vrot.lane.b32.xlu0 %v626, 127
      %v996 = vpop.permute.xlu0 %995
      %997 = vrot.lane.b32.xlu0 %v627, 127
      %v998 = vpop.permute.xlu0 %997
      %999 = vrot.lane.b32.xlu0 %v628, 127
      %v1000 = vpop.permute.xlu0 %999
      %1001 = vrot.lane.b32.xlu0 %v629, 127
      %v1002 = vpop.permute.xlu0 %1001
      %1003 = vrot.lane.b32.xlu0 %v630, 127
      %v1004 = vpop.permute.xlu0 %1003
      %1005 = vrot.lane.b32.xlu0 %v631, 127
      %v1006 = vpop.permute.xlu0 %1005
      %vm1007 = vcmask 1039360
      %v1008 = vsel %vm1007, %v990, %v992
      %v1009 = vsel %vm1007, %v992, %v994
      %v1010 = vsel %vm1007, %v994, %v996
      %v1011 = vsel %vm1007, %v996, %v998
      %v1012 = vsel %vm1007, %v998, %v1000
      %v1013 = vsel %vm1007, %v1000, %v1002
      %v1014 = vsel %vm1007, %v1002, %v1004
      %v1015 = vsel %vm1007, %v1004, %v1006
      %1033 = vrot.lane.b32.xlu0 %v681, 126
      %v1034 = vpop.permute.xlu0 %1033
      %1035 = vrot.lane.b32.xlu0 %v682, 126
      %v1036 = vpop.permute.xlu0 %1035
      %1037 = vrot.lane.b32.xlu0 %v683, 126
      %v1038 = vpop.permute.xlu0 %1037
      %1039 = vrot.lane.b32.xlu0 %v684, 126
      %v1040 = vpop.permute.xlu0 %1039
      %1041 = vrot.lane.b32.xlu0 %v685, 126
      %v1042 = vpop.permute.xlu0 %1041
      %1043 = vrot.lane.b32.xlu0 %v686, 126
      %v1044 = vpop.permute.xlu0 %1043
      %1045 = vrot.lane.b32.xlu0 %v687, 126
      %v1046 = vpop.permute.xlu0 %1045
      %1047 = vrot.lane.b32.xlu0 %v688, 126
      %v1048 = vpop.permute.xlu0 %1047
      %1049 = vrot.lane.b32.xlu0 %v689, 126
      %v1050 = vpop.permute.xlu0 %1049
      %vm1051 = vcmask 1031168
      %v1052 = vsel %vm1051, %v1034, %v1036
      %v1053 = vsel %vm1051, %v1036, %v1038
      %v1054 = vsel %vm1051, %v1038, %v1040
      %v1055 = vsel %vm1051, %v1040, %v1042
      %v1056 = vsel %vm1051, %v1042, %v1044
      %v1057 = vsel %vm1051, %v1044, %v1046
      %v1058 = vsel %vm1051, %v1046, %v1048
      %v1059 = vsel %vm1051, %v1048, %v1050
      %1077 = vrot.lane.b32.xlu0 %v739, 112
      %v1078 = vpop.permute.xlu0 %1077
      %1079 = vrot.lane.b32.xlu0 %v740, 112
      %v1080 = vpop.permute.xlu0 %1079
      %1081 = vrot.lane.b32.xlu0 %v741, 112
      %v1082 = vpop.permute.xlu0 %1081
      %1083 = vrot.lane.b32.xlu0 %v742, 112
      %v1084 = vpop.permute.xlu0 %1083
      %1085 = vrot.lane.b32.xlu0 %v743, 112
      %v1086 = vpop.permute.xlu0 %1085
      %1087 = vrot.lane.b32.xlu0 %v744, 112
      %v1088 = vpop.permute.xlu0 %1087
      %1089 = vrot.lane.b32.xlu0 %v745, 112
      %v1090 = vpop.permute.xlu0 %1089
      %1091 = vrot.lane.b32.xlu0 %v746, 112
      %v1092 = vpop.permute.xlu0 %1091
      %1093 = vrot.lane.b32.xlu0 %v747, 112
      %v1094 = vpop.permute.xlu0 %1093
      %vm1095 = vcmask 916480
      %v1096 = vsel %vm1095, %v1078, %v1080
      %v1097 = vsel %vm1095, %v1080, %v1082
      %v1098 = vsel %vm1095, %v1082, %v1084
      %v1099 = vsel %vm1095, %v1084, %v1086
      %v1100 = vsel %vm1095, %v1086, %v1088
      %v1101 = vsel %vm1095, %v1088, %v1090
      %v1102 = vsel %vm1095, %v1090, %v1092
      %v1103 = vsel %vm1095, %v1092, %v1094
      %1121 = vrot.lane.b32.xlu0 %v549, 111
      %v1122 = vpop.permute.xlu0 %1121
      %1123 = vrot.lane.b32.xlu0 %v550, 111
      %v1124 = vpop.permute.xlu0 %1123
      %1125 = vrot.lane.b32.xlu0 %v551, 111
      %v1126 = vpop.permute.xlu0 %1125
      %1127 = vrot.lane.b32.xlu0 %v552, 111
      %v1128 = vpop.permute.xlu0 %1127
      %1129 = vrot.lane.b32.xlu0 %v553, 111
      %v1130 = vpop.permute.xlu0 %1129
      %1131 = vrot.lane.b32.xlu0 %v554, 111
      %v1132 = vpop.permute.xlu0 %1131
      %1133 = vrot.lane.b32.xlu0 %v555, 111
      %v1134 = vpop.permute.xlu0 %1133
      %1135 = vrot.lane.b32.xlu0 %v556, 111
      %v1136 = vpop.permute.xlu0 %1135
      %1137 = vrot.lane.b32.xlu0 %v573, 111
      %v1138 = vpop.permute.xlu0 %1137
      %vm1139 = vcmask 908288
      %v1140 = vsel %vm1139, %v1122, %v1124
      %v1141 = vsel %vm1139, %v1124, %v1126
      %v1142 = vsel %vm1139, %v1126, %v1128
      %v1143 = vsel %vm1139, %v1128, %v1130
      %v1144 = vsel %vm1139, %v1130, %v1132
      %v1145 = vsel %vm1139, %v1132, %v1134
      %v1146 = vsel %vm1139, %v1134, %v1136
      %v1147 = vsel %vm1139, %v1136, %v1138
      %1165 = vrot.lane.b32.xlu0 %v797, 110
      %v1166 = vpop.permute.xlu0 %1165
      %1167 = vrot.lane.b32.xlu0 %v798, 110
      %v1168 = vpop.permute.xlu0 %1167
      %1169 = vrot.lane.b32.xlu0 %v799, 110
      %v1170 = vpop.permute.xlu0 %1169
      %1171 = vrot.lane.b32.xlu0 %v800, 110
      %v1172 = vpop.permute.xlu0 %1171
      %1173 = vrot.lane.b32.xlu0 %v801, 110
      %v1174 = vpop.permute.xlu0 %1173
      %1175 = vrot.lane.b32.xlu0 %v802, 110
      %v1176 = vpop.permute.xlu0 %1175
      %1177 = vrot.lane.b32.xlu0 %v803, 110
      %v1178 = vpop.permute.xlu0 %1177
      %1179 = vrot.lane.b32.xlu0 %v804, 110
      %v1180 = vpop.permute.xlu0 %1179
      %1181 = vrot.lane.b32.xlu0 %v805, 110
      %v1182 = vpop.permute.xlu0 %1181
      %vm1183 = vcmask 900096
      %v1184 = vsel %vm1183, %v1166, %v1168
      %v1185 = vsel %vm1183, %v1168, %v1170
      %v1186 = vsel %vm1183, %v1170, %v1172
      %v1187 = vsel %vm1183, %v1172, %v1174
      %v1188 = vsel %vm1183, %v1174, %v1176
      %v1189 = vsel %vm1183, %v1176, %v1178
      %v1190 = vsel %vm1183, %v1178, %v1180
      %v1191 = vsel %vm1183, %v1180, %v1182
      %1209 = vrot.lane.b32.xlu0 %v855, 96
      %v1210 = vpop.permute.xlu0 %1209
      %1211 = vrot.lane.b32.xlu0 %v856, 96
      %v1212 = vpop.permute.xlu0 %1211
      %1213 = vrot.lane.b32.xlu0 %v857, 96
      %v1214 = vpop.permute.xlu0 %1213
      %1215 = vrot.lane.b32.xlu0 %v858, 96
      %v1216 = vpop.permute.xlu0 %1215
      %1217 = vrot.lane.b32.xlu0 %v859, 96
      %v1218 = vpop.permute.xlu0 %1217
      %1219 = vrot.lane.b32.xlu0 %v860, 96
      %v1220 = vpop.permute.xlu0 %1219
      %1221 = vrot.lane.b32.xlu0 %v861, 96
      %v1222 = vpop.permute.xlu0 %1221
      %1223 = vrot.lane.b32.xlu0 %v862, 96
      %v1224 = vpop.permute.xlu0 %1223
      %1225 = vrot.lane.b32.xlu0 %v863, 96
      %v1226 = vpop.permute.xlu0 %1225
      %vm1227 = vcmask 785408
      %v1228 = vsel %vm1227, %v1210, %v1212
      %v1229 = vsel %vm1227, %v1212, %v1214
      %v1230 = vsel %vm1227, %v1214, %v1216
      %v1231 = vsel %vm1227, %v1216, %v1218
      %v1232 = vsel %vm1227, %v1218, %v1220
      %v1233 = vsel %vm1227, %v1220, %v1222
      %v1234 = vsel %vm1227, %v1222, %v1224
      %v1235 = vsel %vm1227, %v1224, %v1226
      %1253 = vrot.lane.b32.xlu0 %v913, 95
      %v1254 = vpop.permute.xlu0 %1253
      %1255 = vrot.lane.b32.xlu0 %v914, 95
      %v1256 = vpop.permute.xlu0 %1255
      %1257 = vrot.lane.b32.xlu0 %v915, 95
      %v1258 = vpop.permute.xlu0 %1257
      %1259 = vrot.lane.b32.xlu0 %v916, 95
      %v1260 = vpop.permute.xlu0 %1259
      %1261 = vrot.lane.b32.xlu0 %v917, 95
      %v1262 = vpop.permute.xlu0 %1261
      %1263 = vrot.lane.b32.xlu0 %v918, 95
      %v1264 = vpop.permute.xlu0 %1263
      %1265 = vrot.lane.b32.xlu0 %v919, 95
      %v1266 = vpop.permute.xlu0 %1265
      %1267 = vrot.lane.b32.xlu0 %v920, 95
      %v1268 = vpop.permute.xlu0 %1267
      %1269 = vrot.lane.b32.xlu0 %v921, 95
      %v1270 = vpop.permute.xlu0 %1269
      %vm1271 = vcmask 777216
      %v1272 = vsel %vm1271, %v1254, %v1256
      %v1273 = vsel %vm1271, %v1256, %v1258
      %v1274 = vsel %vm1271, %v1258, %v1260
      %v1275 = vsel %vm1271, %v1260, %v1262
      %v1276 = vsel %vm1271, %v1262, %v1264
      %v1277 = vsel %vm1271, %v1264, %v1266
      %v1278 = vsel %vm1271, %v1266, %v1268
      %v1279 = vsel %vm1271, %v1268, %v1270
      %1297 = vrot.lane.b32.xlu0 %v971, 94
      %v1298 = vpop.permute.xlu0 %1297
      %1299 = vrot.lane.b32.xlu0 %v972, 94
      %v1300 = vpop.permute.xlu0 %1299
      %1301 = vrot.lane.b32.xlu0 %v973, 94
      %v1302 = vpop.permute.xlu0 %1301
      %1303 = vrot.lane.b32.xlu0 %v974, 94
      %v1304 = vpop.permute.xlu0 %1303
      %1305 = vrot.lane.b32.xlu0 %v975, 94
      %v1306 = vpop.permute.xlu0 %1305
      %1307 = vrot.lane.b32.xlu0 %v976, 94
      %v1308 = vpop.permute.xlu0 %1307
      %1309 = vrot.lane.b32.xlu0 %v977, 94
      %v1310 = vpop.permute.xlu0 %1309
      %1311 = vrot.lane.b32.xlu0 %v978, 94
      %v1312 = vpop.permute.xlu0 %1311
      %1313 = vrot.lane.b32.xlu0 %v979, 94
      %v1314 = vpop.permute.xlu0 %1313
      %vm1315 = vcmask 769024
      %v1316 = vsel %vm1315, %v1298, %v1300
      %v1317 = vsel %vm1315, %v1300, %v1302
      %v1318 = vsel %vm1315, %v1302, %v1304
      %v1319 = vsel %vm1315, %v1304, %v1306
      %v1320 = vsel %vm1315, %v1306, %v1308
      %v1321 = vsel %vm1315, %v1308, %v1310
      %v1322 = vsel %vm1315, %v1310, %v1312
      %v1323 = vsel %vm1315, %v1312, %v1314
      %v1332 = vld [vmem:[%s1] sm:$0xff]
      %v1333 = vld [vmem:[%s1 + $0x8] sm:$0xff]
      %v1334 = vld [vmem:[%s2] sm:$0xff]
      %v1335 = vld [vmem:[%s2 + $0x8] sm:$0xff]
      %1337 = vset.pattern.permute.xlu0 0
      %1338 = vperm.xlu0 %1337, %v1334
      %v1339 = vpop.permute.xlu0 %1338
      %1342 = vset.pattern.permute.xlu0 0
      %1343 = vperm.xlu0 %1342, %v1335
      %v1344 = vpop.permute.xlu0 %1343
      %vm1346 = vcmask 588800
      %v1348 = vsel %vm1346, %v1332, 0
      %v1351 = vsel %vm1346, %v1333, 0
      %1353 = vmatpush.msra.mxu0 0.0
      %1354 = vmatpush.msra.mxu0 0.0
      %1355 = vmatpush.msra.mxu0 0.0
      %1356 = vmatpush.msra.mxu0 0.0
      %1357 = vmatpush.msra.mxu0 0.0
      %1358 = vmatpush.msra.mxu0 0.0
      %1359 = vmatpush.msra.mxu0 0.0
      %1360 = vmatpush.msra.mxu0 %v1316
      %1361 = vmatpush.msra.mxu0 %v1272
      %1362 = vmatpush.msra.mxu0 %v1228
      %1363 = vmatpush.msra.mxu0 %v1184
      %1364 = vmatpush.msra.mxu0 %v1140
      %1365 = vmatpush.msra.mxu0 %v1096
      %1366 = vmatpush.msra.mxu0 %v1052
      %1367 = vmatpush.msra.mxu0 %v1008
      %1368 = vmatpush.msra.mxu0 %v565
      %1369 = vmatmul.f32.gmra.mxu0 %v1348
      %v1370 = vpop.f32.mrf.mxu0
      %v1371 = vadd.f32 %v1339, %v1370
      %1372 = vmatmul.f32.gmra.mxu0 %v1351
      %v1373 = vpop.f32.mrf.mxu0
      %v1374 = vadd.f32 %v1344, %v1373
      %1375 = vdwg.mxu0
      %1376 = vmatpush.msra.mxu0 0.0
      %1377 = vmatpush.msra.mxu0 0.0
      %1378 = vmatpush.msra.mxu0 0.0
      %1379 = vmatpush.msra.mxu0 0.0
      %1380 = vmatpush.msra.mxu0 0.0
      %1381 = vmatpush.msra.mxu0 0.0
      %1382 = vmatpush.msra.mxu0 0.0
      %1383 = vmatpush.msra.mxu0 %v1317
      %1384 = vmatpush.msra.mxu0 %v1273
      %1385 = vmatpush.msra.mxu0 %v1229
      %1386 = vmatpush.msra.mxu0 %v1185
      %1387 = vmatpush.msra.mxu0 %v1141
      %1388 = vmatpush.msra.mxu0 %v1097
      %1389 = vmatpush.msra.mxu0 %v1053
      %1390 = vmatpush.msra.mxu0 %v1009
      %1391 = vmatpush.msra.mxu0 %v566
      %1392 = vmatmul.f32.gmra.mxu0 %v1348
      %v1393 = vpop.f32.mrf.mxu0
      %v1394 = vadd.f32 %v1339, %v1393
      %1395 = vmatmul.f32.gmra.mxu0 %v1351
      %v1396 = vpop.f32.mrf.mxu0
      %v1397 = vadd.f32 %v1344, %v1396
      %1398 = vdwg.mxu0
      %1399 = vmatpush.msra.mxu0 0.0
      %1400 = vmatpush.msra.mxu0 0.0
      %1401 = vmatpush.msra.mxu0 0.0
      %1402 = vmatpush.msra.mxu0 0.0
      %1403 = vmatpush.msra.mxu0 0.0
      %1404 = vmatpush.msra.mxu0 0.0
      %1405 = vmatpush.msra.mxu0 0.0
      %1406 = vmatpush.msra.mxu0 %v1318
      %1407 = vmatpush.msra.mxu0 %v1274
      %1408 = vmatpush.msra.mxu0 %v1230
      %1409 = vmatpush.msra.mxu0 %v1186
      %1410 = vmatpush.msra.mxu0 %v1142
      %1411 = vmatpush.msra.mxu0 %v1098
      %1412 = vmatpush.msra.mxu0 %v1054
      %1413 = vmatpush.msra.mxu0 %v1010
      %1414 = vmatpush.msra.mxu0 %v567
      %1415 = vmatmul.f32.gmra.mxu0 %v1348
      %v1416 = vpop.f32.mrf.mxu0
      %v1417 = vadd.f32 %v1339, %v1416
      %1418 = vmatmul.f32.gmra.mxu0 %v1351
      %v1419 = vpop.f32.mrf.mxu0
      %v1420 = vadd.f32 %v1344, %v1419
      %1421 = vdwg.mxu0
      %1422 = vmatpush.msra.mxu0 0.0
      %1423 = vmatpush.msra.mxu0 0.0
      %1424 = vmatpush.msra.mxu0 0.0
      %1425 = vmatpush.msra.mxu0 0.0
      %1426 = vmatpush.msra.mxu0 0.0
      %1427 = vmatpush.msra.mxu0 0.0
      %1428 = vmatpush.msra.mxu0 0.0
      %1429 = vmatpush.msra.mxu0 %v1319
      %1430 = vmatpush.msra.mxu0 %v1275
      %1431 = vmatpush.msra.mxu0 %v1231
      %1432 = vmatpush.msra.mxu0 %v1187
      %1433 = vmatpush.msra.mxu0 %v1143
      %1434 = vmatpush.msra.mxu0 %v1099
      %1435 = vmatpush.msra.mxu0 %v1055
      %1436 = vmatpush.msra.mxu0 %v1011
      %1437 = vmatpush.msra.mxu0 %v568
      %1438 = vmatmul.f32.gmra.mxu0 %v1348
      %v1439 = vpop.f32.mrf.mxu0
      %v1440 = vadd.f32 %v1339, %v1439
      %1441 = vmatmul.f32.gmra.mxu0 %v1351
      %v1442 = vpop.f32.mrf.mxu0
      %v1443 = vadd.f32 %v1344, %v1442
      %1444 = vdwg.mxu0
      %1445 = vmatpush.msra.mxu0 0.0
      %1446 = vmatpush.msra.mxu0 0.0
      %1447 = vmatpush.msra.mxu0 0.0
      %1448 = vmatpush.msra.mxu0 0.0
      %1449 = vmatpush.msra.mxu0 0.0
      %1450 = vmatpush.msra.mxu0 0.0
      %1451 = vmatpush.msra.mxu0 0.0
      %1452 = vmatpush.msra.mxu0 %v1320
      %1453 = vmatpush.msra.mxu0 %v1276
      %1454 = vmatpush.msra.mxu0 %v1232
      %1455 = vmatpush.msra.mxu0 %v1188
      %1456 = vmatpush.msra.mxu0 %v1144
      %1457 = vmatpush.msra.mxu0 %v1100
      %1458 = vmatpush.msra.mxu0 %v1056
      %1459 = vmatpush.msra.mxu0 %v1012
      %1460 = vmatpush.msra.mxu0 %v569
      %1461 = vmatmul.f32.gmra.mxu0 %v1348
      %v1462 = vpop.f32.mrf.mxu0
      %v1463 = vadd.f32 %v1339, %v1462
      %1464 = vmatmul.f32.gmra.mxu0 %v1351
      %v1465 = vpop.f32.mrf.mxu0
      %v1466 = vadd.f32 %v1344, %v1465
      %1467 = vdwg.mxu0
      %1468 = vmatpush.msra.mxu0 0.0
      %1469 = vmatpush.msra.mxu0 0.0
      %1470 = vmatpush.msra.mxu0 0.0
      %1471 = vmatpush.msra.mxu0 0.0
      %1472 = vmatpush.msra.mxu0 0.0
      %1473 = vmatpush.msra.mxu0 0.0
      %1474 = vmatpush.msra.mxu0 0.0
      %1475 = vmatpush.msra.mxu0 %v1321
      %1476 = vmatpush.msra.mxu0 %v1277
      %1477 = vmatpush.msra.mxu0 %v1233
      %1478 = vmatpush.msra.mxu0 %v1189
      %1479 = vmatpush.msra.mxu0 %v1145
      %1480 = vmatpush.msra.mxu0 %v1101
      %1481 = vmatpush.msra.mxu0 %v1057
      %1482 = vmatpush.msra.mxu0 %v1013
      %1483 = vmatpush.msra.mxu0 %v570
      %1484 = vmatmul.f32.gmra.mxu0 %v1348
      %v1485 = vpop.f32.mrf.mxu0
      %v1486 = vadd.f32 %v1339, %v1485
      %1487 = vmatmul.f32.gmra.mxu0 %v1351
      %v1488 = vpop.f32.mrf.mxu0
      %v1489 = vadd.f32 %v1344, %v1488
      %1490 = vdwg.mxu0
      %1491 = vmatpush.msra.mxu0 0.0
      %1492 = vmatpush.msra.mxu0 0.0
      %1493 = vmatpush.msra.mxu0 0.0
      %1494 = vmatpush.msra.mxu0 0.0
      %1495 = vmatpush.msra.mxu0 0.0
      %1496 = vmatpush.msra.mxu0 0.0
      %1497 = vmatpush.msra.mxu0 0.0
      %1498 = vmatpush.msra.mxu0 %v1322
      %1499 = vmatpush.msra.mxu0 %v1278
      %1500 = vmatpush.msra.mxu0 %v1234
      %1501 = vmatpush.msra.mxu0 %v1190
      %1502 = vmatpush.msra.mxu0 %v1146
      %1503 = vmatpush.msra.mxu0 %v1102
      %1504 = vmatpush.msra.mxu0 %v1058
      %1505 = vmatpush.msra.mxu0 %v1014
      %1506 = vmatpush.msra.mxu0 %v571
      %1507 = vmatmul.f32.gmra.mxu0 %v1348
      %v1508 = vpop.f32.mrf.mxu0
      %v1509 = vadd.f32 %v1339, %v1508
      %1510 = vmatmul.f32.gmra.mxu0 %v1351
      %v1511 = vpop.f32.mrf.mxu0
      %v1512 = vadd.f32 %v1344, %v1511
      %1513 = vdwg.mxu0
      %1514 = vmatpush.msra.mxu0 0.0
      %1515 = vmatpush.msra.mxu0 0.0
      %1516 = vmatpush.msra.mxu0 0.0
      %1517 = vmatpush.msra.mxu0 0.0
      %1518 = vmatpush.msra.mxu0 0.0
      %1519 = vmatpush.msra.mxu0 0.0
      %1520 = vmatpush.msra.mxu0 0.0
      %1521 = vmatpush.msra.mxu0 %v1323
      %1522 = vmatpush.msra.mxu0 %v1279
      %1523 = vmatpush.msra.mxu0 %v1235
      %1524 = vmatpush.msra.mxu0 %v1191
      %1525 = vmatpush.msra.mxu0 %v1147
      %1526 = vmatpush.msra.mxu0 %v1103
      %1527 = vmatpush.msra.mxu0 %v1059
      %1528 = vmatpush.msra.mxu0 %v1015
      %1529 = vmatpush.msra.mxu0 %v572
      %1530 = vmatmul.f32.gmra.mxu0 %v1348
      %v1531 = vpop.f32.mrf.mxu0
      %v1532 = vadd.f32 %v1339, %v1531
      %1533 = vmatmul.f32.gmra.mxu0 %v1351
      %v1534 = vpop.f32.mrf.mxu0
      %v1535 = vadd.f32 %v1344, %v1534
      %1536 = vdwg.mxu0
      %v1537 = vmax.f32 %v1371, 0.0
      %v1538 = vmax.f32 %v1394, 0.0
      %v1539 = vmax.f32 %v1417, 0.0
      %v1540 = vmax.f32 %v1440, 0.0
      %v1541 = vmax.f32 %v1463, 0.0
      %v1542 = vmax.f32 %v1486, 0.0
      %v1543 = vmax.f32 %v1509, 0.0
      %v1544 = vmax.f32 %v1532, 0.0
      %v1545 = vmax.f32 %v1374, 0.0
      %v1546 = vmax.f32 %v1397, 0.0
      %v1547 = vmax.f32 %v1420, 0.0
      %v1548 = vmax.f32 %v1443, 0.0
      %v1549 = vmax.f32 %v1466, 0.0
      %v1550 = vmax.f32 %v1489, 0.0
      %v1551 = vmax.f32 %v1512, 0.0
      %v1552 = vmax.f32 %v1535, 0.0
      %1569 = vrot.lane.b32.xlu0 %v1537, 17
      %v1570 = vpop.permute.xlu0 %1569
      %1571 = vrot.lane.b32.xlu0 %v1538, 17
      %v1572 = vpop.permute.xlu0 %1571
      %1573 = vrot.lane.b32.xlu0 %v1539, 17
      %v1574 = vpop.permute.xlu0 %1573
      %1575 = vrot.lane.b32.xlu0 %v1540, 17
      %v1576 = vpop.permute.xlu0 %1575
      %1577 = vrot.lane.b32.xlu0 %v1541, 17
      %v1578 = vpop.permute.xlu0 %1577
      %1579 = vrot.lane.b32.xlu0 %v1542, 17
      %v1580 = vpop.permute.xlu0 %1579
      %1581 = vrot.lane.b32.xlu0 %v1543, 17
      %v1582 = vpop.permute.xlu0 %1581
      %1583 = vrot.lane.b32.xlu0 %v1544, 17
      %v1584 = vpop.permute.xlu0 %1583
      %1585 = vrot.lane.b32.xlu0 %v1545, 17
      %v1586 = vpop.permute.xlu0 %1585
      %1587 = vrot.lane.b32.xlu0 %v1546, 17
      %v1588 = vpop.permute.xlu0 %1587
      %1589 = vrot.lane.b32.xlu0 %v1547, 17
      %v1590 = vpop.permute.xlu0 %1589
      %1591 = vrot.lane.b32.xlu0 %v1548, 17
      %v1592 = vpop.permute.xlu0 %1591
      %1593 = vrot.lane.b32.xlu0 %v1549, 17
      %v1594 = vpop.permute.xlu0 %1593
      %1595 = vrot.lane.b32.xlu0 %v1550, 17
      %v1596 = vpop.permute.xlu0 %1595
      %1597 = vrot.lane.b32.xlu0 %v1551, 17
      %v1598 = vpop.permute.xlu0 %1597
      %1599 = vrot.lane.b32.xlu0 %v1552, 17
      %v1600 = vpop.permute.xlu0 %1599
      %v1601 = vsel %vm449, %v1570, %v1572
      %v1602 = vsel %vm449, %v1572, %v1574
      %v1603 = vsel %vm449, %v1574, %v1576
      %v1604 = vsel %vm449, %v1576, %v1578
      %v1605 = vsel %vm449, %v1578, %v1580
      %v1606 = vsel %vm449, %v1580, %v1582
      %v1607 = vsel %vm449, %v1582, %v1584
      %v1608 = vsel %vm449, %v1586, %v1588
      %v1609 = vsel %vm449, %v1588, %v1590
      %v1610 = vsel %vm449, %v1590, %v1592
      %v1611 = vsel %vm449, %v1592, %v1594
      %v1612 = vsel %vm449, %v1594, %v1596
      %v1613 = vsel %vm449, %v1596, %v1598
      %v1614 = vsel %vm449, %v1598, %v1600
      %1633 = vst.msk [vmem:[#allocation2] sm:$0xff] %vm497, %v1570
      %1634 = vst [vmem:[#allocation2 + $0x8] sm:$0xff] %v1601
      %1635 = vst [vmem:[#allocation2 + $0x10] sm:$0xff] %v1602
      %1636 = vst [vmem:[#allocation2 + $0x18] sm:$0xff] %v1603
      %1637 = vst [vmem:[#allocation2 + $0x20] sm:$0xff] %v1604
      %1638 = vst [vmem:[#allocation2 + $0x28] sm:$0xff] %v1605
      %1639 = vst [vmem:[#allocation2 + $0x30] sm:$0xff] %v1606
      %1640 = vst [vmem:[#allocation2 + $0x38] sm:$0xff] %v1607
      %1641 = vst.msk [vmem:[#allocation2 + $0x40] sm:$0xff] %vm449, %v1584
      %1642 = vst.msk [vmem:[#allocation2 + $0x48] sm:$0xff] %vm497, %v1586
      %1643 = vst [vmem:[#allocation2 + $0x50] sm:$0xff] %v1608
      %1644 = vst [vmem:[#allocation2 + $0x58] sm:$0xff] %v1609
      %1645 = vst [vmem:[#allocation2 + $0x60] sm:$0xff] %v1610
      %1646 = vst [vmem:[#allocation2 + $0x68] sm:$0xff] %v1611
      %1647 = vst [vmem:[#allocation2 + $0x70] sm:$0xff] %v1612
      %1648 = vst [vmem:[#allocation2 + $0x78] sm:$0xff] %v1613
      %1649 = vst [vmem:[#allocation2 + $0x80] sm:$0xff] %v1614
      %1650 = vst.msk [vmem:[#allocation2 + $0x88] sm:$0xff] %vm449, %v1600
      %v1651 = vld [vmem:[#allocation2] sm:$0xff]
      %v1652 = vld [vmem:[#allocation2 + $0x8] sm:$0xff]
      %v1653 = vld [vmem:[#allocation2 + $0x10] sm:$0xff]
      %v1654 = vld [vmem:[#allocation2 + $0x18] sm:$0xff]
      %v1655 = vld [vmem:[#allocation2 + $0x20] sm:$0xff]
      %v1656 = vld [vmem:[#allocation2 + $0x28] sm:$0xff]
      %v1657 = vld [vmem:[#allocation2 + $0x30] sm:$0xff]
      %v1658 = vld [vmem:[#allocation2 + $0x38] sm:$0xff]
      %v1659 = vld [vmem:[#allocation2 + $0x48] sm:$0xff]
      %v1660 = vld [vmem:[#allocation2 + $0x50] sm:$0xff]
      %v1661 = vld [vmem:[#allocation2 + $0x58] sm:$0xff]
      %v1662 = vld [vmem:[#allocation2 + $0x60] sm:$0xff]
      %v1663 = vld [vmem:[#allocation2 + $0x68] sm:$0xff]
      %v1664 = vld [vmem:[#allocation2 + $0x70] sm:$0xff]
      %v1665 = vld [vmem:[#allocation2 + $0x78] sm:$0xff]
      %v1666 = vld [vmem:[#allocation2 + $0x80] sm:$0xff]
      %v1667 = vmul.f32 %v1651, %v557
      %v1668 = vmul.f32 %v1652, %v558
      %v1669 = vmul.f32 %v1653, %v559
      %v1670 = vmul.f32 %v1654, %v560
      %v1671 = vmul.f32 %v1655, %v561
      %v1672 = vmul.f32 %v1656, %v562
      %v1673 = vmul.f32 %v1657, %v563
      %v1674 = vmul.f32 %v1658, %v564
      %v1675 = vmul.f32 %v1659, %v557
      %v1676 = vmul.f32 %v1660, %v558
      %v1677 = vmul.f32 %v1661, %v559
      %v1678 = vmul.f32 %v1662, %v560
      %v1679 = vmul.f32 %v1663, %v561
      %v1680 = vmul.f32 %v1664, %v562
      %v1681 = vmul.f32 %v1665, %v563
      %v1682 = vmul.f32 %v1666, %v564
      %v1683 = vld [vmem:[#allocation2 + $0x40] sm:$0xff]
      %v1684 = vld [vmem:[#allocation2 + $0x88] sm:$0xff]
      %v1685 = vmul.f32 %v1651, %v591
      %v1686 = vmul.f32 %v1652, %v607
      %v1687 = vmul.f32 %v1653, %v608
      %v1688 = vmul.f32 %v1654, %v609
      %v1689 = vmul.f32 %v1655, %v610
      %v1690 = vmul.f32 %v1656, %v611
      %v1691 = vmul.f32 %v1657, %v612
      %v1692 = vmul.f32 %v1658, %v613
      %v1693 = vmul.f32 %v1683, %v605
      %v1694 = vmul.f32 %v1659, %v591
      %v1695 = vmul.f32 %v1660, %v607
      %v1696 = vmul.f32 %v1661, %v608
      %v1697 = vmul.f32 %v1662, %v609
      %v1698 = vmul.f32 %v1663, %v610
      %v1699 = vmul.f32 %v1664, %v611
      %v1700 = vmul.f32 %v1665, %v612
      %v1701 = vmul.f32 %v1666, %v613
      %v1702 = vmul.f32 %v1684, %v605
      %v1703 = vmul.f32 %v1651, %v649
      %v1704 = vmul.f32 %v1652, %v665
      %v1705 = vmul.f32 %v1653, %v666
      %v1706 = vmul.f32 %v1654, %v667
      %v1707 = vmul.f32 %v1655, %v668
      %v1708 = vmul.f32 %v1656, %v669
      %v1709 = vmul.f32 %v1657, %v670
      %v1710 = vmul.f32 %v1658, %v671
      %v1711 = vmul.f32 %v1683, %v663
      %v1712 = vmul.f32 %v1659, %v649
      %v1713 = vmul.f32 %v1660, %v665
      %v1714 = vmul.f32 %v1661, %v666
      %v1715 = vmul.f32 %v1662, %v667
      %v1716 = vmul.f32 %v1663, %v668
      %v1717 = vmul.f32 %v1664, %v669
      %v1718 = vmul.f32 %v1665, %v670
      %v1719 = vmul.f32 %v1666, %v671
      %v1720 = vmul.f32 %v1684, %v663
      %v1721 = vmul.f32 %v1651, %v707
      %v1722 = vmul.f32 %v1652, %v723
      %v1723 = vmul.f32 %v1653, %v724
      %v1724 = vmul.f32 %v1654, %v725
      %v1725 = vmul.f32 %v1655, %v726
      %v1726 = vmul.f32 %v1656, %v727
      %v1727 = vmul.f32 %v1657, %v728
      %v1728 = vmul.f32 %v1658, %v729
      %v1729 = vmul.f32 %v1683, %v721
      %v1730 = vmul.f32 %v1659, %v707
      %v1731 = vmul.f32 %v1660, %v723
      %v1732 = vmul.f32 %v1661, %v724
      %v1733 = vmul.f32 %v1662, %v725
      %v1734 = vmul.f32 %v1663, %v726
      %v1735 = vmul.f32 %v1664, %v727
      %v1736 = vmul.f32 %v1665, %v728
      %v1737 = vmul.f32 %v1666, %v729
      %v1738 = vmul.f32 %v1684, %v721
      %v1739 = vmul.f32 %v1651, %v765
      %v1740 = vmul.f32 %v1652, %v781
      %v1741 = vmul.f32 %v1653, %v782
      %v1742 = vmul.f32 %v1654, %v783
      %v1743 = vmul.f32 %v1655, %v784
      %v1744 = vmul.f32 %v1656, %v785
      %v1745 = vmul.f32 %v1657, %v786
      %v1746 = vmul.f32 %v1658, %v787
      %v1747 = vmul.f32 %v1683, %v779
      %v1748 = vmul.f32 %v1659, %v765
      %v1749 = vmul.f32 %v1660, %v781
      %v1750 = vmul.f32 %v1661, %v782
      %v1751 = vmul.f32 %v1662, %v783
      %v1752 = vmul.f32 %v1663, %v784
      %v1753 = vmul.f32 %v1664, %v785
      %v1754 = vmul.f32 %v1665, %v786
      %v1755 = vmul.f32 %v1666, %v787
      %v1756 = vmul.f32 %v1684, %v779
      %v1757 = vmul.f32 %v1651, %v823
      %v1758 = vmul.f32 %v1652, %v839
      %v1759 = vmul.f32 %v1653, %v840
      %v1760 = vmul.f32 %v1654, %v841
      %v1761 = vmul.f32 %v1655, %v842
      %v1762 = vmul.f32 %v1656, %v843
      %v1763 = vmul.f32 %v1657, %v844
      %v1764 = vmul.f32 %v1658, %v845
      %v1765 = vmul.f32 %v1683, %v837
      %v1766 = vmul.f32 %v1659, %v823
      %v1767 = vmul.f32 %v1660, %v839
      %v1768 = vmul.f32 %v1661, %v840
      %v1769 = vmul.f32 %v1662, %v841
      %v1770 = vmul.f32 %v1663, %v842
      %v1771 = vmul.f32 %v1664, %v843
      %v1772 = vmul.f32 %v1665, %v844
      %v1773 = vmul.f32 %v1666, %v845
      %v1774 = vmul.f32 %v1684, %v837
      %v1775 = vmul.f32 %v1651, %v881
      %v1776 = vmul.f32 %v1652, %v897
      %v1777 = vmul.f32 %v1653, %v898
      %v1778 = vmul.f32 %v1654, %v899
      %v1779 = vmul.f32 %v1655, %v900
      %v1780 = vmul.f32 %v1656, %v901
      %v1781 = vmul.f32 %v1657, %v902
      %v1782 = vmul.f32 %v1658, %v903
      %v1783 = vmul.f32 %v1683, %v895
      %v1784 = vmul.f32 %v1659, %v881
      %v1785 = vmul.f32 %v1660, %v897
      %v1786 = vmul.f32 %v1661, %v898
      %v1787 = vmul.f32 %v1662, %v899
      %v1788 = vmul.f32 %v1663, %v900
      %v1789 = vmul.f32 %v1664, %v901
      %v1790 = vmul.f32 %v1665, %v902
      %v1791 = vmul.f32 %v1666, %v903
      %v1792 = vmul.f32 %v1684, %v895
      %v1793 = vmul.f32 %v1651, %v939
      %v1794 = vmul.f32 %v1652, %v955
      %v1795 = vmul.f32 %v1653, %v956
      %v1796 = vmul.f32 %v1654, %v957
      %v1797 = vmul.f32 %v1655, %v958
      %v1798 = vmul.f32 %v1656, %v959
      %v1799 = vmul.f32 %v1657, %v960
      %v1800 = vmul.f32 %v1658, %v961
      %v1801 = vmul.f32 %v1683, %v953
      %v1802 = vmul.f32 %v1659, %v939
      %v1803 = vmul.f32 %v1660, %v955
      %v1804 = vmul.f32 %v1661, %v956
      %v1805 = vmul.f32 %v1662, %v957
      %v1806 = vmul.f32 %v1663, %v958
      %v1807 = vmul.f32 %v1664, %v959
      %v1808 = vmul.f32 %v1665, %v960
      %v1809 = vmul.f32 %v1666, %v961
      %v1810 = vmul.f32 %v1684, %v953
      %1829 = vrot.lane.b32.xlu0 %v1685, 127
      %v1830 = vpop.permute.xlu0 %1829
      %1831 = vrot.lane.b32.xlu0 %v1686, 127
      %v1832 = vpop.permute.xlu0 %1831
      %1833 = vrot.lane.b32.xlu0 %v1687, 127
      %v1834 = vpop.permute.xlu0 %1833
      %1835 = vrot.lane.b32.xlu0 %v1688, 127
      %v1836 = vpop.permute.xlu0 %1835
      %1837 = vrot.lane.b32.xlu0 %v1689, 127
      %v1838 = vpop.permute.xlu0 %1837
      %1839 = vrot.lane.b32.xlu0 %v1690, 127
      %v1840 = vpop.permute.xlu0 %1839
      %1841 = vrot.lane.b32.xlu0 %v1691, 127
      %v1842 = vpop.permute.xlu0 %1841
      %1843 = vrot.lane.b32.xlu0 %v1692, 127
      %v1844 = vpop.permute.xlu0 %1843
      %1845 = vrot.lane.b32.xlu0 %v1693, 127
      %v1846 = vpop.permute.xlu0 %1845
      %1847 = vrot.lane.b32.xlu0 %v1694, 127
      %v1848 = vpop.permute.xlu0 %1847
      %1849 = vrot.lane.b32.xlu0 %v1695, 127
      %v1850 = vpop.permute.xlu0 %1849
      %1851 = vrot.lane.b32.xlu0 %v1696, 127
      %v1852 = vpop.permute.xlu0 %1851
      %1853 = vrot.lane.b32.xlu0 %v1697, 127
      %v1854 = vpop.permute.xlu0 %1853
      %1855 = vrot.lane.b32.xlu0 %v1698, 127
      %v1856 = vpop.permute.xlu0 %1855
      %1857 = vrot.lane.b32.xlu0 %v1699, 127
      %v1858 = vpop.permute.xlu0 %1857
      %1859 = vrot.lane.b32.xlu0 %v1700, 127
      %v1860 = vpop.permute.xlu0 %1859
      %1861 = vrot.lane.b32.xlu0 %v1701, 127
      %v1862 = vpop.permute.xlu0 %1861
      %1863 = vrot.lane.b32.xlu0 %v1702, 127
      %v1864 = vpop.permute.xlu0 %1863
      %v1865 = vsel %vm1007, %v1830, %v1832
      %v1866 = vsel %vm1007, %v1832, %v1834
      %v1867 = vsel %vm1007, %v1834, %v1836
      %v1868 = vsel %vm1007, %v1836, %v1838
      %v1869 = vsel %vm1007, %v1838, %v1840
      %v1870 = vsel %vm1007, %v1840, %v1842
      %v1871 = vsel %vm1007, %v1842, %v1844
      %v1872 = vsel %vm1007, %v1844, %v1846
      %v1873 = vsel %vm1007, %v1848, %v1850
      %v1874 = vsel %vm1007, %v1850, %v1852
      %v1875 = vsel %vm1007, %v1852, %v1854
      %v1876 = vsel %vm1007, %v1854, %v1856
      %v1877 = vsel %vm1007, %v1856, %v1858
      %v1878 = vsel %vm1007, %v1858, %v1860
      %v1879 = vsel %vm1007, %v1860, %v1862
      %v1880 = vsel %vm1007, %v1862, %v1864
      %1915 = vrot.lane.b32.xlu0 %v1703, 126
      %v1916 = vpop.permute.xlu0 %1915
      %1917 = vrot.lane.b32.xlu0 %v1704, 126
      %v1918 = vpop.permute.xlu0 %1917
      %1919 = vrot.lane.b32.xlu0 %v1705, 126
      %v1920 = vpop.permute.xlu0 %1919
      %1921 = vrot.lane.b32.xlu0 %v1706, 126
      %v1922 = vpop.permute.xlu0 %1921
      %1923 = vrot.lane.b32.xlu0 %v1707, 126
      %v1924 = vpop.permute.xlu0 %1923
      %1925 = vrot.lane.b32.xlu0 %v1708, 126
      %v1926 = vpop.permute.xlu0 %1925
      %1927 = vrot.lane.b32.xlu0 %v1709, 126
      %v1928 = vpop.permute.xlu0 %1927
      %1929 = vrot.lane.b32.xlu0 %v1710, 126
      %v1930 = vpop.permute.xlu0 %1929
      %1931 = vrot.lane.b32.xlu0 %v1711, 126
      %v1932 = vpop.permute.xlu0 %1931
      %1933 = vrot.lane.b32.xlu0 %v1712, 126
      %v1934 = vpop.permute.xlu0 %1933
      %1935 = vrot.lane.b32.xlu0 %v1713, 126
      %v1936 = vpop.permute.xlu0 %1935
      %1937 = vrot.lane.b32.xlu0 %v1714, 126
      %v1938 = vpop.permute.xlu0 %1937
      %1939 = vrot.lane.b32.xlu0 %v1715, 126
      %v1940 = vpop.permute.xlu0 %1939
      %1941 = vrot.lane.b32.xlu0 %v1716, 126
      %v1942 = vpop.permute.xlu0 %1941
      %1943 = vrot.lane.b32.xlu0 %v1717, 126
      %v1944 = vpop.permute.xlu0 %1943
      %1945 = vrot.lane.b32.xlu0 %v1718, 126
      %v1946 = vpop.permute.xlu0 %1945
      %1947 = vrot.lane.b32.xlu0 %v1719, 126
      %v1948 = vpop.permute.xlu0 %1947
      %1949 = vrot.lane.b32.xlu0 %v1720, 126
      %v1950 = vpop.permute.xlu0 %1949
      %v1951 = vsel %vm1051, %v1916, %v1918
      %v1952 = vsel %vm1051, %v1918, %v1920
      %v1953 = vsel %vm1051, %v1920, %v1922
      %v1954 = vsel %vm1051, %v1922, %v1924
      %v1955 = vsel %vm1051, %v1924, %v1926
      %v1956 = vsel %vm1051, %v1926, %v1928
      %v1957 = vsel %vm1051, %v1928, %v1930
      %v1958 = vsel %vm1051, %v1930, %v1932
      %v1959 = vsel %vm1051, %v1934, %v1936
      %v1960 = vsel %vm1051, %v1936, %v1938
      %v1961 = vsel %vm1051, %v1938, %v1940
      %v1962 = vsel %vm1051, %v1940, %v1942
      %v1963 = vsel %vm1051, %v1942, %v1944
      %v1964 = vsel %vm1051, %v1944, %v1946
      %v1965 = vsel %vm1051, %v1946, %v1948
      %v1966 = vsel %vm1051, %v1948, %v1950
      %2001 = vrot.lane.b32.xlu0 %v1721, 112
      %v2002 = vpop.permute.xlu0 %2001
      %2003 = vrot.lane.b32.xlu0 %v1722, 112
      %v2004 = vpop.permute.xlu0 %2003
      %2005 = vrot.lane.b32.xlu0 %v1723, 112
      %v2006 = vpop.permute.xlu0 %2005
      %2007 = vrot.lane.b32.xlu0 %v1724, 112
      %v2008 = vpop.permute.xlu0 %2007
      %2009 = vrot.lane.b32.xlu0 %v1725, 112
      %v2010 = vpop.permute.xlu0 %2009
      %2011 = vrot.lane.b32.xlu0 %v1726, 112
      %v2012 = vpop.permute.xlu0 %2011
      %2013 = vrot.lane.b32.xlu0 %v1727, 112
      %v2014 = vpop.permute.xlu0 %2013
      %2015 = vrot.lane.b32.xlu0 %v1728, 112
      %v2016 = vpop.permute.xlu0 %2015
      %2017 = vrot.lane.b32.xlu0 %v1729, 112
      %v2018 = vpop.permute.xlu0 %2017
      %2019 = vrot.lane.b32.xlu0 %v1730, 112
      %v2020 = vpop.permute.xlu0 %2019
      %2021 = vrot.lane.b32.xlu0 %v1731, 112
      %v2022 = vpop.permute.xlu0 %2021
      %2023 = vrot.lane.b32.xlu0 %v1732, 112
      %v2024 = vpop.permute.xlu0 %2023
      %2025 = vrot.lane.b32.xlu0 %v1733, 112
      %v2026 = vpop.permute.xlu0 %2025
      %2027 = vrot.lane.b32.xlu0 %v1734, 112
      %v2028 = vpop.permute.xlu0 %2027
      %2029 = vrot.lane.b32.xlu0 %v1735, 112
      %v2030 = vpop.permute.xlu0 %2029
      %2031 = vrot.lane.b32.xlu0 %v1736, 112
      %v2032 = vpop.permute.xlu0 %2031
      %2033 = vrot.lane.b32.xlu0 %v1737, 112
      %v2034 = vpop.permute.xlu0 %2033
      %2035 = vrot.lane.b32.xlu0 %v1738, 112
      %v2036 = vpop.permute.xlu0 %2035
      %v2037 = vsel %vm1095, %v2002, %v2004
      %v2038 = vsel %vm1095, %v2004, %v2006
      %v2039 = vsel %vm1095, %v2006, %v2008
      %v2040 = vsel %vm1095, %v2008, %v2010
      %v2041 = vsel %vm1095, %v2010, %v2012
      %v2042 = vsel %vm1095, %v2012, %v2014
      %v2043 = vsel %vm1095, %v2014, %v2016
      %v2044 = vsel %vm1095, %v2016, %v2018
      %v2045 = vsel %vm1095, %v2020, %v2022
      %v2046 = vsel %vm1095, %v2022, %v2024
      %v2047 = vsel %vm1095, %v2024, %v2026
      %v2048 = vsel %vm1095, %v2026, %v2028
      %v2049 = vsel %vm1095, %v2028, %v2030
      %v2050 = vsel %vm1095, %v2030, %v2032
      %v2051 = vsel %vm1095, %v2032, %v2034
      %v2052 = vsel %vm1095, %v2034, %v2036
      %2087 = vrot.lane.b32.xlu0 %v1651, 111
      %v2088 = vpop.permute.xlu0 %2087
      %2089 = vrot.lane.b32.xlu0 %v1652, 111
      %v2090 = vpop.permute.xlu0 %2089
      %2091 = vrot.lane.b32.xlu0 %v1653, 111
      %v2092 = vpop.permute.xlu0 %2091
      %2093 = vrot.lane.b32.xlu0 %v1654, 111
      %v2094 = vpop.permute.xlu0 %2093
      %2095 = vrot.lane.b32.xlu0 %v1655, 111
      %v2096 = vpop.permute.xlu0 %2095
      %2097 = vrot.lane.b32.xlu0 %v1656, 111
      %v2098 = vpop.permute.xlu0 %2097
      %2099 = vrot.lane.b32.xlu0 %v1657, 111
      %v2100 = vpop.permute.xlu0 %2099
      %2101 = vrot.lane.b32.xlu0 %v1658, 111
      %v2102 = vpop.permute.xlu0 %2101
      %2103 = vrot.lane.b32.xlu0 %v1683, 111
      %v2104 = vpop.permute.xlu0 %2103
      %2105 = vrot.lane.b32.xlu0 %v1659, 111
      %v2106 = vpop.permute.xlu0 %2105
      %2107 = vrot.lane.b32.xlu0 %v1660, 111
      %v2108 = vpop.permute.xlu0 %2107
      %2109 = vrot.lane.b32.xlu0 %v1661, 111
      %v2110 = vpop.permute.xlu0 %2109
      %2111 = vrot.lane.b32.xlu0 %v1662, 111
      %v2112 = vpop.permute.xlu0 %2111
      %2113 = vrot.lane.b32.xlu0 %v1663, 111
      %v2114 = vpop.permute.xlu0 %2113
      %2115 = vrot.lane.b32.xlu0 %v1664, 111
      %v2116 = vpop.permute.xlu0 %2115
      %2117 = vrot.lane.b32.xlu0 %v1665, 111
      %v2118 = vpop.permute.xlu0 %2117
      %2119 = vrot.lane.b32.xlu0 %v1666, 111
      %v2120 = vpop.permute.xlu0 %2119
      %2121 = vrot.lane.b32.xlu0 %v1684, 111
      %v2122 = vpop.permute.xlu0 %2121
      %v2123 = vsel %vm1139, %v2088, %v2090
      %v2124 = vsel %vm1139, %v2090, %v2092
      %v2125 = vsel %vm1139, %v2092, %v2094
      %v2126 = vsel %vm1139, %v2094, %v2096
      %v2127 = vsel %vm1139, %v2096, %v2098
      %v2128 = vsel %vm1139, %v2098, %v2100
      %v2129 = vsel %vm1139, %v2100, %v2102
      %v2130 = vsel %vm1139, %v2102, %v2104
      %v2131 = vsel %vm1139, %v2106, %v2108
      %v2132 = vsel %vm1139, %v2108, %v2110
      %v2133 = vsel %vm1139, %v2110, %v2112
      %v2134 = vsel %vm1139, %v2112, %v2114
      %v2135 = vsel %vm1139, %v2114, %v2116
      %v2136 = vsel %vm1139, %v2116, %v2118
      %v2137 = vsel %vm1139, %v2118, %v2120
      %v2138 = vsel %vm1139, %v2120, %v2122
      %2173 = vrot.lane.b32.xlu0 %v1739, 110
      %v2174 = vpop.permute.xlu0 %2173
      %2175 = vrot.lane.b32.xlu0 %v1740, 110
      %v2176 = vpop.permute.xlu0 %2175
      %2177 = vrot.lane.b32.xlu0 %v1741, 110
      %v2178 = vpop.permute.xlu0 %2177
      %2179 = vrot.lane.b32.xlu0 %v1742, 110
      %v2180 = vpop.permute.xlu0 %2179
      %2181 = vrot.lane.b32.xlu0 %v1743, 110
      %v2182 = vpop.permute.xlu0 %2181
      %2183 = vrot.lane.b32.xlu0 %v1744, 110
      %v2184 = vpop.permute.xlu0 %2183
      %2185 = vrot.lane.b32.xlu0 %v1745, 110
      %v2186 = vpop.permute.xlu0 %2185
      %2187 = vrot.lane.b32.xlu0 %v1746, 110
      %v2188 = vpop.permute.xlu0 %2187
      %2189 = vrot.lane.b32.xlu0 %v1747, 110
      %v2190 = vpop.permute.xlu0 %2189
      %2191 = vrot.lane.b32.xlu0 %v1748, 110
      %v2192 = vpop.permute.xlu0 %2191
      %2193 = vrot.lane.b32.xlu0 %v1749, 110
      %v2194 = vpop.permute.xlu0 %2193
      %2195 = vrot.lane.b32.xlu0 %v1750, 110
      %v2196 = vpop.permute.xlu0 %2195
      %2197 = vrot.lane.b32.xlu0 %v1751, 110
      %v2198 = vpop.permute.xlu0 %2197
      %2199 = vrot.lane.b32.xlu0 %v1752, 110
      %v2200 = vpop.permute.xlu0 %2199
      %2201 = vrot.lane.b32.xlu0 %v1753, 110
      %v2202 = vpop.permute.xlu0 %2201
      %2203 = vrot.lane.b32.xlu0 %v1754, 110
      %v2204 = vpop.permute.xlu0 %2203
      %2205 = vrot.lane.b32.xlu0 %v1755, 110
      %v2206 = vpop.permute.xlu0 %2205
      %2207 = vrot.lane.b32.xlu0 %v1756, 110
      %v2208 = vpop.permute.xlu0 %2207
      %v2209 = vsel %vm1183, %v2174, %v2176
      %v2210 = vsel %vm1183, %v2176, %v2178
      %v2211 = vsel %vm1183, %v2178, %v2180
      %v2212 = vsel %vm1183, %v2180, %v2182
      %v2213 = vsel %vm1183, %v2182, %v2184
      %v2214 = vsel %vm1183, %v2184, %v2186
      %v2215 = vsel %vm1183, %v2186, %v2188
      %v2216 = vsel %vm1183, %v2188, %v2190
      %v2217 = vsel %vm1183, %v2192, %v2194
      %v2218 = vsel %vm1183, %v2194, %v2196
      %v2219 = vsel %vm1183, %v2196, %v2198
      %v2220 = vsel %vm1183, %v2198, %v2200
      %v2221 = vsel %vm1183, %v2200, %v2202
      %v2222 = vsel %vm1183, %v2202, %v2204
      %v2223 = vsel %vm1183, %v2204, %v2206
      %v2224 = vsel %vm1183, %v2206, %v2208
      %2259 = vrot.lane.b32.xlu0 %v1757, 96
      %v2260 = vpop.permute.xlu0 %2259
      %2261 = vrot.lane.b32.xlu0 %v1758, 96
      %v2262 = vpop.permute.xlu0 %2261
      %2263 = vrot.lane.b32.xlu0 %v1759, 96
      %v2264 = vpop.permute.xlu0 %2263
      %2265 = vrot.lane.b32.xlu0 %v1760, 96
      %v2266 = vpop.permute.xlu0 %2265
      %2267 = vrot.lane.b32.xlu0 %v1761, 96
      %v2268 = vpop.permute.xlu0 %2267
      %2269 = vrot.lane.b32.xlu0 %v1762, 96
      %v2270 = vpop.permute.xlu0 %2269
      %2271 = vrot.lane.b32.xlu0 %v1763, 96
      %v2272 = vpop.permute.xlu0 %2271
      %2273 = vrot.lane.b32.xlu0 %v1764, 96
      %v2274 = vpop.permute.xlu0 %2273
      %2275 = vrot.lane.b32.xlu0 %v1765, 96
      %v2276 = vpop.permute.xlu0 %2275
      %2277 = vrot.lane.b32.xlu0 %v1766, 96
      %v2278 = vpop.permute.xlu0 %2277
      %2279 = vrot.lane.b32.xlu0 %v1767, 96
      %v2280 = vpop.permute.xlu0 %2279
      %2281 = vrot.lane.b32.xlu0 %v1768, 96
      %v2282 = vpop.permute.xlu0 %2281
      %2283 = vrot.lane.b32.xlu0 %v1769, 96
      %v2284 = vpop.permute.xlu0 %2283
      %2285 = vrot.lane.b32.xlu0 %v1770, 96
      %v2286 = vpop.permute.xlu0 %2285
      %2287 = vrot.lane.b32.xlu0 %v1771, 96
      %v2288 = vpop.permute.xlu0 %2287
      %2289 = vrot.lane.b32.xlu0 %v1772, 96
      %v2290 = vpop.permute.xlu0 %2289
      %2291 = vrot.lane.b32.xlu0 %v1773, 96
      %v2292 = vpop.permute.xlu0 %2291
      %2293 = vrot.lane.b32.xlu0 %v1774, 96
      %v2294 = vpop.permute.xlu0 %2293
      %v2295 = vsel %vm1227, %v2260, %v2262
      %v2296 = vsel %vm1227, %v2262, %v2264
      %v2297 = vsel %vm1227, %v2264, %v2266
      %v2298 = vsel %vm1227, %v2266, %v2268
      %v2299 = vsel %vm1227, %v2268, %v2270
      %v2300 = vsel %vm1227, %v2270, %v2272
      %v2301 = vsel %vm1227, %v2272, %v2274
      %v2302 = vsel %vm1227, %v2274, %v2276
      %v2303 = vsel %vm1227, %v2278, %v2280
      %v2304 = vsel %vm1227, %v2280, %v2282
      %v2305 = vsel %vm1227, %v2282, %v2284
      %v2306 = vsel %vm1227, %v2284, %v2286
      %v2307 = vsel %vm1227, %v2286, %v2288
      %v2308 = vsel %vm1227, %v2288, %v2290
      %v2309 = vsel %vm1227, %v2290, %v2292
      %v2310 = vsel %vm1227, %v2292, %v2294
      %2345 = vrot.lane.b32.xlu0 %v1775, 95
      %v2346 = vpop.permute.xlu0 %2345
      %2347 = vrot.lane.b32.xlu0 %v1776, 95
      %v2348 = vpop.permute.xlu0 %2347
      %2349 = vrot.lane.b32.xlu0 %v1777, 95
      %v2350 = vpop.permute.xlu0 %2349
      %2351 = vrot.lane.b32.xlu0 %v1778, 95
      %v2352 = vpop.permute.xlu0 %2351
      %2353 = vrot.lane.b32.xlu0 %v1779, 95
      %v2354 = vpop.permute.xlu0 %2353
      %2355 = vrot.lane.b32.xlu0 %v1780, 95
      %v2356 = vpop.permute.xlu0 %2355
      %2357 = vrot.lane.b32.xlu0 %v1781, 95
      %v2358 = vpop.permute.xlu0 %2357
      %2359 = vrot.lane.b32.xlu0 %v1782, 95
      %v2360 = vpop.permute.xlu0 %2359
      %2361 = vrot.lane.b32.xlu0 %v1783, 95
      %v2362 = vpop.permute.xlu0 %2361
      %2363 = vrot.lane.b32.xlu0 %v1784, 95
      %v2364 = vpop.permute.xlu0 %2363
      %2365 = vrot.lane.b32.xlu0 %v1785, 95
      %v2366 = vpop.permute.xlu0 %2365
      %2367 = vrot.lane.b32.xlu0 %v1786, 95
      %v2368 = vpop.permute.xlu0 %2367
      %2369 = vrot.lane.b32.xlu0 %v1787, 95
      %v2370 = vpop.permute.xlu0 %2369
      %2371 = vrot.lane.b32.xlu0 %v1788, 95
      %v2372 = vpop.permute.xlu0 %2371
      %2373 = vrot.lane.b32.xlu0 %v1789, 95
      %v2374 = vpop.permute.xlu0 %2373
      %2375 = vrot.lane.b32.xlu0 %v1790, 95
      %v2376 = vpop.permute.xlu0 %2375
      %2377 = vrot.lane.b32.xlu0 %v1791, 95
      %v2378 = vpop.permute.xlu0 %2377
      %2379 = vrot.lane.b32.xlu0 %v1792, 95
      %v2380 = vpop.permute.xlu0 %2379
      %v2381 = vsel %vm1271, %v2346, %v2348
      %v2382 = vsel %vm1271, %v2348, %v2350
      %v2383 = vsel %vm1271, %v2350, %v2352
      %v2384 = vsel %vm1271, %v2352, %v2354
      %v2385 = vsel %vm1271, %v2354, %v2356
      %v2386 = vsel %vm1271, %v2356, %v2358
      %v2387 = vsel %vm1271, %v2358, %v2360
      %v2388 = vsel %vm1271, %v2360, %v2362
      %v2389 = vsel %vm1271, %v2364, %v2366
      %v2390 = vsel %vm1271, %v2366, %v2368
      %v2391 = vsel %vm1271, %v2368, %v2370
      %v2392 = vsel %vm1271, %v2370, %v2372
      %v2393 = vsel %vm1271, %v2372, %v2374
      %v2394 = vsel %vm1271, %v2374, %v2376
      %v2395 = vsel %vm1271, %v2376, %v2378
      %v2396 = vsel %vm1271, %v2378, %v2380
      %2431 = vrot.lane.b32.xlu0 %v1793, 94
      %v2432 = vpop.permute.xlu0 %2431
      %2433 = vrot.lane.b32.xlu0 %v1794, 94
      %v2434 = vpop.permute.xlu0 %2433
      %2435 = vrot.lane.b32.xlu0 %v1795, 94
      %v2436 = vpop.permute.xlu0 %2435
      %2437 = vrot.lane.b32.xlu0 %v1796, 94
      %v2438 = vpop.permute.xlu0 %2437
      %2439 = vrot.lane.b32.xlu0 %v1797, 94
      %v2440 = vpop.permute.xlu0 %2439
      %2441 = vrot.lane.b32.xlu0 %v1798, 94
      %v2442 = vpop.permute.xlu0 %2441
      %2443 = vrot.lane.b32.xlu0 %v1799, 94
      %v2444 = vpop.permute.xlu0 %2443
      %2445 = vrot.lane.b32.xlu0 %v1800, 94
      %v2446 = vpop.permute.xlu0 %2445
      %2447 = vrot.lane.b32.xlu0 %v1801, 94
      %v2448 = vpop.permute.xlu0 %2447
      %2449 = vrot.lane.b32.xlu0 %v1802, 94
      %v2450 = vpop.permute.xlu0 %2449
      %2451 = vrot.lane.b32.xlu0 %v1803, 94
      %v2452 = vpop.permute.xlu0 %2451
      %2453 = vrot.lane.b32.xlu0 %v1804, 94
      %v2454 = vpop.permute.xlu0 %2453
      %2455 = vrot.lane.b32.xlu0 %v1805, 94
      %v2456 = vpop.permute.xlu0 %2455
      %2457 = vrot.lane.b32.xlu0 %v1806, 94
      %v2458 = vpop.permute.xlu0 %2457
      %2459 = vrot.lane.b32.xlu0 %v1807, 94
      %v2460 = vpop.permute.xlu0 %2459
      %2461 = vrot.lane.b32.xlu0 %v1808, 94
      %v2462 = vpop.permute.xlu0 %2461
      %2463 = vrot.lane.b32.xlu0 %v1809, 94
      %v2464 = vpop.permute.xlu0 %2463
      %2465 = vrot.lane.b32.xlu0 %v1810, 94
      %v2466 = vpop.permute.xlu0 %2465
      %v2467 = vsel %vm1315, %v2432, %v2434
      %v2468 = vsel %vm1315, %v2434, %v2436
      %v2469 = vsel %vm1315, %v2436, %v2438
      %v2470 = vsel %vm1315, %v2438, %v2440
      %v2471 = vsel %vm1315, %v2440, %v2442
      %v2472 = vsel %vm1315, %v2442, %v2444
      %v2473 = vsel %vm1315, %v2444, %v2446
      %v2474 = vsel %vm1315, %v2446, %v2448
      %v2475 = vsel %vm1315, %v2450, %v2452
      %v2476 = vsel %vm1315, %v2452, %v2454
      %v2477 = vsel %vm1315, %v2454, %v2456
      %v2478 = vsel %vm1315, %v2456, %v2458
      %v2479 = vsel %vm1315, %v2458, %v2460
      %v2480 = vsel %vm1315, %v2460, %v2462
      %v2481 = vsel %vm1315, %v2462, %v2464
      %v2482 = vsel %vm1315, %v2464, %v2466
      %v2499 = vld [vmem:[%s3] sm:$0xff]
      %v2500 = vld [vmem:[%s3 + $0x8] sm:$0xff]
      %v2501 = vld [vmem:[%s3 + $0x10] sm:$0xff]
      %v2502 = vld [vmem:[%s3 + $0x18] sm:$0xff]
      %v2503 = vld [vmem:[%s4] sm:$0xff]
      %v2504 = vld [vmem:[%s4 + $0x8] sm:$0xff]
      %2506 = vset.pattern.permute.xlu0 0
      %2507 = vperm.xlu0 %2506, %v2503
      %v2508 = vpop.permute.xlu0 %2507
      %2511 = vset.pattern.permute.xlu0 0
      %2512 = vperm.xlu0 %2511, %v2504
      %v2513 = vpop.permute.xlu0 %2512
      %v2516 = vsel %vm722, %v2500, 0
      %v2519 = vsel %vm722, %v2502, 0
      %2521 = vmatpush.msra.mxu0 %v2389
      %2522 = vmatpush.msra.mxu0 %v2381
      %2523 = vmatpush.msra.mxu0 %v2303
      %2524 = vmatpush.msra.mxu0 %v2295
      %2525 = vmatpush.msra.mxu0 %v2217
      %2526 = vmatpush.msra.mxu0 %v2209
      %2527 = vmatpush.msra.mxu0 %v2131
      %2528 = vmatpush.msra.mxu0 %v2123
      %2529 = vmatpush.msra.mxu0 %v2045
      %2530 = vmatpush.msra.mxu0 %v2037
      %2531 = vmatpush.msra.mxu0 %v1959
      %2532 = vmatpush.msra.mxu0 %v1951
      %2533 = vmatpush.msra.mxu0 %v1873
      %2534 = vmatpush.msra.mxu0 %v1865
      %2535 = vmatpush.msra.mxu0 %v1675
      %2536 = vmatpush.msra.mxu0 %v1667
      %2537 = vmatmul.f32.gmra.mxu0 %v2499
      %v2538 = vpop.f32.mrf.mxu0
      %v2539 = vadd.f32 %v2508, %v2538
      %2540 = vmatmul.f32.gmra.mxu0 %v2501
      %v2541 = vpop.f32.mrf.mxu0
      %v2542 = vadd.f32 %v2513, %v2541
      %2543 = vdwg.mxu0
      %2544 = vmatpush.msra.mxu0 0.0
      %2545 = vmatpush.msra.mxu0 0.0
      %2546 = vmatpush.msra.mxu0 0.0
      %2547 = vmatpush.msra.mxu0 0.0
      %2548 = vmatpush.msra.mxu0 0.0
      %2549 = vmatpush.msra.mxu0 0.0
      %2550 = vmatpush.msra.mxu0 0.0
      %2551 = vmatpush.msra.mxu0 0.0
      %2552 = vmatpush.msra.mxu0 0.0
      %2553 = vmatpush.msra.mxu0 0.0
      %2554 = vmatpush.msra.mxu0 0.0
      %2555 = vmatpush.msra.mxu0 0.0
      %2556 = vmatpush.msra.mxu0 0.0
      %2557 = vmatpush.msra.mxu0 0.0
      %2558 = vmatpush.msra.mxu0 %v2475
      %2559 = vmatpush.msra.mxu0 %v2467
      %2560 = vmatmul.f32.gmra.mxu0 %v2516
      %v2561 = vpop.f32.mrf.mxu0
      %v2562 = vadd.f32 %v2539, %v2561
      %2563 = vmatmul.f32.gmra.mxu0 %v2519
      %v2564 = vpop.f32.mrf.mxu0
      %v2565 = vadd.f32 %v2542, %v2564
      %2566 = vdwg.mxu0
      %2567 = vmatpush.msra.mxu0 %v2390
      %2568 = vmatpush.msra.mxu0 %v2382
      %2569 = vmatpush.msra.mxu0 %v2304
      %2570 = vmatpush.msra.mxu0 %v2296
      %2571 = vmatpush.msra.mxu0 %v2218
      %2572 = vmatpush.msra.mxu0 %v2210
      %2573 = vmatpush.msra.mxu0 %v2132
      %2574 = vmatpush.msra.mxu0 %v2124
      %2575 = vmatpush.msra.mxu0 %v2046
      %2576 = vmatpush.msra.mxu0 %v2038
      %2577 = vmatpush.msra.mxu0 %v1960
      %2578 = vmatpush.msra.mxu0 %v1952
      %2579 = vmatpush.msra.mxu0 %v1874
      %2580 = vmatpush.msra.mxu0 %v1866
      %2581 = vmatpush.msra.mxu0 %v1676
      %2582 = vmatpush.msra.mxu0 %v1668
      %2583 = vmatmul.f32.gmra.mxu0 %v2499
      %v2584 = vpop.f32.mrf.mxu0
      %v2585 = vadd.f32 %v2508, %v2584
      %2586 = vmatmul.f32.gmra.mxu0 %v2501
      %v2587 = vpop.f32.mrf.mxu0
      %v2588 = vadd.f32 %v2513, %v2587
      %2589 = vdwg.mxu0
      %2590 = vmatpush.msra.mxu0 0.0
      %2591 = vmatpush.msra.mxu0 0.0
      %2592 = vmatpush.msra.mxu0 0.0
      %2593 = vmatpush.msra.mxu0 0.0
      %2594 = vmatpush.msra.mxu0 0.0
      %2595 = vmatpush.msra.mxu0 0.0
      %2596 = vmatpush.msra.mxu0 0.0
      %2597 = vmatpush.msra.mxu0 0.0
      %2598 = vmatpush.msra.mxu0 0.0
      %2599 = vmatpush.msra.mxu0 0.0
      %2600 = vmatpush.msra.mxu0 0.0
      %2601 = vmatpush.msra.mxu0 0.0
      %2602 = vmatpush.msra.mxu0 0.0
      %2603 = vmatpush.msra.mxu0 0.0
      %2604 = vmatpush.msra.mxu0 %v2476
      %2605 = vmatpush.msra.mxu0 %v2468
      %2606 = vmatmul.f32.gmra.mxu0 %v2516
      %v2607 = vpop.f32.mrf.mxu0
      %v2608 = vadd.f32 %v2585, %v2607
      %2609 = vmatmul.f32.gmra.mxu0 %v2519
      %v2610 = vpop.f32.mrf.mxu0
      %v2611 = vadd.f32 %v2588, %v2610
      %2612 = vdwg.mxu0
      %2613 = vmatpush.msra.mxu0 %v2391
      %2614 = vmatpush.msra.mxu0 %v2383
      %2615 = vmatpush.msra.mxu0 %v2305
      %2616 = vmatpush.msra.mxu0 %v2297
      %2617 = vmatpush.msra.mxu0 %v2219
      %2618 = vmatpush.msra.mxu0 %v2211
      %2619 = vmatpush.msra.mxu0 %v2133
      %2620 = vmatpush.msra.mxu0 %v2125
      %2621 = vmatpush.msra.mxu0 %v2047
      %2622 = vmatpush.msra.mxu0 %v2039
      %2623 = vmatpush.msra.mxu0 %v1961
      %2624 = vmatpush.msra.mxu0 %v1953
      %2625 = vmatpush.msra.mxu0 %v1875
      %2626 = vmatpush.msra.mxu0 %v1867
      %2627 = vmatpush.msra.mxu0 %v1677
      %2628 = vmatpush.msra.mxu0 %v1669
      %2629 = vmatmul.f32.gmra.mxu0 %v2499
      %v2630 = vpop.f32.mrf.mxu0
      %v2631 = vadd.f32 %v2508, %v2630
      %2632 = vmatmul.f32.gmra.mxu0 %v2501
      %v2633 = vpop.f32.mrf.mxu0
      %v2634 = vadd.f32 %v2513, %v2633
      %2635 = vdwg.mxu0
      %2636 = vmatpush.msra.mxu0 0.0
      %2637 = vmatpush.msra.mxu0 0.0
      %2638 = vmatpush.msra.mxu0 0.0
      %2639 = vmatpush.msra.mxu0 0.0
      %2640 = vmatpush.msra.mxu0 0.0
      %2641 = vmatpush.msra.mxu0 0.0
      %2642 = vmatpush.msra.mxu0 0.0
      %2643 = vmatpush.msra.mxu0 0.0
      %2644 = vmatpush.msra.mxu0 0.0
      %2645 = vmatpush.msra.mxu0 0.0
      %2646 = vmatpush.msra.mxu0 0.0
      %2647 = vmatpush.msra.mxu0 0.0
      %2648 = vmatpush.msra.mxu0 0.0
      %2649 = vmatpush.msra.mxu0 0.0
      %2650 = vmatpush.msra.mxu0 %v2477
      %2651 = vmatpush.msra.mxu0 %v2469
      %2652 = vmatmul.f32.gmra.mxu0 %v2516
      %v2653 = vpop.f32.mrf.mxu0
      %v2654 = vadd.f32 %v2631, %v2653
      %2655 = vmatmul.f32.gmra.mxu0 %v2519
      %v2656 = vpop.f32.mrf.mxu0
      %v2657 = vadd.f32 %v2634, %v2656
      %2658 = vdwg.mxu0
      %2659 = vmatpush.msra.mxu0 %v2392
      %2660 = vmatpush.msra.mxu0 %v2384
      %2661 = vmatpush.msra.mxu0 %v2306
      %2662 = vmatpush.msra.mxu0 %v2298
      %2663 = vmatpush.msra.mxu0 %v2220
      %2664 = vmatpush.msra.mxu0 %v2212
      %2665 = vmatpush.msra.mxu0 %v2134
      %2666 = vmatpush.msra.mxu0 %v2126
      %2667 = vmatpush.msra.mxu0 %v2048
      %2668 = vmatpush.msra.mxu0 %v2040
      %2669 = vmatpush.msra.mxu0 %v1962
      %2670 = vmatpush.msra.mxu0 %v1954
      %2671 = vmatpush.msra.mxu0 %v1876
      %2672 = vmatpush.msra.mxu0 %v1868
      %2673 = vmatpush.msra.mxu0 %v1678
      %2674 = vmatpush.msra.mxu0 %v1670
      %2675 = vmatmul.f32.gmra.mxu0 %v2499
      %v2676 = vpop.f32.mrf.mxu0
      %v2677 = vadd.f32 %v2508, %v2676
      %2678 = vmatmul.f32.gmra.mxu0 %v2501
      %v2679 = vpop.f32.mrf.mxu0
      %v2680 = vadd.f32 %v2513, %v2679
      %2681 = vdwg.mxu0
      %2682 = vmatpush.msra.mxu0 0.0
      %2683 = vmatpush.msra.mxu0 0.0
      %2684 = vmatpush.msra.mxu0 0.0
      %2685 = vmatpush.msra.mxu0 0.0
      %2686 = vmatpush.msra.mxu0 0.0
      %2687 = vmatpush.msra.mxu0 0.0
      %2688 = vmatpush.msra.mxu0 0.0
      %2689 = vmatpush.msra.mxu0 0.0
      %2690 = vmatpush.msra.mxu0 0.0
      %2691 = vmatpush.msra.mxu0 0.0
      %2692 = vmatpush.msra.mxu0 0.0
      %2693 = vmatpush.msra.mxu0 0.0
      %2694 = vmatpush.msra.mxu0 0.0
      %2695 = vmatpush.msra.mxu0 0.0
      %2696 = vmatpush.msra.mxu0 %v2478
      %2697 = vmatpush.msra.mxu0 %v2470
      %2698 = vmatmul.f32.gmra.mxu0 %v2516
      %v2699 = vpop.f32.mrf.mxu0
      %v2700 = vadd.f32 %v2677, %v2699
      %2701 = vmatmul.f32.gmra.mxu0 %v2519
      %v2702 = vpop.f32.mrf.mxu0
      %v2703 = vadd.f32 %v2680, %v2702
      %2704 = vdwg.mxu0
      %2705 = vmatpush.msra.mxu0 %v2393
      %2706 = vmatpush.msra.mxu0 %v2385
      %2707 = vmatpush.msra.mxu0 %v2307
      %2708 = vmatpush.msra.mxu0 %v2299
      %2709 = vmatpush.msra.mxu0 %v2221
      %2710 = vmatpush.msra.mxu0 %v2213
      %2711 = vmatpush.msra.mxu0 %v2135
      %2712 = vmatpush.msra.mxu0 %v2127
      %2713 = vmatpush.msra.mxu0 %v2049
      %2714 = vmatpush.msra.mxu0 %v2041
      %2715 = vmatpush.msra.mxu0 %v1963
      %2716 = vmatpush.msra.mxu0 %v1955
      %2717 = vmatpush.msra.mxu0 %v1877
      %2718 = vmatpush.msra.mxu0 %v1869
      %2719 = vmatpush.msra.mxu0 %v1679
      %2720 = vmatpush.msra.mxu0 %v1671
      %2721 = vmatmul.f32.gmra.mxu0 %v2499
      %v2722 = vpop.f32.mrf.mxu0
      %v2723 = vadd.f32 %v2508, %v2722
      %2724 = vmatmul.f32.gmra.mxu0 %v2501
      %v2725 = vpop.f32.mrf.mxu0
      %v2726 = vadd.f32 %v2513, %v2725
      %2727 = vdwg.mxu0
      %2728 = vmatpush.msra.mxu0 0.0
      %2729 = vmatpush.msra.mxu0 0.0
      %2730 = vmatpush.msra.mxu0 0.0
      %2731 = vmatpush.msra.mxu0 0.0
      %2732 = vmatpush.msra.mxu0 0.0
      %2733 = vmatpush.msra.mxu0 0.0
      %2734 = vmatpush.msra.mxu0 0.0
      %2735 = vmatpush.msra.mxu0 0.0
      %2736 = vmatpush.msra.mxu0 0.0
      %2737 = vmatpush.msra.mxu0 0.0
      %2738 = vmatpush.msra.mxu0 0.0
      %2739 = vmatpush.msra.mxu0 0.0
      %2740 = vmatpush.msra.mxu0 0.0
      %2741 = vmatpush.msra.mxu0 0.0
      %2742 = vmatpush.msra.mxu0 %v2479
      %2743 = vmatpush.msra.mxu0 %v2471
      %2744 = vmatmul.f32.gmra.mxu0 %v2516
      %v2745 = vpop.f32.mrf.mxu0
      %v2746 = vadd.f32 %v2723, %v2745
      %2747 = vmatmul.f32.gmra.mxu0 %v2519
      %v2748 = vpop.f32.mrf.mxu0
      %v2749 = vadd.f32 %v2726, %v2748
      %2750 = vdwg.mxu0
      %2751 = vmatpush.msra.mxu0 %v2394
      %2752 = vmatpush.msra.mxu0 %v2386
      %2753 = vmatpush.msra.mxu0 %v2308
      %2754 = vmatpush.msra.mxu0 %v2300
      %2755 = vmatpush.msra.mxu0 %v2222
      %2756 = vmatpush.msra.mxu0 %v2214
      %2757 = vmatpush.msra.mxu0 %v2136
      %2758 = vmatpush.msra.mxu0 %v2128
      %2759 = vmatpush.msra.mxu0 %v2050
      %2760 = vmatpush.msra.mxu0 %v2042
      %2761 = vmatpush.msra.mxu0 %v1964
      %2762 = vmatpush.msra.mxu0 %v1956
      %2763 = vmatpush.msra.mxu0 %v1878
      %2764 = vmatpush.msra.mxu0 %v1870
      %2765 = vmatpush.msra.mxu0 %v1680
      %2766 = vmatpush.msra.mxu0 %v1672
      %2767 = vmatmul.f32.gmra.mxu0 %v2499
      %v2768 = vpop.f32.mrf.mxu0
      %v2769 = vadd.f32 %v2508, %v2768
      %2770 = vmatmul.f32.gmra.mxu0 %v2501
      %v2771 = vpop.f32.mrf.mxu0
      %v2772 = vadd.f32 %v2513, %v2771
      %2773 = vdwg.mxu0
      %2774 = vmatpush.msra.mxu0 0.0
      %2775 = vmatpush.msra.mxu0 0.0
      %2776 = vmatpush.msra.mxu0 0.0
      %2777 = vmatpush.msra.mxu0 0.0
      %2778 = vmatpush.msra.mxu0 0.0
      %2779 = vmatpush.msra.mxu0 0.0
      %2780 = vmatpush.msra.mxu0 0.0
      %2781 = vmatpush.msra.mxu0 0.0
      %2782 = vmatpush.msra.mxu0 0.0
      %2783 = vmatpush.msra.mxu0 0.0
      %2784 = vmatpush.msra.mxu0 0.0
      %2785 = vmatpush.msra.mxu0 0.0
      %2786 = vmatpush.msra.mxu0 0.0
      %2787 = vmatpush.msra.mxu0 0.0
      %2788 = vmatpush.msra.mxu0 %v2480
      %2789 = vmatpush.msra.mxu0 %v2472
      %2790 = vmatmul.f32.gmra.mxu0 %v2516
      %v2791 = vpop.f32.mrf.mxu0
      %v2792 = vadd.f32 %v2769, %v2791
      %2793 = vmatmul.f32.gmra.mxu0 %v2519
      %v2794 = vpop.f32.mrf.mxu0
      %v2795 = vadd.f32 %v2772, %v2794
      %2796 = vdwg.mxu0
      %2797 = vmatpush.msra.mxu0 %v2395
      %2798 = vmatpush.msra.mxu0 %v2387
      %2799 = vmatpush.msra.mxu0 %v2309
      %2800 = vmatpush.msra.mxu0 %v2301
      %2801 = vmatpush.msra.mxu0 %v2223
      %2802 = vmatpush.msra.mxu0 %v2215
      %2803 = vmatpush.msra.mxu0 %v2137
      %2804 = vmatpush.msra.mxu0 %v2129
      %2805 = vmatpush.msra.mxu0 %v2051
      %2806 = vmatpush.msra.mxu0 %v2043
      %2807 = vmatpush.msra.mxu0 %v1965
      %2808 = vmatpush.msra.mxu0 %v1957
      %2809 = vmatpush.msra.mxu0 %v1879
      %2810 = vmatpush.msra.mxu0 %v1871
      %2811 = vmatpush.msra.mxu0 %v1681
      %2812 = vmatpush.msra.mxu0 %v1673
      %2813 = vmatmul.f32.gmra.mxu0 %v2499
      %v2814 = vpop.f32.mrf.mxu0
      %v2815 = vadd.f32 %v2508, %v2814
      %2816 = vmatmul.f32.gmra.mxu0 %v2501
      %v2817 = vpop.f32.mrf.mxu0
      %v2818 = vadd.f32 %v2513, %v2817
      %2819 = vdwg.mxu0
      %2820 = vmatpush.msra.mxu0 0.0
      %2821 = vmatpush.msra.mxu0 0.0
      %2822 = vmatpush.msra.mxu0 0.0
      %2823 = vmatpush.msra.mxu0 0.0
      %2824 = vmatpush.msra.mxu0 0.0
      %2825 = vmatpush.msra.mxu0 0.0
      %2826 = vmatpush.msra.mxu0 0.0
      %2827 = vmatpush.msra.mxu0 0.0
      %2828 = vmatpush.msra.mxu0 0.0
      %2829 = vmatpush.msra.mxu0 0.0
      %2830 = vmatpush.msra.mxu0 0.0
      %2831 = vmatpush.msra.mxu0 0.0
      %2832 = vmatpush.msra.mxu0 0.0
      %2833 = vmatpush.msra.mxu0 0.0
      %2834 = vmatpush.msra.mxu0 %v2481
      %2835 = vmatpush.msra.mxu0 %v2473
      %2836 = vmatmul.f32.gmra.mxu0 %v2516
      %v2837 = vpop.f32.mrf.mxu0
      %v2838 = vadd.f32 %v2815, %v2837
      %2839 = vmatmul.f32.gmra.mxu0 %v2519
      %v2840 = vpop.f32.mrf.mxu0
      %v2841 = vadd.f32 %v2818, %v2840
      %2842 = vdwg.mxu0
      %2843 = vmatpush.msra.mxu0 %v2396
      %2844 = vmatpush.msra.mxu0 %v2388
      %2845 = vmatpush.msra.mxu0 %v2310
      %2846 = vmatpush.msra.mxu0 %v2302
      %2847 = vmatpush.msra.mxu0 %v2224
      %2848 = vmatpush.msra.mxu0 %v2216
      %2849 = vmatpush.msra.mxu0 %v2138
      %2850 = vmatpush.msra.mxu0 %v2130
      %2851 = vmatpush.msra.mxu0 %v2052
      %2852 = vmatpush.msra.mxu0 %v2044
      %2853 = vmatpush.msra.mxu0 %v1966
      %2854 = vmatpush.msra.mxu0 %v1958
      %2855 = vmatpush.msra.mxu0 %v1880
      %2856 = vmatpush.msra.mxu0 %v1872
      %2857 = vmatpush.msra.mxu0 %v1682
      %2858 = vmatpush.msra.mxu0 %v1674
      %2859 = vmatmul.f32.gmra.mxu0 %v2499
      %v2860 = vpop.f32.mrf.mxu0
      %v2861 = vadd.f32 %v2508, %v2860
      %2862 = vmatmul.f32.gmra.mxu0 %v2501
      %v2863 = vpop.f32.mrf.mxu0
      %v2864 = vadd.f32 %v2513, %v2863
      %2865 = vdwg.mxu0
      %2866 = vmatpush.msra.mxu0 0.0
      %2867 = vmatpush.msra.mxu0 0.0
      %2868 = vmatpush.msra.mxu0 0.0
      %2869 = vmatpush.msra.mxu0 0.0
      %2870 = vmatpush.msra.mxu0 0.0
      %2871 = vmatpush.msra.mxu0 0.0
      %2872 = vmatpush.msra.mxu0 0.0
      %2873 = vmatpush.msra.mxu0 0.0
      %2874 = vmatpush.msra.mxu0 0.0
      %2875 = vmatpush.msra.mxu0 0.0
      %2876 = vmatpush.msra.mxu0 0.0
      %2877 = vmatpush.msra.mxu0 0.0
      %2878 = vmatpush.msra.mxu0 0.0
      %2879 = vmatpush.msra.mxu0 0.0
      %2880 = vmatpush.msra.mxu0 %v2482
      %2881 = vmatpush.msra.mxu0 %v2474
      %2882 = vmatmul.f32.gmra.mxu0 %v2516
      %v2883 = vpop.f32.mrf.mxu0
      %v2884 = vadd.f32 %v2861, %v2883
      %2885 = vmatmul.f32.gmra.mxu0 %v2519
      %v2886 = vpop.f32.mrf.mxu0
      %v2887 = vadd.f32 %v2864, %v2886
      %2888 = vdwg.mxu0
      %v2889 = vmax.f32 %v2562, 0.0
      %v2890 = vmax.f32 %v2608, 0.0
      %v2891 = vmax.f32 %v2654, 0.0
      %v2892 = vmax.f32 %v2700, 0.0
      %v2893 = vmax.f32 %v2746, 0.0
      %v2894 = vmax.f32 %v2792, 0.0
      %v2895 = vmax.f32 %v2838, 0.0
      %v2896 = vmax.f32 %v2884, 0.0
      %v2897 = vmax.f32 %v2565, 0.0
      %v2898 = vmax.f32 %v2611, 0.0
      %v2899 = vmax.f32 %v2657, 0.0
      %v2900 = vmax.f32 %v2703, 0.0
      %v2901 = vmax.f32 %v2749, 0.0
      %v2902 = vmax.f32 %v2795, 0.0
      %v2903 = vmax.f32 %v2841, 0.0
      %v2904 = vmax.f32 %v2887, 0.0
      %2921 = vrot.lane.b32.xlu0 %v2889, 17
      %v2922 = vpop.permute.xlu0 %2921
      %2923 = vrot.lane.b32.xlu0 %v2890, 17
      %v2924 = vpop.permute.xlu0 %2923
      %2925 = vrot.lane.b32.xlu0 %v2891, 17
      %v2926 = vpop.permute.xlu0 %2925
      %2927 = vrot.lane.b32.xlu0 %v2892, 17
      %v2928 = vpop.permute.xlu0 %2927
      %2929 = vrot.lane.b32.xlu0 %v2893, 17
      %v2930 = vpop.permute.xlu0 %2929
      %2931 = vrot.lane.b32.xlu0 %v2894, 17
      %v2932 = vpop.permute.xlu0 %2931
      %2933 = vrot.lane.b32.xlu0 %v2895, 17
      %v2934 = vpop.permute.xlu0 %2933
      %2935 = vrot.lane.b32.xlu0 %v2896, 17
      %v2936 = vpop.permute.xlu0 %2935
      %2937 = vrot.lane.b32.xlu0 %v2897, 17
      %v2938 = vpop.permute.xlu0 %2937
      %2939 = vrot.lane.b32.xlu0 %v2898, 17
      %v2940 = vpop.permute.xlu0 %2939
      %2941 = vrot.lane.b32.xlu0 %v2899, 17
      %v2942 = vpop.permute.xlu0 %2941
      %2943 = vrot.lane.b32.xlu0 %v2900, 17
      %v2944 = vpop.permute.xlu0 %2943
      %2945 = vrot.lane.b32.xlu0 %v2901, 17
      %v2946 = vpop.permute.xlu0 %2945
      %2947 = vrot.lane.b32.xlu0 %v2902, 17
      %v2948 = vpop.permute.xlu0 %2947
      %2949 = vrot.lane.b32.xlu0 %v2903, 17
      %v2950 = vpop.permute.xlu0 %2949
      %2951 = vrot.lane.b32.xlu0 %v2904, 17
      %v2952 = vpop.permute.xlu0 %2951
      %v2953 = vsel %vm449, %v2922, %v2924
      %v2954 = vsel %vm449, %v2924, %v2926
      %v2955 = vsel %vm449, %v2926, %v2928
      %v2956 = vsel %vm449, %v2928, %v2930
      %v2957 = vsel %vm449, %v2930, %v2932
      %v2958 = vsel %vm449, %v2932, %v2934
      %v2959 = vsel %vm449, %v2934, %v2936
      %v2960 = vsel %vm449, %v2938, %v2940
      %v2961 = vsel %vm449, %v2940, %v2942
      %v2962 = vsel %vm449, %v2942, %v2944
      %v2963 = vsel %vm449, %v2944, %v2946
      %v2964 = vsel %vm449, %v2946, %v2948
      %v2965 = vsel %vm449, %v2948, %v2950
      %v2966 = vsel %vm449, %v2950, %v2952
      %2985 = vst.msk [vmem:[#allocation2] sm:$0xff] %vm497, %v2922
      %2986 = vst [vmem:[#allocation2 + $0x8] sm:$0xff] %v2953
      %2987 = vst [vmem:[#allocation2 + $0x10] sm:$0xff] %v2954
      %2988 = vst [vmem:[#allocation2 + $0x18] sm:$0xff] %v2955
      %2989 = vst [vmem:[#allocation2 + $0x20] sm:$0xff] %v2956
      %2990 = vst [vmem:[#allocation2 + $0x28] sm:$0xff] %v2957
      %2991 = vst [vmem:[#allocation2 + $0x30] sm:$0xff] %v2958
      %2992 = vst [vmem:[#allocation2 + $0x38] sm:$0xff] %v2959
      %2993 = vst.msk [vmem:[#allocation2 + $0x40] sm:$0xff] %vm449, %v2936
      %2994 = vst.msk [vmem:[#allocation2 + $0x48] sm:$0xff] %vm497, %v2938
      %2995 = vst [vmem:[#allocation2 + $0x50] sm:$0xff] %v2960
      %2996 = vst [vmem:[#allocation2 + $0x58] sm:$0xff] %v2961
      %2997 = vst [vmem:[#allocation2 + $0x60] sm:$0xff] %v2962
      %2998 = vst [vmem:[#allocation2 + $0x68] sm:$0xff] %v2963
      %2999 = vst [vmem:[#allocation2 + $0x70] sm:$0xff] %v2964
      %3000 = vst [vmem:[#allocation2 + $0x78] sm:$0xff] %v2965
      %3001 = vst [vmem:[#allocation2 + $0x80] sm:$0xff] %v2966
      %3002 = vst.msk [vmem:[#allocation2 + $0x88] sm:$0xff] %vm449, %v2952
      %v3003 = vld [vmem:[#allocation2] sm:$0xff]
      %v3004 = vld [vmem:[#allocation2 + $0x8] sm:$0xff]
      %v3005 = vld [vmem:[#allocation2 + $0x10] sm:$0xff]
      %v3006 = vld [vmem:[#allocation2 + $0x18] sm:$0xff]
      %v3007 = vld [vmem:[#allocation2 + $0x20] sm:$0xff]
      %v3008 = vld [vmem:[#allocation2 + $0x28] sm:$0xff]
      %v3009 = vld [vmem:[#allocation2 + $0x30] sm:$0xff]
      %v3010 = vld [vmem:[#allocation2 + $0x38] sm:$0xff]
      %v3011 = vld [vmem:[#allocation2 + $0x40] sm:$0xff]
      %v3012 = vld [vmem:[#allocation2 + $0x48] sm:$0xff]
      %v3013 = vld [vmem:[#allocation2 + $0x50] sm:$0xff]
      %v3014 = vld [vmem:[#allocation2 + $0x58] sm:$0xff]
      %v3015 = vld [vmem:[#allocation2 + $0x60] sm:$0xff]
      %v3016 = vld [vmem:[#allocation2 + $0x68] sm:$0xff]
      %v3017 = vld [vmem:[#allocation2 + $0x70] sm:$0xff]
      %v3018 = vld [vmem:[#allocation2 + $0x78] sm:$0xff]
      %v3019 = vld [vmem:[#allocation2 + $0x80] sm:$0xff]
      %v3020 = vld [vmem:[#allocation2 + $0x88] sm:$0xff]
      %3039 = vrot.lane.b32.xlu0 %v3003, 127
      %v3040 = vpop.permute.xlu0 %3039
      %3041 = vrot.lane.b32.xlu0 %v3004, 127
      %v3042 = vpop.permute.xlu0 %3041
      %3043 = vrot.lane.b32.xlu0 %v3005, 127
      %v3044 = vpop.permute.xlu0 %3043
      %3045 = vrot.lane.b32.xlu0 %v3006, 127
      %v3046 = vpop.permute.xlu0 %3045
      %3047 = vrot.lane.b32.xlu0 %v3007, 127
      %v3048 = vpop.permute.xlu0 %3047
      %3049 = vrot.lane.b32.xlu0 %v3008, 127
      %v3050 = vpop.permute.xlu0 %3049
      %3051 = vrot.lane.b32.xlu0 %v3009, 127
      %v3052 = vpop.permute.xlu0 %3051
      %3053 = vrot.lane.b32.xlu0 %v3010, 127
      %v3054 = vpop.permute.xlu0 %3053
      %3055 = vrot.lane.b32.xlu0 %v3011, 127
      %v3056 = vpop.permute.xlu0 %3055
      %3057 = vrot.lane.b32.xlu0 %v3012, 127
      %v3058 = vpop.permute.xlu0 %3057
      %3059 = vrot.lane.b32.xlu0 %v3013, 127
      %v3060 = vpop.permute.xlu0 %3059
      %3061 = vrot.lane.b32.xlu0 %v3014, 127
      %v3062 = vpop.permute.xlu0 %3061
      %3063 = vrot.lane.b32.xlu0 %v3015, 127
      %v3064 = vpop.permute.xlu0 %3063
      %3065 = vrot.lane.b32.xlu0 %v3016, 127
      %v3066 = vpop.permute.xlu0 %3065
      %3067 = vrot.lane.b32.xlu0 %v3017, 127
      %v3068 = vpop.permute.xlu0 %3067
      %3069 = vrot.lane.b32.xlu0 %v3018, 127
      %v3070 = vpop.permute.xlu0 %3069
      %3071 = vrot.lane.b32.xlu0 %v3019, 127
      %v3072 = vpop.permute.xlu0 %3071
      %3073 = vrot.lane.b32.xlu0 %v3020, 127
      %v3074 = vpop.permute.xlu0 %3073
      %v3075 = vsel %vm1007, %v3040, %v3042
      %v3076 = vsel %vm1007, %v3042, %v3044
      %v3077 = vsel %vm1007, %v3044, %v3046
      %v3078 = vsel %vm1007, %v3046, %v3048
      %v3079 = vsel %vm1007, %v3048, %v3050
      %v3080 = vsel %vm1007, %v3050, %v3052
      %v3081 = vsel %vm1007, %v3052, %v3054
      %v3082 = vsel %vm1007, %v3054, %v3056
      %v3083 = vsel %vm1007, %v3058, %v3060
      %v3084 = vsel %vm1007, %v3060, %v3062
      %v3085 = vsel %vm1007, %v3062, %v3064
      %v3086 = vsel %vm1007, %v3064, %v3066
      %v3087 = vsel %vm1007, %v3066, %v3068
      %v3088 = vsel %vm1007, %v3068, %v3070
      %v3089 = vsel %vm1007, %v3070, %v3072
      %v3090 = vsel %vm1007, %v3072, %v3074
      %v3109 = vmax.f32 %v3003, %v3075
      %v3110 = vmax.f32 %v3004, %v3076
      %v3111 = vmax.f32 %v3005, %v3077
      %v3112 = vmax.f32 %v3006, %v3078
      %v3113 = vmax.f32 %v3007, %v3079
      %v3114 = vmax.f32 %v3008, %v3080
      %v3115 = vmax.f32 %v3009, %v3081
      %v3116 = vmax.f32 %v3010, %v3082
      %v3117 = vmax.f32 %v3011, %v3056
      %v3118 = vmax.f32 %v3012, %v3083
      %v3119 = vmax.f32 %v3013, %v3084
      %v3120 = vmax.f32 %v3014, %v3085
      %v3121 = vmax.f32 %v3015, %v3086
      %v3122 = vmax.f32 %v3016, %v3087
      %v3123 = vmax.f32 %v3017, %v3088
      %v3124 = vmax.f32 %v3018, %v3089
      %v3125 = vmax.f32 %v3019, %v3090
      %v3126 = vmax.f32 %v3020, %v3074
      %3145 = vrot.lane.b32.xlu0 %v3109, 112
      %v3146 = vpop.permute.xlu0 %3145
      %3147 = vrot.lane.b32.xlu0 %v3110, 112
      %v3148 = vpop.permute.xlu0 %3147
      %3149 = vrot.lane.b32.xlu0 %v3111, 112
      %v3150 = vpop.permute.xlu0 %3149
      %3151 = vrot.lane.b32.xlu0 %v3112, 112
      %v3152 = vpop.permute.xlu0 %3151
      %3153 = vrot.lane.b32.xlu0 %v3113, 112
      %v3154 = vpop.permute.xlu0 %3153
      %3155 = vrot.lane.b32.xlu0 %v3114, 112
      %v3156 = vpop.permute.xlu0 %3155
      %3157 = vrot.lane.b32.xlu0 %v3115, 112
      %v3158 = vpop.permute.xlu0 %3157
      %3159 = vrot.lane.b32.xlu0 %v3116, 112
      %v3160 = vpop.permute.xlu0 %3159
      %3161 = vrot.lane.b32.xlu0 %v3117, 112
      %v3162 = vpop.permute.xlu0 %3161
      %3163 = vrot.lane.b32.xlu0 %v3118, 112
      %v3164 = vpop.permute.xlu0 %3163
      %3165 = vrot.lane.b32.xlu0 %v3119, 112
      %v3166 = vpop.permute.xlu0 %3165
      %3167 = vrot.lane.b32.xlu0 %v3120, 112
      %v3168 = vpop.permute.xlu0 %3167
      %3169 = vrot.lane.b32.xlu0 %v3121, 112
      %v3170 = vpop.permute.xlu0 %3169
      %3171 = vrot.lane.b32.xlu0 %v3122, 112
      %v3172 = vpop.permute.xlu0 %3171
      %3173 = vrot.lane.b32.xlu0 %v3123, 112
      %v3174 = vpop.permute.xlu0 %3173
      %3175 = vrot.lane.b32.xlu0 %v3124, 112
      %v3176 = vpop.permute.xlu0 %3175
      %3177 = vrot.lane.b32.xlu0 %v3125, 112
      %v3178 = vpop.permute.xlu0 %3177
      %3179 = vrot.lane.b32.xlu0 %v3126, 112
      %v3180 = vpop.permute.xlu0 %3179
      %v3181 = vsel %vm1095, %v3146, %v3148
      %v3182 = vsel %vm1095, %v3148, %v3150
      %v3183 = vsel %vm1095, %v3150, %v3152
      %v3184 = vsel %vm1095, %v3152, %v3154
      %v3185 = vsel %vm1095, %v3154, %v3156
      %v3186 = vsel %vm1095, %v3156, %v3158
      %v3187 = vsel %vm1095, %v3158, %v3160
      %v3188 = vsel %vm1095, %v3160, %v3162
      %v3189 = vsel %vm1095, %v3164, %v3166
      %v3190 = vsel %vm1095, %v3166, %v3168
      %v3191 = vsel %vm1095, %v3168, %v3170
      %v3192 = vsel %vm1095, %v3170, %v3172
      %v3193 = vsel %vm1095, %v3172, %v3174
      %v3194 = vsel %vm1095, %v3174, %v3176
      %v3195 = vsel %vm1095, %v3176, %v3178
      %v3196 = vsel %vm1095, %v3178, %v3180
      %v3215 = vmax.f32 %v3109, %v3181
      %v3216 = vmax.f32 %v3110, %v3182
      %v3217 = vmax.f32 %v3111, %v3183
      %v3218 = vmax.f32 %v3112, %v3184
      %v3219 = vmax.f32 %v3113, %v3185
      %v3220 = vmax.f32 %v3114, %v3186
      %v3221 = vmax.f32 %v3115, %v3187
      %v3222 = vmax.f32 %v3116, %v3188
      %v3223 = vmax.f32 %v3117, %v3162
      %v3224 = vmax.f32 %v3118, %v3189
      %v3225 = vmax.f32 %v3119, %v3190
      %v3226 = vmax.f32 %v3120, %v3191
      %v3227 = vmax.f32 %v3121, %v3192
      %v3228 = vmax.f32 %v3122, %v3193
      %v3229 = vmax.f32 %v3123, %v3194
      %v3230 = vmax.f32 %v3124, %v3195
      %v3231 = vmax.f32 %v3125, %v3196
      %v3232 = vmax.f32 %v3126, %v3180
      %v3233 = vld [vmem:[%s9] sm:$0xff]
      %v3234 = vld [vmem:[%s9 + $0x8] sm:$0xff]
      %v3235 = vld [vmem:[%s9 + $0x10] sm:$0xff]
      %v3236 = vld [vmem:[%s9 + $0x18] sm:$0xff]
      %v3237 = vld [vmem:[%s9 + $0x20] sm:$0xff]
      %v3238 = vld [vmem:[%s9 + $0x28] sm:$0xff]
      %v3239 = vld [vmem:[%s9 + $0x30] sm:$0xff]
      %v3240 = vld [vmem:[%s9 + $0x38] sm:$0xff]
      %v3241 = vld [vmem:[%s9 + $0x40] sm:$0xff]
      %v3242 = vld [vmem:[%s9 + $0x48] sm:$0xff]
      %v3243 = vld [vmem:[%s9 + $0x50] sm:$0xff]
      %v3244 = vld [vmem:[%s9 + $0x58] sm:$0xff]
      %v3245 = vld [vmem:[%s9 + $0x60] sm:$0xff]
      %v3246 = vld [vmem:[%s9 + $0x68] sm:$0xff]
      %v3247 = vld [vmem:[%s9 + $0x70] sm:$0xff]
      %v3248 = vld [vmem:[%s9 + $0x78] sm:$0xff]
      %v3249 = vld [vmem:[%s9 + $0x80] sm:$0xff]
      %v3250 = vld [vmem:[%s9 + $0x88] sm:$0xff]
      %v3251 = vld [vmem:[%s9 + $0x90] sm:$0xff]
      %v3252 = vld [vmem:[%s9 + $0x98] sm:$0xff]
      %v3253 = vld [vmem:[%s9 + $0xa0] sm:$0xff]
      %v3254 = vld [vmem:[%s9 + $0xa8] sm:$0xff]
      %v3255 = vld [vmem:[%s9 + $0xb0] sm:$0xff]
      %v3256 = vld [vmem:[%s9 + $0xb8] sm:$0xff]
      %v3257 = vld [vmem:[%s9 + $0xc0] sm:$0xff]
      %v3258 = vld [vmem:[%s9 + $0xc8] sm:$0xff]
      %v3259 = vld [vmem:[%s9 + $0xd0] sm:$0xff]
      %v3260 = vld [vmem:[%s9 + $0xd8] sm:$0xff]
      %v3261 = vld [vmem:[%s9 + $0xe0] sm:$0xff]
      %v3262 = vld [vmem:[%s9 + $0xe8] sm:$0xff]
      %v3263 = vld [vmem:[%s9 + $0xf0] sm:$0xff]
      %v3264 = vld [vmem:[%s9 + $0xf8] sm:$0xff]
      %v3265 = vld [vmem:[%s9 + $0x100] sm:$0xff]
      %v3266 = vld [vmem:[%s9 + $0x108] sm:$0xff]
      %v3267 = vld [vmem:[%s9 + $0x110] sm:$0xff]
      %v3268 = vld [vmem:[%s9 + $0x118] sm:$0xff]
      %v3269 = vld [vmem:[%s9 + $0x120] sm:$0xff]
      %v3270 = vld [vmem:[%s9 + $0x128] sm:$0xff]
      %v3271 = vld [vmem:[%s9 + $0x130] sm:$0xff]
      %v3272 = vld [vmem:[%s9 + $0x138] sm:$0xff]
      %v3273 = vld [vmem:[%s9 + $0x140] sm:$0xff]
      %v3274 = vld [vmem:[%s9 + $0x148] sm:$0xff]
      %v3275 = vld [vmem:[%s9 + $0x150] sm:$0xff]
      %v3276 = vld [vmem:[%s9 + $0x158] sm:$0xff]
      %v3277 = vld [vmem:[%s9 + $0x160] sm:$0xff]
      %v3278 = vld [vmem:[%s9 + $0x168] sm:$0xff]
      %v3279 = vld [vmem:[%s9 + $0x170] sm:$0xff]
      %v3280 = vld [vmem:[%s9 + $0x178] sm:$0xff]
      %v3281 = vld [vmem:[%s9 + $0x180] sm:$0xff]
      %v3282 = vld [vmem:[%s9 + $0x188] sm:$0xff]
      %v3283 = vld [vmem:[%s9 + $0x190] sm:$0xff]
      %v3284 = vld [vmem:[%s9 + $0x198] sm:$0xff]
      %v3285 = vld [vmem:[%s9 + $0x1a0] sm:$0xff]
      %v3286 = vld [vmem:[%s9 + $0x1a8] sm:$0xff]
      %v3287 = vld [vmem:[%s9 + $0x1b0] sm:$0xff]
      %v3288 = vld [vmem:[%s9 + $0x1b8] sm:$0xff]
      %v3289 = vld [vmem:[%s9 + $0x1c0] sm:$0xff]
      %v3290 = vld [vmem:[%s9 + $0x1c8] sm:$0xff]
      %v3291 = vld [vmem:[%s9 + $0x1d0] sm:$0xff]
      %v3292 = vld [vmem:[%s9 + $0x1d8] sm:$0xff]
      %v3293 = vld [vmem:[%s9 + $0x1e0] sm:$0xff]
      %v3294 = vld [vmem:[%s9 + $0x1e8] sm:$0xff]
      %v3295 = vld [vmem:[%s9 + $0x1f0] sm:$0xff]
      %v3296 = vld [vmem:[%s9 + $0x1f8] sm:$0xff]
      %v3297 = vld [vmem:[%s9 + $0x200] sm:$0xff]
      %v3298 = vld [vmem:[%s9 + $0x208] sm:$0xff]
      %v3299 = vld [vmem:[%s9 + $0x210] sm:$0xff]
      %v3300 = vld [vmem:[%s9 + $0x218] sm:$0xff]
      %v3301 = vld [vmem:[%s9 + $0x220] sm:$0xff]
      %v3302 = vld [vmem:[%s9 + $0x228] sm:$0xff]
      %v3303 = vld [vmem:[%s9 + $0x230] sm:$0xff]
      %v3304 = vld [vmem:[%s9 + $0x238] sm:$0xff]
      %v3305 = vld [vmem:[%s9 + $0x240] sm:$0xff]
      %v3306 = vld [vmem:[%s9 + $0x248] sm:$0xff]
      %v3307 = vld [vmem:[%s9 + $0x250] sm:$0xff]
      %v3308 = vld [vmem:[%s9 + $0x258] sm:$0xff]
      %v3309 = vld [vmem:[%s9 + $0x260] sm:$0xff]
      %v3310 = vld [vmem:[%s9 + $0x268] sm:$0xff]
      %v3311 = vld [vmem:[%s9 + $0x270] sm:$0xff]
      %v3312 = vld [vmem:[%s9 + $0x278] sm:$0xff]
      %v3313 = vld [vmem:[%s9 + $0x280] sm:$0xff]
      %v3314 = vld [vmem:[%s9 + $0x288] sm:$0xff]
      %v3315 = vld [vmem:[%s9 + $0x290] sm:$0xff]
      %v3316 = vld [vmem:[%s9 + $0x298] sm:$0xff]
      %v3317 = vld [vmem:[%s9 + $0x2a0] sm:$0xff]
      %v3318 = vld [vmem:[%s9 + $0x2a8] sm:$0xff]
      %v3319 = vld [vmem:[%s9 + $0x2b0] sm:$0xff]
      %v3320 = vld [vmem:[%s9 + $0x2b8] sm:$0xff]
      %v3321 = vld [vmem:[%s9 + $0x2c0] sm:$0xff]
      %v3322 = vld [vmem:[%s9 + $0x2c8] sm:$0xff]
      %v3323 = vld [vmem:[%s9 + $0x2d0] sm:$0xff]
      %v3324 = vld [vmem:[%s9 + $0x2d8] sm:$0xff]
      %v3325 = vld [vmem:[%s9 + $0x2e0] sm:$0xff]
      %v3326 = vld [vmem:[%s9 + $0x2e8] sm:$0xff]
      %v3327 = vld [vmem:[%s9 + $0x2f0] sm:$0xff]
      %v3328 = vld [vmem:[%s9 + $0x2f8] sm:$0xff]
      %v3329 = vld [vmem:[%s9 + $0x300] sm:$0xff]
      %v3330 = vld [vmem:[%s9 + $0x308] sm:$0xff]
      %v3331 = vld [vmem:[%s9 + $0x310] sm:$0xff]
      %v3332 = vld [vmem:[%s9 + $0x318] sm:$0xff]
      %v3333 = vld [vmem:[%s9 + $0x320] sm:$0xff]
      %v3334 = vld [vmem:[%s9 + $0x328] sm:$0xff]
      %v3335 = vld [vmem:[%s9 + $0x330] sm:$0xff]
      %v3336 = vld [vmem:[%s9 + $0x338] sm:$0xff]
      %v3337 = vld [vmem:[%s9 + $0x340] sm:$0xff]
      %v3338 = vld [vmem:[%s9 + $0x348] sm:$0xff]
      %v3339 = vld [vmem:[%s9 + $0x350] sm:$0xff]
      %v3340 = vld [vmem:[%s9 + $0x358] sm:$0xff]
      %v3341 = vld [vmem:[%s9 + $0x360] sm:$0xff]
      %v3342 = vld [vmem:[%s9 + $0x368] sm:$0xff]
      %v3343 = vld [vmem:[%s9 + $0x370] sm:$0xff]
      %v3344 = vld [vmem:[%s9 + $0x378] sm:$0xff]
      %v3345 = vld [vmem:[%s9 + $0x380] sm:$0xff]
      %v3346 = vld [vmem:[%s9 + $0x388] sm:$0xff]
      %v3347 = vld [vmem:[%s9 + $0x390] sm:$0xff]
      %v3348 = vld [vmem:[%s9 + $0x398] sm:$0xff]
      %v3349 = vld [vmem:[%s9 + $0x3a0] sm:$0xff]
      %v3350 = vld [vmem:[%s9 + $0x3a8] sm:$0xff]
      %v3351 = vld [vmem:[%s9 + $0x3b0] sm:$0xff]
      %v3352 = vld [vmem:[%s9 + $0x3b8] sm:$0xff]
      %v3353 = vld [vmem:[%s9 + $0x3c0] sm:$0xff]
      %v3354 = vld [vmem:[%s9 + $0x3c8] sm:$0xff]
      %v3355 = vld [vmem:[%s9 + $0x3d0] sm:$0xff]
      %v3356 = vld [vmem:[%s9 + $0x3d8] sm:$0xff]
      %v3357 = vld [vmem:[%s9 + $0x3e0] sm:$0xff]
      %v3358 = vld [vmem:[%s9 + $0x3e8] sm:$0xff]
      %v3359 = vld [vmem:[%s9 + $0x3f0] sm:$0xff]
      %v3360 = vld [vmem:[%s9 + $0x3f8] sm:$0xff]
      %v3361 = vld [vmem:[%s9 + $0x400] sm:$0xff]
      %v3362 = vld [vmem:[%s9 + $0x408] sm:$0xff]
      %v3363 = vld [vmem:[%s9 + $0x410] sm:$0xff]
      %v3364 = vld [vmem:[%s9 + $0x418] sm:$0xff]
      %v3365 = vld [vmem:[%s9 + $0x420] sm:$0xff]
      %v3366 = vld [vmem:[%s9 + $0x428] sm:$0xff]
      %v3367 = vld [vmem:[%s9 + $0x430] sm:$0xff]
      %v3368 = vld [vmem:[%s9 + $0x438] sm:$0xff]
      %v3369 = vld [vmem:[%s9 + $0x440] sm:$0xff]
      %v3370 = vld [vmem:[%s9 + $0x448] sm:$0xff]
      %v3371 = vld [vmem:[%s9 + $0x450] sm:$0xff]
      %v3372 = vld [vmem:[%s9 + $0x458] sm:$0xff]
      %v3373 = vld [vmem:[%s9 + $0x460] sm:$0xff]
      %v3374 = vld [vmem:[%s9 + $0x468] sm:$0xff]
      %v3375 = vld [vmem:[%s9 + $0x470] sm:$0xff]
      %v3376 = vld [vmem:[%s9 + $0x478] sm:$0xff]
      %v3377 = vld [vmem:[%s9 + $0x480] sm:$0xff]
      %v3378 = vld [vmem:[%s9 + $0x488] sm:$0xff]
      %v3379 = vld [vmem:[%s9 + $0x490] sm:$0xff]
      %v3380 = vld [vmem:[%s9 + $0x498] sm:$0xff]
      %v3381 = vld [vmem:[%s9 + $0x4a0] sm:$0xff]
      %v3382 = vld [vmem:[%s9 + $0x4a8] sm:$0xff]
      %v3383 = vld [vmem:[%s9 + $0x4b0] sm:$0xff]
      %v3384 = vld [vmem:[%s9 + $0x4b8] sm:$0xff]
      %v3385 = vld [vmem:[%s9 + $0x4c0] sm:$0xff]
      %v3386 = vld [vmem:[%s9 + $0x4c8] sm:$0xff]
      %v3387 = vld [vmem:[%s9 + $0x4d0] sm:$0xff]
      %v3388 = vld [vmem:[%s9 + $0x4d8] sm:$0xff]
      %v3389 = vld [vmem:[%s9 + $0x4e0] sm:$0xff]
      %v3390 = vld [vmem:[%s9 + $0x4e8] sm:$0xff]
      %v3391 = vld [vmem:[%s9 + $0x4f0] sm:$0xff]
      %v3392 = vld [vmem:[%s9 + $0x4f8] sm:$0xff]
      %v3393 = vld [vmem:[%s9 + $0x500] sm:$0xff]
      %v3394 = vld [vmem:[%s9 + $0x508] sm:$0xff]
      %v3395 = vld [vmem:[%s9 + $0x510] sm:$0xff]
      %v3396 = vld [vmem:[%s9 + $0x518] sm:$0xff]
      %v3397 = vld [vmem:[%s9 + $0x520] sm:$0xff]
      %v3398 = vld [vmem:[%s9 + $0x528] sm:$0xff]
      %v3399 = vld [vmem:[%s9 + $0x530] sm:$0xff]
      %v3400 = vld [vmem:[%s9 + $0x538] sm:$0xff]
      %v3401 = vld [vmem:[%s9 + $0x540] sm:$0xff]
      %v3402 = vld [vmem:[%s9 + $0x548] sm:$0xff]
      %v3403 = vld [vmem:[%s9 + $0x550] sm:$0xff]
      %v3404 = vld [vmem:[%s9 + $0x558] sm:$0xff]
      %v3405 = vld [vmem:[%s9 + $0x560] sm:$0xff]
      %v3406 = vld [vmem:[%s9 + $0x568] sm:$0xff]
      %v3407 = vld [vmem:[%s9 + $0x570] sm:$0xff]
      %v3408 = vld [vmem:[%s9 + $0x578] sm:$0xff]
      %v3409 = vld [vmem:[%s9 + $0x580] sm:$0xff]
      %v3410 = vld [vmem:[%s9 + $0x588] sm:$0xff]
      %v3411 = vld [vmem:[%s9 + $0x590] sm:$0xff]
      %v3412 = vld [vmem:[%s9 + $0x598] sm:$0xff]
      %v3413 = vld [vmem:[%s9 + $0x5a0] sm:$0xff]
      %v3414 = vld [vmem:[%s9 + $0x5a8] sm:$0xff]
      %v3415 = vld [vmem:[%s9 + $0x5b0] sm:$0xff]
      %v3416 = vld [vmem:[%s9 + $0x5b8] sm:$0xff]
      %v3417 = vld [vmem:[%s9 + $0x5c0] sm:$0xff]
      %v3418 = vld [vmem:[%s9 + $0x5c8] sm:$0xff]
      %v3419 = vld [vmem:[%s9 + $0x5d0] sm:$0xff]
      %v3420 = vld [vmem:[%s9 + $0x5d8] sm:$0xff]
      %v3421 = vld [vmem:[%s9 + $0x5e0] sm:$0xff]
      %v3422 = vld [vmem:[%s9 + $0x5e8] sm:$0xff]
      %v3423 = vld [vmem:[%s9 + $0x5f0] sm:$0xff]
      %v3424 = vld [vmem:[%s9 + $0x5f8] sm:$0xff]
      %v3425 = vld [vmem:[%s9 + $0x600] sm:$0xff]
      %v3426 = vld [vmem:[%s9 + $0x608] sm:$0xff]
      %v3427 = vld [vmem:[%s9 + $0x610] sm:$0xff]
      %v3428 = vld [vmem:[%s9 + $0x618] sm:$0xff]
      %v3429 = vld [vmem:[%s9 + $0x620] sm:$0xff]
      %v3430 = vld [vmem:[%s9 + $0x628] sm:$0xff]
      %v3431 = vld [vmem:[%s9 + $0x630] sm:$0xff]
      %v3432 = vld [vmem:[%s9 + $0x638] sm:$0xff]
      %v3433 = vld [vmem:[%s9 + $0x640] sm:$0xff]
      %v3434 = vld [vmem:[%s9 + $0x648] sm:$0xff]
      %v3435 = vld [vmem:[%s9 + $0x650] sm:$0xff]
      %v3436 = vld [vmem:[%s9 + $0x658] sm:$0xff]
      %v3437 = vld [vmem:[%s9 + $0x660] sm:$0xff]
      %v3438 = vld [vmem:[%s9 + $0x668] sm:$0xff]
      %v3439 = vld [vmem:[%s9 + $0x670] sm:$0xff]
      %v3440 = vld [vmem:[%s9 + $0x678] sm:$0xff]
      %v3441 = vld [vmem:[%s9 + $0x680] sm:$0xff]
      %v3442 = vld [vmem:[%s9 + $0x688] sm:$0xff]
      %v3443 = vld [vmem:[%s9 + $0x690] sm:$0xff]
      %v3444 = vld [vmem:[%s9 + $0x698] sm:$0xff]
      %v3445 = vld [vmem:[%s9 + $0x6a0] sm:$0xff]
      %v3446 = vld [vmem:[%s9 + $0x6a8] sm:$0xff]
      %v3447 = vld [vmem:[%s9 + $0x6b0] sm:$0xff]
      %v3448 = vld [vmem:[%s9 + $0x6b8] sm:$0xff]
      %v3449 = vld [vmem:[%s9 + $0x6c0] sm:$0xff]
      %v3450 = vld [vmem:[%s9 + $0x6c8] sm:$0xff]
      %v3451 = vld [vmem:[%s9 + $0x6d0] sm:$0xff]
      %v3452 = vld [vmem:[%s9 + $0x6d8] sm:$0xff]
      %v3453 = vld [vmem:[%s9 + $0x6e0] sm:$0xff]
      %v3454 = vld [vmem:[%s9 + $0x6e8] sm:$0xff]
      %v3455 = vld [vmem:[%s9 + $0x6f0] sm:$0xff]
      %v3456 = vld [vmem:[%s9 + $0x6f8] sm:$0xff]
      %v3457 = vld [vmem:[%s9 + $0x700] sm:$0xff]
      %v3458 = vld [vmem:[%s9 + $0x708] sm:$0xff]
      %v3459 = vld [vmem:[%s9 + $0x710] sm:$0xff]
      %v3460 = vld [vmem:[%s9 + $0x718] sm:$0xff]
      %v3461 = vld [vmem:[%s9 + $0x720] sm:$0xff]
      %v3462 = vld [vmem:[%s9 + $0x728] sm:$0xff]
      %v3463 = vld [vmem:[%s9 + $0x730] sm:$0xff]
      %v3464 = vld [vmem:[%s9 + $0x738] sm:$0xff]
      %v3465 = vld [vmem:[%s9 + $0x740] sm:$0xff]
      %v3466 = vld [vmem:[%s9 + $0x748] sm:$0xff]
      %v3467 = vld [vmem:[%s9 + $0x750] sm:$0xff]
      %v3468 = vld [vmem:[%s9 + $0x758] sm:$0xff]
      %v3469 = vld [vmem:[%s9 + $0x760] sm:$0xff]
      %v3470 = vld [vmem:[%s9 + $0x768] sm:$0xff]
      %v3471 = vld [vmem:[%s9 + $0x770] sm:$0xff]
      %v3472 = vld [vmem:[%s9 + $0x778] sm:$0xff]
      %v3473 = vld [vmem:[%s9 + $0x780] sm:$0xff]
      %v3474 = vld [vmem:[%s9 + $0x788] sm:$0xff]
      %v3475 = vld [vmem:[%s9 + $0x790] sm:$0xff]
      %v3476 = vld [vmem:[%s9 + $0x798] sm:$0xff]
      %v3477 = vld [vmem:[%s9 + $0x7a0] sm:$0xff]
      %v3478 = vld [vmem:[%s9 + $0x7a8] sm:$0xff]
      %v3479 = vld [vmem:[%s9 + $0x7b0] sm:$0xff]
      %v3480 = vld [vmem:[%s9 + $0x7b8] sm:$0xff]
      %v3481 = vld [vmem:[%s9 + $0x7c0] sm:$0xff]
      %v3482 = vld [vmem:[%s9 + $0x7c8] sm:$0xff]
      %v3483 = vld [vmem:[%s9 + $0x7d0] sm:$0xff]
      %v3484 = vld [vmem:[%s9 + $0x7d8] sm:$0xff]
      %v3485 = vld [vmem:[%s9 + $0x7e0] sm:$0xff]
      %v3486 = vld [vmem:[%s9 + $0x7e8] sm:$0xff]
      %v3487 = vld [vmem:[%s9 + $0x7f0] sm:$0xff]
      %v3488 = vld [vmem:[%s9 + $0x7f8] sm:$0xff]
      %3507 = vrot.lane.b32.xlu0 %v3215, 111
      %v3508 = vpop.permute.xlu0 %3507
      %3509 = vrot.lane.b32.xlu0 %v3216, 111
      %v3510 = vpop.permute.xlu0 %3509
      %3511 = vrot.lane.b32.xlu0 %v3217, 111
      %v3512 = vpop.permute.xlu0 %3511
      %3513 = vrot.lane.b32.xlu0 %v3218, 111
      %v3514 = vpop.permute.xlu0 %3513
      %3515 = vrot.lane.b32.xlu0 %v3219, 111
      %v3516 = vpop.permute.xlu0 %3515
      %3517 = vrot.lane.b32.xlu0 %v3220, 111
      %v3518 = vpop.permute.xlu0 %3517
      %3519 = vrot.lane.b32.xlu0 %v3221, 111
      %v3520 = vpop.permute.xlu0 %3519
      %3521 = vrot.lane.b32.xlu0 %v3222, 111
      %v3522 = vpop.permute.xlu0 %3521
      %3523 = vrot.lane.b32.xlu0 %v3223, 111
      %v3524 = vpop.permute.xlu0 %3523
      %3525 = vrot.lane.b32.xlu0 %v3224, 111
      %v3526 = vpop.permute.xlu0 %3525
      %3527 = vrot.lane.b32.xlu0 %v3225, 111
      %v3528 = vpop.permute.xlu0 %3527
      %3529 = vrot.lane.b32.xlu0 %v3226, 111
      %v3530 = vpop.permute.xlu0 %3529
      %3531 = vrot.lane.b32.xlu0 %v3227, 111
      %v3532 = vpop.permute.xlu0 %3531
      %3533 = vrot.lane.b32.xlu0 %v3228, 111
      %v3534 = vpop.permute.xlu0 %3533
      %3535 = vrot.lane.b32.xlu0 %v3229, 111
      %v3536 = vpop.permute.xlu0 %3535
      %3537 = vrot.lane.b32.xlu0 %v3230, 111
      %v3538 = vpop.permute.xlu0 %3537
      %3539 = vrot.lane.b32.xlu0 %v3231, 111
      %v3540 = vpop.permute.xlu0 %3539
      %3541 = vrot.lane.b32.xlu0 %v3232, 111
      %v3542 = vpop.permute.xlu0 %3541
      %v3543 = vsel %vm1139, %v3508, %v3510
      %v3544 = vsel %vm1139, %v3510, %v3512
      %v3545 = vsel %vm1139, %v3512, %v3514
      %v3546 = vsel %vm1139, %v3514, %v3516
      %v3547 = vsel %vm1139, %v3516, %v3518
      %v3548 = vsel %vm1139, %v3518, %v3520
      %v3549 = vsel %vm1139, %v3520, %v3522
      %v3550 = vsel %vm1139, %v3522, %v3524
      %v3551 = vsel %vm1139, %v3526, %v3528
      %v3552 = vsel %vm1139, %v3528, %v3530
      %v3553 = vsel %vm1139, %v3530, %v3532
      %v3554 = vsel %vm1139, %v3532, %v3534
      %v3555 = vsel %vm1139, %v3534, %v3536
      %v3556 = vsel %vm1139, %v3536, %v3538
      %v3557 = vsel %vm1139, %v3538, %v3540
      %v3558 = vsel %vm1139, %v3540, %v3542
      %3575 = vmatpush.msra.mxu0 %v3263
      %3576 = vmatpush.msra.mxu0 %v3261
      %3577 = vmatpush.msra.mxu0 %v3259
      %3578 = vmatpush.msra.mxu0 %v3257
      %3579 = vmatpush.msra.mxu0 %v3255
      %3580 = vmatpush.msra.mxu0 %v3253
      %3581 = vmatpush.msra.mxu0 %v3251
      %3582 = vmatpush.msra.mxu0 %v3249
      %3583 = vmatpush.msra.mxu0 %v3247
      %3584 = vmatpush.msra.mxu0 %v3245
      %3585 = vmatpush.msra.mxu0 %v3243
      %3586 = vmatpush.msra.mxu0 %v3241
      %3587 = vmatpush.msra.mxu0 %v3239
      %3588 = vmatpush.msra.mxu0 %v3237
      %3589 = vmatpush.msra.mxu0 %v3235
      %3590 = vmatpush.msra.mxu0 %v3233
      %3591 = vmatmul.f32.gmra.mxu0 %v3543
      %v3592 = vpop.f32.mrf.mxu0
      %v3593 = vadd.f32 0.0, %v3592
      %3594 = vmatmul.f32.gmra.mxu0 %v3551
      %v3595 = vpop.f32.mrf.mxu0
      %v3596 = vadd.f32 0.0, %v3595
      %3597 = vdwg.mxu0
      %3598 = vmatpush.msra.mxu0 %v3295
      %3599 = vmatpush.msra.mxu0 %v3293
      %3600 = vmatpush.msra.mxu0 %v3291
      %3601 = vmatpush.msra.mxu0 %v3289
      %3602 = vmatpush.msra.mxu0 %v3287
      %3603 = vmatpush.msra.mxu0 %v3285
      %3604 = vmatpush.msra.mxu0 %v3283
      %3605 = vmatpush.msra.mxu0 %v3281
      %3606 = vmatpush.msra.mxu0 %v3279
      %3607 = vmatpush.msra.mxu0 %v3277
      %3608 = vmatpush.msra.mxu0 %v3275
      %3609 = vmatpush.msra.mxu0 %v3273
      %3610 = vmatpush.msra.mxu0 %v3271
      %3611 = vmatpush.msra.mxu0 %v3269
      %3612 = vmatpush.msra.mxu0 %v3267
      %3613 = vmatpush.msra.mxu0 %v3265
      %3614 = vmatmul.f32.gmra.mxu0 %v3544
      %v3615 = vpop.f32.mrf.mxu0
      %v3616 = vadd.f32 %v3593, %v3615
      %3617 = vmatmul.f32.gmra.mxu0 %v3552
      %v3618 = vpop.f32.mrf.mxu0
      %v3619 = vadd.f32 %v3596, %v3618
      %3620 = vdwg.mxu0
      %3621 = vmatpush.msra.mxu0 %v3327
      %3622 = vmatpush.msra.mxu0 %v3325
      %3623 = vmatpush.msra.mxu0 %v3323
      %3624 = vmatpush.msra.mxu0 %v3321
      %3625 = vmatpush.msra.mxu0 %v3319
      %3626 = vmatpush.msra.mxu0 %v3317
      %3627 = vmatpush.msra.mxu0 %v3315
      %3628 = vmatpush.msra.mxu0 %v3313
      %3629 = vmatpush.msra.mxu0 %v3311
      %3630 = vmatpush.msra.mxu0 %v3309
      %3631 = vmatpush.msra.mxu0 %v3307
      %3632 = vmatpush.msra.mxu0 %v3305
      %3633 = vmatpush.msra.mxu0 %v3303
      %3634 = vmatpush.msra.mxu0 %v3301
      %3635 = vmatpush.msra.mxu0 %v3299
      %3636 = vmatpush.msra.mxu0 %v3297
      %3637 = vmatmul.f32.gmra.mxu0 %v3545
      %v3638 = vpop.f32.mrf.mxu0
      %v3639 = vadd.f32 %v3616, %v3638
      %3640 = vmatmul.f32.gmra.mxu0 %v3553
      %v3641 = vpop.f32.mrf.mxu0
      %v3642 = vadd.f32 %v3619, %v3641
      %3643 = vdwg.mxu0
      %3644 = vmatpush.msra.mxu0 %v3359
      %3645 = vmatpush.msra.mxu0 %v3357
      %3646 = vmatpush.msra.mxu0 %v3355
      %3647 = vmatpush.msra.mxu0 %v3353
      %3648 = vmatpush.msra.mxu0 %v3351
      %3649 = vmatpush.msra.mxu0 %v3349
      %3650 = vmatpush.msra.mxu0 %v3347
      %3651 = vmatpush.msra.mxu0 %v3345
      %3652 = vmatpush.msra.mxu0 %v3343
      %3653 = vmatpush.msra.mxu0 %v3341
      %3654 = vmatpush.msra.mxu0 %v3339
      %3655 = vmatpush.msra.mxu0 %v3337
      %3656 = vmatpush.msra.mxu0 %v3335
      %3657 = vmatpush.msra.mxu0 %v3333
      %3658 = vmatpush.msra.mxu0 %v3331
      %3659 = vmatpush.msra.mxu0 %v3329
      %3660 = vmatmul.f32.gmra.mxu0 %v3546
      %v3661 = vpop.f32.mrf.mxu0
      %v3662 = vadd.f32 %v3639, %v3661
      %3663 = vmatmul.f32.gmra.mxu0 %v3554
      %v3664 = vpop.f32.mrf.mxu0
      %v3665 = vadd.f32 %v3642, %v3664
      %3666 = vdwg.mxu0
      %3667 = vmatpush.msra.mxu0 %v3391
      %3668 = vmatpush.msra.mxu0 %v3389
      %3669 = vmatpush.msra.mxu0 %v3387
      %3670 = vmatpush.msra.mxu0 %v3385
      %3671 = vmatpush.msra.mxu0 %v3383
      %3672 = vmatpush.msra.mxu0 %v3381
      %3673 = vmatpush.msra.mxu0 %v3379
      %3674 = vmatpush.msra.mxu0 %v3377
      %3675 = vmatpush.msra.mxu0 %v3375
      %3676 = vmatpush.msra.mxu0 %v3373
      %3677 = vmatpush.msra.mxu0 %v3371
      %3678 = vmatpush.msra.mxu0 %v3369
      %3679 = vmatpush.msra.mxu0 %v3367
      %3680 = vmatpush.msra.mxu0 %v3365
      %3681 = vmatpush.msra.mxu0 %v3363
      %3682 = vmatpush.msra.mxu0 %v3361
      %3683 = vmatmul.f32.gmra.mxu0 %v3547
      %v3684 = vpop.f32.mrf.mxu0
      %v3685 = vadd.f32 %v3662, %v3684
      %3686 = vmatmul.f32.gmra.mxu0 %v3555
      %v3687 = vpop.f32.mrf.mxu0
      %v3688 = vadd.f32 %v3665, %v3687
      %3689 = vdwg.mxu0
      %3690 = vmatpush.msra.mxu0 %v3423
      %3691 = vmatpush.msra.mxu0 %v3421
      %3692 = vmatpush.msra.mxu0 %v3419
      %3693 = vmatpush.msra.mxu0 %v3417
      %3694 = vmatpush.msra.mxu0 %v3415
      %3695 = vmatpush.msra.mxu0 %v3413
      %3696 = vmatpush.msra.mxu0 %v3411
      %3697 = vmatpush.msra.mxu0 %v3409
      %3698 = vmatpush.msra.mxu0 %v3407
      %3699 = vmatpush.msra.mxu0 %v3405
      %3700 = vmatpush.msra.mxu0 %v3403
      %3701 = vmatpush.msra.mxu0 %v3401
      %3702 = vmatpush.msra.mxu0 %v3399
      %3703 = vmatpush.msra.mxu0 %v3397
      %3704 = vmatpush.msra.mxu0 %v3395
      %3705 = vmatpush.msra.mxu0 %v3393
      %3706 = vmatmul.f32.gmra.mxu0 %v3548
      %v3707 = vpop.f32.mrf.mxu0
      %v3708 = vadd.f32 %v3685, %v3707
      %3709 = vmatmul.f32.gmra.mxu0 %v3556
      %v3710 = vpop.f32.mrf.mxu0
      %v3711 = vadd.f32 %v3688, %v3710
      %3712 = vdwg.mxu0
      %3713 = vmatpush.msra.mxu0 %v3455
      %3714 = vmatpush.msra.mxu0 %v3453
      %3715 = vmatpush.msra.mxu0 %v3451
      %3716 = vmatpush.msra.mxu0 %v3449
      %3717 = vmatpush.msra.mxu0 %v3447
      %3718 = vmatpush.msra.mxu0 %v3445
      %3719 = vmatpush.msra.mxu0 %v3443
      %3720 = vmatpush.msra.mxu0 %v3441
      %3721 = vmatpush.msra.mxu0 %v3439
      %3722 = vmatpush.msra.mxu0 %v3437
      %3723 = vmatpush.msra.mxu0 %v3435
      %3724 = vmatpush.msra.mxu0 %v3433
      %3725 = vmatpush.msra.mxu0 %v3431
      %3726 = vmatpush.msra.mxu0 %v3429
      %3727 = vmatpush.msra.mxu0 %v3427
      %3728 = vmatpush.msra.mxu0 %v3425
      %3729 = vmatmul.f32.gmra.mxu0 %v3549
      %v3730 = vpop.f32.mrf.mxu0
      %v3731 = vadd.f32 %v3708, %v3730
      %3732 = vmatmul.f32.gmra.mxu0 %v3557
      %v3733 = vpop.f32.mrf.mxu0
      %v3734 = vadd.f32 %v3711, %v3733
      %3735 = vdwg.mxu0
      %3736 = vmatpush.msra.mxu0 %v3487
      %3737 = vmatpush.msra.mxu0 %v3485
      %3738 = vmatpush.msra.mxu0 %v3483
      %3739 = vmatpush.msra.mxu0 %v3481
      %3740 = vmatpush.msra.mxu0 %v3479
      %3741 = vmatpush.msra.mxu0 %v3477
      %3742 = vmatpush.msra.mxu0 %v3475
      %3743 = vmatpush.msra.mxu0 %v3473
      %3744 = vmatpush.msra.mxu0 %v3471
      %3745 = vmatpush.msra.mxu0 %v3469
      %3746 = vmatpush.msra.mxu0 %v3467
      %3747 = vmatpush.msra.mxu0 %v3465
      %3748 = vmatpush.msra.mxu0 %v3463
      %3749 = vmatpush.msra.mxu0 %v3461
      %3750 = vmatpush.msra.mxu0 %v3459
      %3751 = vmatpush.msra.mxu0 %v3457
      %3752 = vmatmul.f32.gmra.mxu0 %v3550
      %v3753 = vpop.f32.mrf.mxu0
      %v3754 = vadd.f32 %v3731, %v3753
      %3755 = vmatmul.f32.gmra.mxu0 %v3558
      %v3756 = vpop.f32.mrf.mxu0
      %v3757 = vadd.f32 %v3734, %v3756
      %3758 = vdwg.mxu0
      %3759 = vmatpush.msra.mxu0 %v3264
      %3760 = vmatpush.msra.mxu0 %v3262
      %3761 = vmatpush.msra.mxu0 %v3260
      %3762 = vmatpush.msra.mxu0 %v3258
      %3763 = vmatpush.msra.mxu0 %v3256
      %3764 = vmatpush.msra.mxu0 %v3254
      %3765 = vmatpush.msra.mxu0 %v3252
      %3766 = vmatpush.msra.mxu0 %v3250
      %3767 = vmatpush.msra.mxu0 %v3248
      %3768 = vmatpush.msra.mxu0 %v3246
      %3769 = vmatpush.msra.mxu0 %v3244
      %3770 = vmatpush.msra.mxu0 %v3242
      %3771 = vmatpush.msra.mxu0 %v3240
      %3772 = vmatpush.msra.mxu0 %v3238
      %3773 = vmatpush.msra.mxu0 %v3236
      %3774 = vmatpush.msra.mxu0 %v3234
      %3775 = vmatmul.f32.gmra.mxu0 %v3543
      %v3776 = vpop.f32.mrf.mxu0
      %v3777 = vadd.f32 0.0, %v3776
      %3778 = vmatmul.f32.gmra.mxu0 %v3551
      %v3779 = vpop.f32.mrf.mxu0
      %v3780 = vadd.f32 0.0, %v3779
      %3781 = vdwg.mxu0
      %3782 = vmatpush.msra.mxu0 %v3296
      %3783 = vmatpush.msra.mxu0 %v3294
      %3784 = vmatpush.msra.mxu0 %v3292
      %3785 = vmatpush.msra.mxu0 %v3290
      %3786 = vmatpush.msra.mxu0 %v3288
      %3787 = vmatpush.msra.mxu0 %v3286
      %3788 = vmatpush.msra.mxu0 %v3284
      %3789 = vmatpush.msra.mxu0 %v3282
      %3790 = vmatpush.msra.mxu0 %v3280
      %3791 = vmatpush.msra.mxu0 %v3278
      %3792 = vmatpush.msra.mxu0 %v3276
      %3793 = vmatpush.msra.mxu0 %v3274
      %3794 = vmatpush.msra.mxu0 %v3272
      %3795 = vmatpush.msra.mxu0 %v3270
      %3796 = vmatpush.msra.mxu0 %v3268
      %3797 = vmatpush.msra.mxu0 %v3266
      %3798 = vmatmul.f32.gmra.mxu0 %v3544
      %v3799 = vpop.f32.mrf.mxu0
      %v3800 = vadd.f32 %v3777, %v3799
      %3801 = vmatmul.f32.gmra.mxu0 %v3552
      %v3802 = vpop.f32.mrf.mxu0
      %v3803 = vadd.f32 %v3780, %v3802
      %3804 = vdwg.mxu0
      %3805 = vmatpush.msra.mxu0 %v3328
      %3806 = vmatpush.msra.mxu0 %v3326
      %3807 = vmatpush.msra.mxu0 %v3324
      %3808 = vmatpush.msra.mxu0 %v3322
      %3809 = vmatpush.msra.mxu0 %v3320
      %3810 = vmatpush.msra.mxu0 %v3318
      %3811 = vmatpush.msra.mxu0 %v3316
      %3812 = vmatpush.msra.mxu0 %v3314
      %3813 = vmatpush.msra.mxu0 %v3312
      %3814 = vmatpush.msra.mxu0 %v3310
      %3815 = vmatpush.msra.mxu0 %v3308
      %3816 = vmatpush.msra.mxu0 %v3306
      %3817 = vmatpush.msra.mxu0 %v3304
      %3818 = vmatpush.msra.mxu0 %v3302
      %3819 = vmatpush.msra.mxu0 %v3300
      %3820 = vmatpush.msra.mxu0 %v3298
      %3821 = vmatmul.f32.gmra.mxu0 %v3545
      %v3822 = vpop.f32.mrf.mxu0
      %v3823 = vadd.f32 %v3800, %v3822
      %3824 = vmatmul.f32.gmra.mxu0 %v3553
      %v3825 = vpop.f32.mrf.mxu0
      %v3826 = vadd.f32 %v3803, %v3825
      %3827 = vdwg.mxu0
      %3828 = vmatpush.msra.mxu0 %v3360
      %3829 = vmatpush.msra.mxu0 %v3358
      %3830 = vmatpush.msra.mxu0 %v3356
      %3831 = vmatpush.msra.mxu0 %v3354
      %3832 = vmatpush.msra.mxu0 %v3352
      %3833 = vmatpush.msra.mxu0 %v3350
      %3834 = vmatpush.msra.mxu0 %v3348
      %3835 = vmatpush.msra.mxu0 %v3346
      %3836 = vmatpush.msra.mxu0 %v3344
      %3837 = vmatpush.msra.mxu0 %v3342
      %3838 = vmatpush.msra.mxu0 %v3340
      %3839 = vmatpush.msra.mxu0 %v3338
      %3840 = vmatpush.msra.mxu0 %v3336
      %3841 = vmatpush.msra.mxu0 %v3334
      %3842 = vmatpush.msra.mxu0 %v3332
      %3843 = vmatpush.msra.mxu0 %v3330
      %3844 = vmatmul.f32.gmra.mxu0 %v3546
      %v3845 = vpop.f32.mrf.mxu0
      %v3846 = vadd.f32 %v3823, %v3845
      %3847 = vmatmul.f32.gmra.mxu0 %v3554
      %v3848 = vpop.f32.mrf.mxu0
      %v3849 = vadd.f32 %v3826, %v3848
      %3850 = vdwg.mxu0
      %3851 = vmatpush.msra.mxu0 %v3392
      %3852 = vmatpush.msra.mxu0 %v3390
      %3853 = vmatpush.msra.mxu0 %v3388
      %3854 = vmatpush.msra.mxu0 %v3386
      %3855 = vmatpush.msra.mxu0 %v3384
      %3856 = vmatpush.msra.mxu0 %v3382
      %3857 = vmatpush.msra.mxu0 %v3380
      %3858 = vmatpush.msra.mxu0 %v3378
      %3859 = vmatpush.msra.mxu0 %v3376
      %3860 = vmatpush.msra.mxu0 %v3374
      %3861 = vmatpush.msra.mxu0 %v3372
      %3862 = vmatpush.msra.mxu0 %v3370
      %3863 = vmatpush.msra.mxu0 %v3368
      %3864 = vmatpush.msra.mxu0 %v3366
      %3865 = vmatpush.msra.mxu0 %v3364
      %3866 = vmatpush.msra.mxu0 %v3362
      %3867 = vmatmul.f32.gmra.mxu0 %v3547
      %v3868 = vpop.f32.mrf.mxu0
      %v3869 = vadd.f32 %v3846, %v3868
      %3870 = vmatmul.f32.gmra.mxu0 %v3555
      %v3871 = vpop.f32.mrf.mxu0
      %v3872 = vadd.f32 %v3849, %v3871
      %3873 = vdwg.mxu0
      %3874 = vmatpush.msra.mxu0 %v3424
      %3875 = vmatpush.msra.mxu0 %v3422
      %3876 = vmatpush.msra.mxu0 %v3420
      %3877 = vmatpush.msra.mxu0 %v3418
      %3878 = vmatpush.msra.mxu0 %v3416
      %3879 = vmatpush.msra.mxu0 %v3414
      %3880 = vmatpush.msra.mxu0 %v3412
      %3881 = vmatpush.msra.mxu0 %v3410
      %3882 = vmatpush.msra.mxu0 %v3408
      %3883 = vmatpush.msra.mxu0 %v3406
      %3884 = vmatpush.msra.mxu0 %v3404
      %3885 = vmatpush.msra.mxu0 %v3402
      %3886 = vmatpush.msra.mxu0 %v3400
      %3887 = vmatpush.msra.mxu0 %v3398
      %3888 = vmatpush.msra.mxu0 %v3396
      %3889 = vmatpush.msra.mxu0 %v3394
      %3890 = vmatmul.f32.gmra.mxu0 %v3548
      %v3891 = vpop.f32.mrf.mxu0
      %v3892 = vadd.f32 %v3869, %v3891
      %3893 = vmatmul.f32.gmra.mxu0 %v3556
      %v3894 = vpop.f32.mrf.mxu0
      %v3895 = vadd.f32 %v3872, %v3894
      %3896 = vdwg.mxu0
      %3897 = vmatpush.msra.mxu0 %v3456
      %3898 = vmatpush.msra.mxu0 %v3454
      %3899 = vmatpush.msra.mxu0 %v3452
      %3900 = vmatpush.msra.mxu0 %v3450
      %3901 = vmatpush.msra.mxu0 %v3448
      %3902 = vmatpush.msra.mxu0 %v3446
      %3903 = vmatpush.msra.mxu0 %v3444
      %3904 = vmatpush.msra.mxu0 %v3442
      %3905 = vmatpush.msra.mxu0 %v3440
      %3906 = vmatpush.msra.mxu0 %v3438
      %3907 = vmatpush.msra.mxu0 %v3436
      %3908 = vmatpush.msra.mxu0 %v3434
      %3909 = vmatpush.msra.mxu0 %v3432
      %3910 = vmatpush.msra.mxu0 %v3430
      %3911 = vmatpush.msra.mxu0 %v3428
      %3912 = vmatpush.msra.mxu0 %v3426
      %3913 = vmatmul.f32.gmra.mxu0 %v3549
      %v3914 = vpop.f32.mrf.mxu0
      %v3915 = vadd.f32 %v3892, %v3914
      %3916 = vmatmul.f32.gmra.mxu0 %v3557
      %v3917 = vpop.f32.mrf.mxu0
      %v3918 = vadd.f32 %v3895, %v3917
      %3919 = vdwg.mxu0
      %3920 = vmatpush.msra.mxu0 %v3488
      %3921 = vmatpush.msra.mxu0 %v3486
      %3922 = vmatpush.msra.mxu0 %v3484
      %3923 = vmatpush.msra.mxu0 %v3482
      %3924 = vmatpush.msra.mxu0 %v3480
      %3925 = vmatpush.msra.mxu0 %v3478
      %3926 = vmatpush.msra.mxu0 %v3476
      %3927 = vmatpush.msra.mxu0 %v3474
      %3928 = vmatpush.msra.mxu0 %v3472
      %3929 = vmatpush.msra.mxu0 %v3470
      %3930 = vmatpush.msra.mxu0 %v3468
      %3931 = vmatpush.msra.mxu0 %v3466
      %3932 = vmatpush.msra.mxu0 %v3464
      %3933 = vmatpush.msra.mxu0 %v3462
      %3934 = vmatpush.msra.mxu0 %v3460
      %3935 = vmatpush.msra.mxu0 %v3458
      %3936 = vmatmul.f32.gmra.mxu0 %v3550
      %v3937 = vpop.f32.mrf.mxu0
      %v3938 = vadd.f32 %v3915, %v3937
      %3939 = vmatmul.f32.gmra.mxu0 %v3558
      %v3940 = vpop.f32.mrf.mxu0
      %v3941 = vadd.f32 %v3918, %v3940
      %3942 = vdwg.mxu0
      %3947 = vrot.lane.b32.xlu0 %v3754, 9
      %v3948 = vpop.permute.xlu0 %3947
      %3949 = vrot.lane.b32.xlu0 %v3938, 9
      %v3950 = vpop.permute.xlu0 %3949
      %3951 = vrot.lane.b32.xlu0 %v3757, 9
      %v3952 = vpop.permute.xlu0 %3951
      %3953 = vrot.lane.b32.xlu0 %v3941, 9
      %v3954 = vpop.permute.xlu0 %3953
      %v3955 = vsel %vm455, %v3948, %v3950
      %v3956 = vsel %vm455, %v3952, %v3954
      %vm3963 = vcmask 1047624
      %3964 = vst.msk [vmem:[#allocation3] sm:$0xff] %vm3963, %v3948
      %3965 = vst [vmem:[#allocation3 + $0x8] sm:$0xff] %v3955
      %3966 = vst.msk [vmem:[#allocation3 + $0x10] sm:$0xff] %vm455, %v3950
      %3967 = vst.msk [vmem:[#allocation3 + $0x18] sm:$0xff] %vm3963, %v3952
      %3968 = vst [vmem:[#allocation3 + $0x20] sm:$0xff] %v3956
      %3969 = vst.msk [vmem:[#allocation3 + $0x28] sm:$0xff] %vm455, %v3954
      %v3970 = vld [vmem:[#allocation3] sm:$0xff]
      %v3971 = vld [vmem:[#allocation3 + $0x8] sm:$0xff]
      %v3972 = vld [vmem:[#allocation3 + $0x18] sm:$0xff]
      %v3973 = vld [vmem:[#allocation3 + $0x20] sm:$0xff]
      %v3974 = vperm.slane %v481, 0
      %v3975 = vperm.slane %v482, 0
      %v3976 = vmul.f32 %v3970, %v3974
      %v3977 = vmul.f32 %v3971, %v3975
      %v3978 = vmul.f32 %v3972, %v3974
      %v3979 = vmul.f32 %v3973, %v3975
      %v3980 = vld [vmem:[#allocation3 + $0x10] sm:$0xff]
      %v3981 = vld [vmem:[#allocation3 + $0x28] sm:$0xff]
      %v3982 = vperm.slane %v481, 1
      %v3983 = vperm.slane %v482, 1
      %3986 = vrot.lane.b32.xlu0 %v3982, 1
      %v3987 = vpop.permute.xlu0 %3986
      %3988 = vrot.lane.b32.xlu0 %v3983, 1
      %v3989 = vpop.permute.xlu0 %3988
      %v3990 = vsel %vm606, %v3987, %v3989
      %v3994 = vmul.f32 %v3970, %v3987
      %v3995 = vmul.f32 %v3971, %v3990
      %v3996 = vmul.f32 %v3980, %v3989
      %v3997 = vmul.f32 %v3972, %v3987
      %v3998 = vmul.f32 %v3973, %v3990
      %v3999 = vmul.f32 %v3981, %v3989
      %v4000 = vperm.slane %v481, 2
      %v4001 = vperm.slane %v482, 2
      %4004 = vrot.lane.b32.xlu0 %v4000, 2
      %v4005 = vpop.permute.xlu0 %4004
      %4006 = vrot.lane.b32.xlu0 %v4001, 2
      %v4007 = vpop.permute.xlu0 %4006
      %v4008 = vsel %vm664, %v4005, %v4007
      %v4012 = vmul.f32 %v3970, %v4005
      %v4013 = vmul.f32 %v3971, %v4008
      %v4014 = vmul.f32 %v3980, %v4007
      %v4015 = vmul.f32 %v3972, %v4005
      %v4016 = vmul.f32 %v3973, %v4008
      %v4017 = vmul.f32 %v3981, %v4007
      %v4018 = vperm.slane %v481, 3
      %v4019 = vperm.slane %v482, 3
      %4022 = vrot.lane.b32.xlu0 %v4018, 8
      %v4023 = vpop.permute.xlu0 %4022
      %4024 = vrot.lane.b32.xlu0 %v4019, 8
      %v4025 = vpop.permute.xlu0 %4024
      %vm4026 = vcmask 64512
      %v4027 = vsel %vm4026, %v4023, %v4025
      %v4031 = vmul.f32 %v3970, %v4023
      %v4032 = vmul.f32 %v3971, %v4027
      %v4033 = vmul.f32 %v3980, %v4025
      %v4034 = vmul.f32 %v3972, %v4023
      %v4035 = vmul.f32 %v3973, %v4027
      %v4036 = vmul.f32 %v3981, %v4025
      %v4037 = vperm.slane %v481, 5
      %v4038 = vperm.slane %v482, 5
      %4041 = vrot.lane.b32.xlu0 %v4037, 10
      %v4042 = vpop.permute.xlu0 %4041
      %4043 = vrot.lane.b32.xlu0 %v4038, 10
      %v4044 = vpop.permute.xlu0 %4043
      %vm4045 = vcmask 80896
      %v4046 = vsel %vm4045, %v4042, %v4044
      %v4050 = vmul.f32 %v3970, %v4042
      %v4051 = vmul.f32 %v3971, %v4046
      %v4052 = vmul.f32 %v3980, %v4044
      %v4053 = vmul.f32 %v3972, %v4042
      %v4054 = vmul.f32 %v3973, %v4046
      %v4055 = vmul.f32 %v3981, %v4044
      %v4056 = vperm.slane %v481, 6
      %v4057 = vperm.slane %v482, 6
      %4060 = vrot.lane.b32.xlu0 %v4056, 16
      %v4061 = vpop.permute.xlu0 %4060
      %4062 = vrot.lane.b32.xlu0 %v4057, 16
      %v4063 = vpop.permute.xlu0 %4062
      %v4064 = vsel %vm722, %v4061, %v4063
      %v4068 = vmul.f32 %v3970, %v4061
      %v4069 = vmul.f32 %v3971, %v4064
      %v4070 = vmul.f32 %v3980, %v4063
      %v4071 = vmul.f32 %v3972, %v4061
      %v4072 = vmul.f32 %v3973, %v4064
      %v4073 = vmul.f32 %v3981, %v4063
      %v4074 = vperm.slane %v481, 7
      %v4075 = vperm.slane %v482, 7
      %4078 = vrot.lane.b32.xlu0 %v4074, 17
      %v4079 = vpop.permute.xlu0 %4078
      %4080 = vrot.lane.b32.xlu0 %v4075, 17
      %v4081 = vpop.permute.xlu0 %4080
      %v4082 = vsel %vm449, %v4079, %v4081
      %v4086 = vmul.f32 %v3970, %v4079
      %v4087 = vmul.f32 %v3971, %v4082
      %v4088 = vmul.f32 %v3980, %v4081
      %v4089 = vmul.f32 %v3972, %v4079
      %v4090 = vmul.f32 %v3973, %v4082
      %v4091 = vmul.f32 %v3981, %v4081
      %v4092 = vperm.slane %v483, 0
      %v4093 = vperm.slane %v484, 0
      %4096 = vrot.lane.b32.xlu0 %v4092, 18
      %v4097 = vpop.permute.xlu0 %4096
      %4098 = vrot.lane.b32.xlu0 %v4093, 18
      %v4099 = vpop.permute.xlu0 %4098
      %v4100 = vsel %vm780, %v4097, %v4099
      %v4104 = vmul.f32 %v3970, %v4097
      %v4105 = vmul.f32 %v3971, %v4100
      %v4106 = vmul.f32 %v3980, %v4099
      %v4107 = vmul.f32 %v3972, %v4097
      %v4108 = vmul.f32 %v3973, %v4100
      %v4109 = vmul.f32 %v3981, %v4099
      %4116 = vrot.lane.b32.xlu0 %v3994, 127
      %v4117 = vpop.permute.xlu0 %4116
      %4118 = vrot.lane.b32.xlu0 %v3995, 127
      %v4119 = vpop.permute.xlu0 %4118
      %4120 = vrot.lane.b32.xlu0 %v3996, 127
      %v4121 = vpop.permute.xlu0 %4120
      %4122 = vrot.lane.b32.xlu0 %v3997, 127
      %v4123 = vpop.permute.xlu0 %4122
      %4124 = vrot.lane.b32.xlu0 %v3998, 127
      %v4125 = vpop.permute.xlu0 %4124
      %4126 = vrot.lane.b32.xlu0 %v3999, 127
      %v4127 = vpop.permute.xlu0 %4126
      %v4128 = vsel %vm1007, %v4117, %v4119
      %v4129 = vsel %vm1007, %v4119, %v4121
      %v4130 = vsel %vm1007, %v4123, %v4125
      %v4131 = vsel %vm1007, %v4125, %v4127
      %4142 = vrot.lane.b32.xlu0 %v4012, 126
      %v4143 = vpop.permute.xlu0 %4142
      %4144 = vrot.lane.b32.xlu0 %v4013, 126
      %v4145 = vpop.permute.xlu0 %4144
      %4146 = vrot.lane.b32.xlu0 %v4014, 126
      %v4147 = vpop.permute.xlu0 %4146
      %4148 = vrot.lane.b32.xlu0 %v4015, 126
      %v4149 = vpop.permute.xlu0 %4148
      %4150 = vrot.lane.b32.xlu0 %v4016, 126
      %v4151 = vpop.permute.xlu0 %4150
      %4152 = vrot.lane.b32.xlu0 %v4017, 126
      %v4153 = vpop.permute.xlu0 %4152
      %v4154 = vsel %vm1051, %v4143, %v4145
      %v4155 = vsel %vm1051, %v4145, %v4147
      %v4156 = vsel %vm1051, %v4149, %v4151
      %v4157 = vsel %vm1051, %v4151, %v4153
      %4168 = vrot.lane.b32.xlu0 %v4031, 120
      %v4169 = vpop.permute.xlu0 %4168
      %4170 = vrot.lane.b32.xlu0 %v4032, 120
      %v4171 = vpop.permute.xlu0 %4170
      %4172 = vrot.lane.b32.xlu0 %v4033, 120
      %v4173 = vpop.permute.xlu0 %4172
      %4174 = vrot.lane.b32.xlu0 %v4034, 120
      %v4175 = vpop.permute.xlu0 %4174
      %4176 = vrot.lane.b32.xlu0 %v4035, 120
      %v4177 = vpop.permute.xlu0 %4176
      %4178 = vrot.lane.b32.xlu0 %v4036, 120
      %v4179 = vpop.permute.xlu0 %4178
      %vm4180 = vcmask 982016
      %v4181 = vsel %vm4180, %v4169, %v4171
      %v4182 = vsel %vm4180, %v4171, %v4173
      %v4183 = vsel %vm4180, %v4175, %v4177
      %v4184 = vsel %vm4180, %v4177, %v4179
      %4195 = vrot.lane.b32.xlu0 %v3970, 119
      %v4196 = vpop.permute.xlu0 %4195
      %4197 = vrot.lane.b32.xlu0 %v3971, 119
      %v4198 = vpop.permute.xlu0 %4197
      %4199 = vrot.lane.b32.xlu0 %v3980, 119
      %v4200 = vpop.permute.xlu0 %4199
      %4201 = vrot.lane.b32.xlu0 %v3972, 119
      %v4202 = vpop.permute.xlu0 %4201
      %4203 = vrot.lane.b32.xlu0 %v3973, 119
      %v4204 = vpop.permute.xlu0 %4203
      %4205 = vrot.lane.b32.xlu0 %v3981, 119
      %v4206 = vpop.permute.xlu0 %4205
      %vm4207 = vcmask 973824
      %v4208 = vsel %vm4207, %v4196, %v4198
      %v4209 = vsel %vm4207, %v4198, %v4200
      %v4210 = vsel %vm4207, %v4202, %v4204
      %v4211 = vsel %vm4207, %v4204, %v4206
      %4222 = vrot.lane.b32.xlu0 %v4050, 118
      %v4223 = vpop.permute.xlu0 %4222
      %4224 = vrot.lane.b32.xlu0 %v4051, 118
      %v4225 = vpop.permute.xlu0 %4224
      %4226 = vrot.lane.b32.xlu0 %v4052, 118
      %v4227 = vpop.permute.xlu0 %4226
      %4228 = vrot.lane.b32.xlu0 %v4053, 118
      %v4229 = vpop.permute.xlu0 %4228
      %4230 = vrot.lane.b32.xlu0 %v4054, 118
      %v4231 = vpop.permute.xlu0 %4230
      %4232 = vrot.lane.b32.xlu0 %v4055, 118
      %v4233 = vpop.permute.xlu0 %4232
      %vm4234 = vcmask 965632
      %v4235 = vsel %vm4234, %v4223, %v4225
      %v4236 = vsel %vm4234, %v4225, %v4227
      %v4237 = vsel %vm4234, %v4229, %v4231
      %v4238 = vsel %vm4234, %v4231, %v4233
      %4249 = vrot.lane.b32.xlu0 %v4068, 112
      %v4250 = vpop.permute.xlu0 %4249
      %4251 = vrot.lane.b32.xlu0 %v4069, 112
      %v4252 = vpop.permute.xlu0 %4251
      %4253 = vrot.lane.b32.xlu0 %v4070, 112
      %v4254 = vpop.permute.xlu0 %4253
      %4255 = vrot.lane.b32.xlu0 %v4071, 112
      %v4256 = vpop.permute.xlu0 %4255
      %4257 = vrot.lane.b32.xlu0 %v4072, 112
      %v4258 = vpop.permute.xlu0 %4257
      %4259 = vrot.lane.b32.xlu0 %v4073, 112
      %v4260 = vpop.permute.xlu0 %4259
      %v4261 = vsel %vm1095, %v4250, %v4252
      %v4262 = vsel %vm1095, %v4252, %v4254
      %v4263 = vsel %vm1095, %v4256, %v4258
      %v4264 = vsel %vm1095, %v4258, %v4260
      %4275 = vrot.lane.b32.xlu0 %v4086, 111
      %v4276 = vpop.permute.xlu0 %4275
      %4277 = vrot.lane.b32.xlu0 %v4087, 111
      %v4278 = vpop.permute.xlu0 %4277
      %4279 = vrot.lane.b32.xlu0 %v4088, 111
      %v4280 = vpop.permute.xlu0 %4279
      %4281 = vrot.lane.b32.xlu0 %v4089, 111
      %v4282 = vpop.permute.xlu0 %4281
      %4283 = vrot.lane.b32.xlu0 %v4090, 111
      %v4284 = vpop.permute.xlu0 %4283
      %4285 = vrot.lane.b32.xlu0 %v4091, 111
      %v4286 = vpop.permute.xlu0 %4285
      %v4287 = vsel %vm1139, %v4276, %v4278
      %v4288 = vsel %vm1139, %v4278, %v4280
      %v4289 = vsel %vm1139, %v4282, %v4284
      %v4290 = vsel %vm1139, %v4284, %v4286
      %4301 = vrot.lane.b32.xlu0 %v4104, 110
      %v4302 = vpop.permute.xlu0 %4301
      %4303 = vrot.lane.b32.xlu0 %v4105, 110
      %v4304 = vpop.permute.xlu0 %4303
      %4305 = vrot.lane.b32.xlu0 %v4106, 110
      %v4306 = vpop.permute.xlu0 %4305
      %4307 = vrot.lane.b32.xlu0 %v4107, 110
      %v4308 = vpop.permute.xlu0 %4307
      %4309 = vrot.lane.b32.xlu0 %v4108, 110
      %v4310 = vpop.permute.xlu0 %4309
      %4311 = vrot.lane.b32.xlu0 %v4109, 110
      %v4312 = vpop.permute.xlu0 %4311
      %v4313 = vsel %vm1183, %v4302, %v4304
      %v4314 = vsel %vm1183, %v4304, %v4306
      %v4315 = vsel %vm1183, %v4308, %v4310
      %v4316 = vsel %vm1183, %v4310, %v4312
      %v4321 = vld [vmem:[%s5] sm:$0xff]
      %v4322 = vld [vmem:[%s5 + $0x8] sm:$0xff]
      %v4323 = vld [vmem:[%s5 + $0x10] sm:$0xff]
      %v4324 = vld [vmem:[%s5 + $0x18] sm:$0xff]
      %v4325 = vld [vmem:[%s5 + $0x20] sm:$0xff]
      %v4326 = vld [vmem:[%s5 + $0x28] sm:$0xff]
      %v4327 = vld [vmem:[%s5 + $0x30] sm:$0xff]
      %v4328 = vld [vmem:[%s5 + $0x38] sm:$0xff]
      %v4329 = vld [vmem:[%s6] sm:$0xff]
      %v4330 = vld [vmem:[%s6 + $0x8] sm:$0xff]
      %v4331 = vld [vmem:[%s6 + $0x10] sm:$0xff]
      %v4332 = vld [vmem:[%s6 + $0x18] sm:$0xff]
      %4334 = vset.pattern.permute.xlu0 0
      %4335 = vperm.xlu0 %4334, %v4329
      %v4336 = vpop.permute.xlu0 %4335
      %4339 = vset.pattern.permute.xlu0 0
      %4340 = vperm.xlu0 %4339, %v4330
      %v4341 = vpop.permute.xlu0 %4340
      %4344 = vset.pattern.permute.xlu0 0
      %4345 = vperm.xlu0 %4344, %v4331
      %v4346 = vpop.permute.xlu0 %4345
      %4349 = vset.pattern.permute.xlu0 0
      %4350 = vperm.xlu0 %4349, %v4332
      %v4351 = vpop.permute.xlu0 %4350
      %v4354 = vsel %vm722, %v4322, 0
      %v4357 = vsel %vm722, %v4324, 0
      %v4360 = vsel %vm722, %v4326, 0
      %v4363 = vsel %vm722, %v4328, 0
      %4365 = vmatpush.msra.mxu0 %v4289
      %4366 = vmatpush.msra.mxu0 %v4287
      %4367 = vmatpush.msra.mxu0 %v4263
      %4368 = vmatpush.msra.mxu0 %v4261
      %4369 = vmatpush.msra.mxu0 %v4237
      %4370 = vmatpush.msra.mxu0 %v4235
      %4371 = vmatpush.msra.mxu0 %v4210
      %4372 = vmatpush.msra.mxu0 %v4208
      %4373 = vmatpush.msra.mxu0 %v4183
      %4374 = vmatpush.msra.mxu0 %v4181
      %4375 = vmatpush.msra.mxu0 %v4156
      %4376 = vmatpush.msra.mxu0 %v4154
      %4377 = vmatpush.msra.mxu0 %v4130
      %4378 = vmatpush.msra.mxu0 %v4128
      %4379 = vmatpush.msra.mxu0 %v3978
      %4380 = vmatpush.msra.mxu0 %v3976
      %4381 = vmatmul.f32.gmra.mxu0 %v4321
      %v4382 = vpop.f32.mrf.mxu0
      %v4383 = vadd.f32 %v4336, %v4382
      %4384 = vmatmul.f32.gmra.mxu0 %v4323
      %v4385 = vpop.f32.mrf.mxu0
      %v4386 = vadd.f32 %v4341, %v4385
      %4387 = vmatmul.f32.gmra.mxu0 %v4325
      %v4388 = vpop.f32.mrf.mxu0
      %v4389 = vadd.f32 %v4346, %v4388
      %4390 = vmatmul.f32.gmra.mxu0 %v4327
      %v4391 = vpop.f32.mrf.mxu0
      %v4392 = vadd.f32 %v4351, %v4391
      %4393 = vdwg.mxu0
      %4394 = vmatpush.msra.mxu0 0.0
      %4395 = vmatpush.msra.mxu0 0.0
      %4396 = vmatpush.msra.mxu0 0.0
      %4397 = vmatpush.msra.mxu0 0.0
      %4398 = vmatpush.msra.mxu0 0.0
      %4399 = vmatpush.msra.mxu0 0.0
      %4400 = vmatpush.msra.mxu0 0.0
      %4401 = vmatpush.msra.mxu0 0.0
      %4402 = vmatpush.msra.mxu0 0.0
      %4403 = vmatpush.msra.mxu0 0.0
      %4404 = vmatpush.msra.mxu0 0.0
      %4405 = vmatpush.msra.mxu0 0.0
      %4406 = vmatpush.msra.mxu0 0.0
      %4407 = vmatpush.msra.mxu0 0.0
      %4408 = vmatpush.msra.mxu0 %v4315
      %4409 = vmatpush.msra.mxu0 %v4313
      %4410 = vmatmul.f32.gmra.mxu0 %v4354
      %v4411 = vpop.f32.mrf.mxu0
      %v4412 = vadd.f32 %v4383, %v4411
      %4413 = vmatmul.f32.gmra.mxu0 %v4357
      %v4414 = vpop.f32.mrf.mxu0
      %v4415 = vadd.f32 %v4386, %v4414
      %4416 = vmatmul.f32.gmra.mxu0 %v4360
      %v4417 = vpop.f32.mrf.mxu0
      %v4418 = vadd.f32 %v4389, %v4417
      %4419 = vmatmul.f32.gmra.mxu0 %v4363
      %v4420 = vpop.f32.mrf.mxu0
      %v4421 = vadd.f32 %v4392, %v4420
      %4422 = vdwg.mxu0
      %4423 = vmatpush.msra.mxu0 %v4290
      %4424 = vmatpush.msra.mxu0 %v4288
      %4425 = vmatpush.msra.mxu0 %v4264
      %4426 = vmatpush.msra.mxu0 %v4262
      %4427 = vmatpush.msra.mxu0 %v4238
      %4428 = vmatpush.msra.mxu0 %v4236
      %4429 = vmatpush.msra.mxu0 %v4211
      %4430 = vmatpush.msra.mxu0 %v4209
      %4431 = vmatpush.msra.mxu0 %v4184
      %4432 = vmatpush.msra.mxu0 %v4182
      %4433 = vmatpush.msra.mxu0 %v4157
      %4434 = vmatpush.msra.mxu0 %v4155
      %4435 = vmatpush.msra.mxu0 %v4131
      %4436 = vmatpush.msra.mxu0 %v4129
      %4437 = vmatpush.msra.mxu0 %v3979
      %4438 = vmatpush.msra.mxu0 %v3977
      %4439 = vmatmul.f32.gmra.mxu0 %v4321
      %v4440 = vpop.f32.mrf.mxu0
      %v4441 = vadd.f32 %v4336, %v4440
      %4442 = vmatmul.f32.gmra.mxu0 %v4323
      %v4443 = vpop.f32.mrf.mxu0
      %v4444 = vadd.f32 %v4341, %v4443
      %4445 = vmatmul.f32.gmra.mxu0 %v4325
      %v4446 = vpop.f32.mrf.mxu0
      %v4447 = vadd.f32 %v4346, %v4446
      %4448 = vmatmul.f32.gmra.mxu0 %v4327
      %v4449 = vpop.f32.mrf.mxu0
      %v4450 = vadd.f32 %v4351, %v4449
      %4451 = vdwg.mxu0
      %4452 = vmatpush.msra.mxu0 0.0
      %4453 = vmatpush.msra.mxu0 0.0
      %4454 = vmatpush.msra.mxu0 0.0
      %4455 = vmatpush.msra.mxu0 0.0
      %4456 = vmatpush.msra.mxu0 0.0
      %4457 = vmatpush.msra.mxu0 0.0
      %4458 = vmatpush.msra.mxu0 0.0
      %4459 = vmatpush.msra.mxu0 0.0
      %4460 = vmatpush.msra.mxu0 0.0
      %4461 = vmatpush.msra.mxu0 0.0
      %4462 = vmatpush.msra.mxu0 0.0
      %4463 = vmatpush.msra.mxu0 0.0
      %4464 = vmatpush.msra.mxu0 0.0
      %4465 = vmatpush.msra.mxu0 0.0
      %4466 = vmatpush.msra.mxu0 %v4316
      %4467 = vmatpush.msra.mxu0 %v4314
      %4468 = vmatmul.f32.gmra.mxu0 %v4354
      %v4469 = vpop.f32.mrf.mxu0
      %v4470 = vadd.f32 %v4441, %v4469
      %4471 = vmatmul.f32.gmra.mxu0 %v4357
      %v4472 = vpop.f32.mrf.mxu0
      %v4473 = vadd.f32 %v4444, %v4472
      %4474 = vmatmul.f32.gmra.mxu0 %v4360
      %v4475 = vpop.f32.mrf.mxu0
      %v4476 = vadd.f32 %v4447, %v4475
      %4477 = vmatmul.f32.gmra.mxu0 %v4363
      %v4478 = vpop.f32.mrf.mxu0
      %v4479 = vadd.f32 %v4450, %v4478
      %4480 = vdwg.mxu0
      %v4481 = vmax.f32 %v4412, 0.0
      %v4482 = vmax.f32 %v4470, 0.0
      %v4483 = vmax.f32 %v4415, 0.0
      %v4484 = vmax.f32 %v4473, 0.0
      %v4485 = vmax.f32 %v4418, 0.0
      %v4486 = vmax.f32 %v4476, 0.0
      %v4487 = vmax.f32 %v4421, 0.0
      %v4488 = vmax.f32 %v4479, 0.0
      %4497 = vrot.lane.b32.xlu0 %v4481, 9
      %v4498 = vpop.permute.xlu0 %4497
      %4499 = vrot.lane.b32.xlu0 %v4482, 9
      %v4500 = vpop.permute.xlu0 %4499
      %4501 = vrot.lane.b32.xlu0 %v4483, 9
      %v4502 = vpop.permute.xlu0 %4501
      %4503 = vrot.lane.b32.xlu0 %v4484, 9
      %v4504 = vpop.permute.xlu0 %4503
      %4505 = vrot.lane.b32.xlu0 %v4485, 9
      %v4506 = vpop.permute.xlu0 %4505
      %4507 = vrot.lane.b32.xlu0 %v4486, 9
      %v4508 = vpop.permute.xlu0 %4507
      %4509 = vrot.lane.b32.xlu0 %v4487, 9
      %v4510 = vpop.permute.xlu0 %4509
      %4511 = vrot.lane.b32.xlu0 %v4488, 9
      %v4512 = vpop.permute.xlu0 %4511
      %v4513 = vsel %vm455, %v4498, %v4500
      %v4514 = vsel %vm455, %v4502, %v4504
      %v4515 = vsel %vm455, %v4506, %v4508
      %v4516 = vsel %vm455, %v4510, %v4512
      %4529 = vst.msk [vmem:[#allocation3] sm:$0xff] %vm3963, %v4498
      %4530 = vst [vmem:[#allocation3 + $0x8] sm:$0xff] %v4513
      %4531 = vst.msk [vmem:[#allocation3 + $0x10] sm:$0xff] %vm455, %v4500
      %4532 = vst.msk [vmem:[#allocation3 + $0x18] sm:$0xff] %vm3963, %v4502
      %4533 = vst [vmem:[#allocation3 + $0x20] sm:$0xff] %v4514
      %4534 = vst.msk [vmem:[#allocation3 + $0x28] sm:$0xff] %vm455, %v4504
      %4535 = vst.msk [vmem:[#allocation3 + $0x30] sm:$0xff] %vm3963, %v4506
      %4536 = vst [vmem:[#allocation3 + $0x38] sm:$0xff] %v4515
      %4537 = vst.msk [vmem:[#allocation3 + $0x40] sm:$0xff] %vm455, %v4508
      %4538 = vst.msk [vmem:[#allocation3 + $0x48] sm:$0xff] %vm3963, %v4510
      %4539 = vst [vmem:[#allocation3 + $0x50] sm:$0xff] %v4516
      %4540 = vst.msk [vmem:[#allocation3 + $0x58] sm:$0xff] %vm455, %v4512
      %v4541 = vld [vmem:[#allocation3] sm:$0xff]
      %v4542 = vld [vmem:[#allocation3 + $0x8] sm:$0xff]
      %v4543 = vld [vmem:[#allocation3 + $0x18] sm:$0xff]
      %v4544 = vld [vmem:[#allocation3 + $0x20] sm:$0xff]
      %v4545 = vld [vmem:[#allocation3 + $0x30] sm:$0xff]
      %v4546 = vld [vmem:[#allocation3 + $0x38] sm:$0xff]
      %v4547 = vld [vmem:[#allocation3 + $0x48] sm:$0xff]
      %v4548 = vld [vmem:[#allocation3 + $0x50] sm:$0xff]
      %v4549 = vmul.f32 %v4541, %v3974
      %v4550 = vmul.f32 %v4542, %v3975
      %v4551 = vmul.f32 %v4543, %v3974
      %v4552 = vmul.f32 %v4544, %v3975
      %v4553 = vmul.f32 %v4545, %v3974
      %v4554 = vmul.f32 %v4546, %v3975
      %v4555 = vmul.f32 %v4547, %v3974
      %v4556 = vmul.f32 %v4548, %v3975
      %v4557 = vld [vmem:[#allocation3 + $0x10] sm:$0xff]
      %v4558 = vld [vmem:[#allocation3 + $0x28] sm:$0xff]
      %v4559 = vld [vmem:[#allocation3 + $0x40] sm:$0xff]
      %v4560 = vld [vmem:[#allocation3 + $0x58] sm:$0xff]
      %v4561 = vmul.f32 %v4541, %v3987
      %v4562 = vmul.f32 %v4542, %v3990
      %v4563 = vmul.f32 %v4557, %v3989
      %v4564 = vmul.f32 %v4543, %v3987
      %v4565 = vmul.f32 %v4544, %v3990
      %v4566 = vmul.f32 %v4558, %v3989
      %v4567 = vmul.f32 %v4545, %v3987
      %v4568 = vmul.f32 %v4546, %v3990
      %v4569 = vmul.f32 %v4559, %v3989
      %v4570 = vmul.f32 %v4547, %v3987
      %v4571 = vmul.f32 %v4548, %v3990
      %v4572 = vmul.f32 %v4560, %v3989
      %v4573 = vmul.f32 %v4541, %v4005
      %v4574 = vmul.f32 %v4542, %v4008
      %v4575 = vmul.f32 %v4557, %v4007
      %v4576 = vmul.f32 %v4543, %v4005
      %v4577 = vmul.f32 %v4544, %v4008
      %v4578 = vmul.f32 %v4558, %v4007
      %v4579 = vmul.f32 %v4545, %v4005
      %v4580 = vmul.f32 %v4546, %v4008
      %v4581 = vmul.f32 %v4559, %v4007
      %v4582 = vmul.f32 %v4547, %v4005
      %v4583 = vmul.f32 %v4548, %v4008
      %v4584 = vmul.f32 %v4560, %v4007
      %v4585 = vmul.f32 %v4541, %v4023
      %v4586 = vmul.f32 %v4542, %v4027
      %v4587 = vmul.f32 %v4557, %v4025
      %v4588 = vmul.f32 %v4543, %v4023
      %v4589 = vmul.f32 %v4544, %v4027
      %v4590 = vmul.f32 %v4558, %v4025
      %v4591 = vmul.f32 %v4545, %v4023
      %v4592 = vmul.f32 %v4546, %v4027
      %v4593 = vmul.f32 %v4559, %v4025
      %v4594 = vmul.f32 %v4547, %v4023
      %v4595 = vmul.f32 %v4548, %v4027
      %v4596 = vmul.f32 %v4560, %v4025
      %v4597 = vmul.f32 %v4541, %v4042
      %v4598 = vmul.f32 %v4542, %v4046
      %v4599 = vmul.f32 %v4557, %v4044
      %v4600 = vmul.f32 %v4543, %v4042
      %v4601 = vmul.f32 %v4544, %v4046
      %v4602 = vmul.f32 %v4558, %v4044
      %v4603 = vmul.f32 %v4545, %v4042
      %v4604 = vmul.f32 %v4546, %v4046
      %v4605 = vmul.f32 %v4559, %v4044
      %v4606 = vmul.f32 %v4547, %v4042
      %v4607 = vmul.f32 %v4548, %v4046
      %v4608 = vmul.f32 %v4560, %v4044
      %v4609 = vmul.f32 %v4541, %v4061
      %v4610 = vmul.f32 %v4542, %v4064
      %v4611 = vmul.f32 %v4557, %v4063
      %v4612 = vmul.f32 %v4543, %v4061
      %v4613 = vmul.f32 %v4544, %v4064
      %v4614 = vmul.f32 %v4558, %v4063
      %v4615 = vmul.f32 %v4545, %v4061
      %v4616 = vmul.f32 %v4546, %v4064
      %v4617 = vmul.f32 %v4559, %v4063
      %v4618 = vmul.f32 %v4547, %v4061
      %v4619 = vmul.f32 %v4548, %v4064
      %v4620 = vmul.f32 %v4560, %v4063
      %v4621 = vmul.f32 %v4541, %v4079
      %v4622 = vmul.f32 %v4542, %v4082
      %v4623 = vmul.f32 %v4557, %v4081
      %v4624 = vmul.f32 %v4543, %v4079
      %v4625 = vmul.f32 %v4544, %v4082
      %v4626 = vmul.f32 %v4558, %v4081
      %v4627 = vmul.f32 %v4545, %v4079
      %v4628 = vmul.f32 %v4546, %v4082
      %v4629 = vmul.f32 %v4559, %v4081
      %v4630 = vmul.f32 %v4547, %v4079
      %v4631 = vmul.f32 %v4548, %v4082
      %v4632 = vmul.f32 %v4560, %v4081
      %v4633 = vmul.f32 %v4541, %v4097
      %v4634 = vmul.f32 %v4542, %v4100
      %v4635 = vmul.f32 %v4557, %v4099
      %v4636 = vmul.f32 %v4543, %v4097
      %v4637 = vmul.f32 %v4544, %v4100
      %v4638 = vmul.f32 %v4558, %v4099
      %v4639 = vmul.f32 %v4545, %v4097
      %v4640 = vmul.f32 %v4546, %v4100
      %v4641 = vmul.f32 %v4559, %v4099
      %v4642 = vmul.f32 %v4547, %v4097
      %v4643 = vmul.f32 %v4548, %v4100
      %v4644 = vmul.f32 %v4560, %v4099
      %4657 = vrot.lane.b32.xlu0 %v4561, 127
      %v4658 = vpop.permute.xlu0 %4657
      %4659 = vrot.lane.b32.xlu0 %v4562, 127
      %v4660 = vpop.permute.xlu0 %4659
      %4661 = vrot.lane.b32.xlu0 %v4563, 127
      %v4662 = vpop.permute.xlu0 %4661
      %4663 = vrot.lane.b32.xlu0 %v4564, 127
      %v4664 = vpop.permute.xlu0 %4663
      %4665 = vrot.lane.b32.xlu0 %v4565, 127
      %v4666 = vpop.permute.xlu0 %4665
      %4667 = vrot.lane.b32.xlu0 %v4566, 127
      %v4668 = vpop.permute.xlu0 %4667
      %4669 = vrot.lane.b32.xlu0 %v4567, 127
      %v4670 = vpop.permute.xlu0 %4669
      %4671 = vrot.lane.b32.xlu0 %v4568, 127
      %v4672 = vpop.permute.xlu0 %4671
      %4673 = vrot.lane.b32.xlu0 %v4569, 127
      %v4674 = vpop.permute.xlu0 %4673
      %4675 = vrot.lane.b32.xlu0 %v4570, 127
      %v4676 = vpop.permute.xlu0 %4675
      %4677 = vrot.lane.b32.xlu0 %v4571, 127
      %v4678 = vpop.permute.xlu0 %4677
      %4679 = vrot.lane.b32.xlu0 %v4572, 127
      %v4680 = vpop.permute.xlu0 %4679
      %v4681 = vsel %vm1007, %v4658, %v4660
      %v4682 = vsel %vm1007, %v4660, %v4662
      %v4683 = vsel %vm1007, %v4664, %v4666
      %v4684 = vsel %vm1007, %v4666, %v4668
      %v4685 = vsel %vm1007, %v4670, %v4672
      %v4686 = vsel %vm1007, %v4672, %v4674
      %v4687 = vsel %vm1007, %v4676, %v4678
      %v4688 = vsel %vm1007, %v4678, %v4680
      %4709 = vrot.lane.b32.xlu0 %v4573, 126
      %v4710 = vpop.permute.xlu0 %4709
      %4711 = vrot.lane.b32.xlu0 %v4574, 126
      %v4712 = vpop.permute.xlu0 %4711
      %4713 = vrot.lane.b32.xlu0 %v4575, 126
      %v4714 = vpop.permute.xlu0 %4713
      %4715 = vrot.lane.b32.xlu0 %v4576, 126
      %v4716 = vpop.permute.xlu0 %4715
      %4717 = vrot.lane.b32.xlu0 %v4577, 126
      %v4718 = vpop.permute.xlu0 %4717
      %4719 = vrot.lane.b32.xlu0 %v4578, 126
      %v4720 = vpop.permute.xlu0 %4719
      %4721 = vrot.lane.b32.xlu0 %v4579, 126
      %v4722 = vpop.permute.xlu0 %4721
      %4723 = vrot.lane.b32.xlu0 %v4580, 126
      %v4724 = vpop.permute.xlu0 %4723
      %4725 = vrot.lane.b32.xlu0 %v4581, 126
      %v4726 = vpop.permute.xlu0 %4725
      %4727 = vrot.lane.b32.xlu0 %v4582, 126
      %v4728 = vpop.permute.xlu0 %4727
      %4729 = vrot.lane.b32.xlu0 %v4583, 126
      %v4730 = vpop.permute.xlu0 %4729
      %4731 = vrot.lane.b32.xlu0 %v4584, 126
      %v4732 = vpop.permute.xlu0 %4731
      %v4733 = vsel %vm1051, %v4710, %v4712
      %v4734 = vsel %vm1051, %v4712, %v4714
      %v4735 = vsel %vm1051, %v4716, %v4718
      %v4736 = vsel %vm1051, %v4718, %v4720
      %v4737 = vsel %vm1051, %v4722, %v4724
      %v4738 = vsel %vm1051, %v4724, %v4726
      %v4739 = vsel %vm1051, %v4728, %v4730
      %v4740 = vsel %vm1051, %v4730, %v4732
      %4761 = vrot.lane.b32.xlu0 %v4585, 120
      %v4762 = vpop.permute.xlu0 %4761
      %4763 = vrot.lane.b32.xlu0 %v4586, 120
      %v4764 = vpop.permute.xlu0 %4763
      %4765 = vrot.lane.b32.xlu0 %v4587, 120
      %v4766 = vpop.permute.xlu0 %4765
      %4767 = vrot.lane.b32.xlu0 %v4588, 120
      %v4768 = vpop.permute.xlu0 %4767
      %4769 = vrot.lane.b32.xlu0 %v4589, 120
      %v4770 = vpop.permute.xlu0 %4769
      %4771 = vrot.lane.b32.xlu0 %v4590, 120
      %v4772 = vpop.permute.xlu0 %4771
      %4773 = vrot.lane.b32.xlu0 %v4591, 120
      %v4774 = vpop.permute.xlu0 %4773
      %4775 = vrot.lane.b32.xlu0 %v4592, 120
      %v4776 = vpop.permute.xlu0 %4775
      %4777 = vrot.lane.b32.xlu0 %v4593, 120
      %v4778 = vpop.permute.xlu0 %4777
      %4779 = vrot.lane.b32.xlu0 %v4594, 120
      %v4780 = vpop.permute.xlu0 %4779
      %4781 = vrot.lane.b32.xlu0 %v4595, 120
      %v4782 = vpop.permute.xlu0 %4781
      %4783 = vrot.lane.b32.xlu0 %v4596, 120
      %v4784 = vpop.permute.xlu0 %4783
      %v4785 = vsel %vm4180, %v4762, %v4764
      %v4786 = vsel %vm4180, %v4764, %v4766
      %v4787 = vsel %vm4180, %v4768, %v4770
      %v4788 = vsel %vm4180, %v4770, %v4772
      %v4789 = vsel %vm4180, %v4774, %v4776
      %v4790 = vsel %vm4180, %v4776, %v4778
      %v4791 = vsel %vm4180, %v4780, %v4782
      %v4792 = vsel %vm4180, %v4782, %v4784
      %4813 = vrot.lane.b32.xlu0 %v4541, 119
      %v4814 = vpop.permute.xlu0 %4813
      %4815 = vrot.lane.b32.xlu0 %v4542, 119
      %v4816 = vpop.permute.xlu0 %4815
      %4817 = vrot.lane.b32.xlu0 %v4557, 119
      %v4818 = vpop.permute.xlu0 %4817
      %4819 = vrot.lane.b32.xlu0 %v4543, 119
      %v4820 = vpop.permute.xlu0 %4819
      %4821 = vrot.lane.b32.xlu0 %v4544, 119
      %v4822 = vpop.permute.xlu0 %4821
      %4823 = vrot.lane.b32.xlu0 %v4558, 119
      %v4824 = vpop.permute.xlu0 %4823
      %4825 = vrot.lane.b32.xlu0 %v4545, 119
      %v4826 = vpop.permute.xlu0 %4825
      %4827 = vrot.lane.b32.xlu0 %v4546, 119
      %v4828 = vpop.permute.xlu0 %4827
      %4829 = vrot.lane.b32.xlu0 %v4559, 119
      %v4830 = vpop.permute.xlu0 %4829
      %4831 = vrot.lane.b32.xlu0 %v4547, 119
      %v4832 = vpop.permute.xlu0 %4831
      %4833 = vrot.lane.b32.xlu0 %v4548, 119
      %v4834 = vpop.permute.xlu0 %4833
      %4835 = vrot.lane.b32.xlu0 %v4560, 119
      %v4836 = vpop.permute.xlu0 %4835
      %v4837 = vsel %vm4207, %v4814, %v4816
      %v4838 = vsel %vm4207, %v4816, %v4818
      %v4839 = vsel %vm4207, %v4820, %v4822
      %v4840 = vsel %vm4207, %v4822, %v4824
      %v4841 = vsel %vm4207, %v4826, %v4828
      %v4842 = vsel %vm4207, %v4828, %v4830
      %v4843 = vsel %vm4207, %v4832, %v4834
      %v4844 = vsel %vm4207, %v4834, %v4836
      %4865 = vrot.lane.b32.xlu0 %v4597, 118
      %v4866 = vpop.permute.xlu0 %4865
      %4867 = vrot.lane.b32.xlu0 %v4598, 118
      %v4868 = vpop.permute.xlu0 %4867
      %4869 = vrot.lane.b32.xlu0 %v4599, 118
      %v4870 = vpop.permute.xlu0 %4869
      %4871 = vrot.lane.b32.xlu0 %v4600, 118
      %v4872 = vpop.permute.xlu0 %4871
      %4873 = vrot.lane.b32.xlu0 %v4601, 118
      %v4874 = vpop.permute.xlu0 %4873
      %4875 = vrot.lane.b32.xlu0 %v4602, 118
      %v4876 = vpop.permute.xlu0 %4875
      %4877 = vrot.lane.b32.xlu0 %v4603, 118
      %v4878 = vpop.permute.xlu0 %4877
      %4879 = vrot.lane.b32.xlu0 %v4604, 118
      %v4880 = vpop.permute.xlu0 %4879
      %4881 = vrot.lane.b32.xlu0 %v4605, 118
      %v4882 = vpop.permute.xlu0 %4881
      %4883 = vrot.lane.b32.xlu0 %v4606, 118
      %v4884 = vpop.permute.xlu0 %4883
      %4885 = vrot.lane.b32.xlu0 %v4607, 118
      %v4886 = vpop.permute.xlu0 %4885
      %4887 = vrot.lane.b32.xlu0 %v4608, 118
      %v4888 = vpop.permute.xlu0 %4887
      %v4889 = vsel %vm4234, %v4866, %v4868
      %v4890 = vsel %vm4234, %v4868, %v4870
      %v4891 = vsel %vm4234, %v4872, %v4874
      %v4892 = vsel %vm4234, %v4874, %v4876
      %v4893 = vsel %vm4234, %v4878, %v4880
      %v4894 = vsel %vm4234, %v4880, %v4882
      %v4895 = vsel %vm4234, %v4884, %v4886
      %v4896 = vsel %vm4234, %v4886, %v4888
      %4917 = vrot.lane.b32.xlu0 %v4609, 112
      %v4918 = vpop.permute.xlu0 %4917
      %4919 = vrot.lane.b32.xlu0 %v4610, 112
      %v4920 = vpop.permute.xlu0 %4919
      %4921 = vrot.lane.b32.xlu0 %v4611, 112
      %v4922 = vpop.permute.xlu0 %4921
      %4923 = vrot.lane.b32.xlu0 %v4612, 112
      %v4924 = vpop.permute.xlu0 %4923
      %4925 = vrot.lane.b32.xlu0 %v4613, 112
      %v4926 = vpop.permute.xlu0 %4925
      %4927 = vrot.lane.b32.xlu0 %v4614, 112
      %v4928 = vpop.permute.xlu0 %4927
      %4929 = vrot.lane.b32.xlu0 %v4615, 112
      %v4930 = vpop.permute.xlu0 %4929
      %4931 = vrot.lane.b32.xlu0 %v4616, 112
      %v4932 = vpop.permute.xlu0 %4931
      %4933 = vrot.lane.b32.xlu0 %v4617, 112
      %v4934 = vpop.permute.xlu0 %4933
      %4935 = vrot.lane.b32.xlu0 %v4618, 112
      %v4936 = vpop.permute.xlu0 %4935
      %4937 = vrot.lane.b32.xlu0 %v4619, 112
      %v4938 = vpop.permute.xlu0 %4937
      %4939 = vrot.lane.b32.xlu0 %v4620, 112
      %v4940 = vpop.permute.xlu0 %4939
      %v4941 = vsel %vm1095, %v4918, %v4920
      %v4942 = vsel %vm1095, %v4920, %v4922
      %v4943 = vsel %vm1095, %v4924, %v4926
      %v4944 = vsel %vm1095, %v4926, %v4928
      %v4945 = vsel %vm1095, %v4930, %v4932
      %v4946 = vsel %vm1095, %v4932, %v4934
      %v4947 = vsel %vm1095, %v4936, %v4938
      %v4948 = vsel %vm1095, %v4938, %v4940
      %4969 = vrot.lane.b32.xlu0 %v4621, 111
      %v4970 = vpop.permute.xlu0 %4969
      %4971 = vrot.lane.b32.xlu0 %v4622, 111
      %v4972 = vpop.permute.xlu0 %4971
      %4973 = vrot.lane.b32.xlu0 %v4623, 111
      %v4974 = vpop.permute.xlu0 %4973
      %4975 = vrot.lane.b32.xlu0 %v4624, 111
      %v4976 = vpop.permute.xlu0 %4975
      %4977 = vrot.lane.b32.xlu0 %v4625, 111
      %v4978 = vpop.permute.xlu0 %4977
      %4979 = vrot.lane.b32.xlu0 %v4626, 111
      %v4980 = vpop.permute.xlu0 %4979
      %4981 = vrot.lane.b32.xlu0 %v4627, 111
      %v4982 = vpop.permute.xlu0 %4981
      %4983 = vrot.lane.b32.xlu0 %v4628, 111
      %v4984 = vpop.permute.xlu0 %4983
      %4985 = vrot.lane.b32.xlu0 %v4629, 111
      %v4986 = vpop.permute.xlu0 %4985
      %4987 = vrot.lane.b32.xlu0 %v4630, 111
      %v4988 = vpop.permute.xlu0 %4987
      %4989 = vrot.lane.b32.xlu0 %v4631, 111
      %v4990 = vpop.permute.xlu0 %4989
      %4991 = vrot.lane.b32.xlu0 %v4632, 111
      %v4992 = vpop.permute.xlu0 %4991
      %v4993 = vsel %vm1139, %v4970, %v4972
      %v4994 = vsel %vm1139, %v4972, %v4974
      %v4995 = vsel %vm1139, %v4976, %v4978
      %v4996 = vsel %vm1139, %v4978, %v4980
      %v4997 = vsel %vm1139, %v4982, %v4984
      %v4998 = vsel %vm1139, %v4984, %v4986
      %v4999 = vsel %vm1139, %v4988, %v4990
      %v5000 = vsel %vm1139, %v4990, %v4992
      %5021 = vrot.lane.b32.xlu0 %v4633, 110
      %v5022 = vpop.permute.xlu0 %5021
      %5023 = vrot.lane.b32.xlu0 %v4634, 110
      %v5024 = vpop.permute.xlu0 %5023
      %5025 = vrot.lane.b32.xlu0 %v4635, 110
      %v5026 = vpop.permute.xlu0 %5025
      %5027 = vrot.lane.b32.xlu0 %v4636, 110
      %v5028 = vpop.permute.xlu0 %5027
      %5029 = vrot.lane.b32.xlu0 %v4637, 110
      %v5030 = vpop.permute.xlu0 %5029
      %5031 = vrot.lane.b32.xlu0 %v4638, 110
      %v5032 = vpop.permute.xlu0 %5031
      %5033 = vrot.lane.b32.xlu0 %v4639, 110
      %v5034 = vpop.permute.xlu0 %5033
      %5035 = vrot.lane.b32.xlu0 %v4640, 110
      %v5036 = vpop.permute.xlu0 %5035
      %5037 = vrot.lane.b32.xlu0 %v4641, 110
      %v5038 = vpop.permute.xlu0 %5037
      %5039 = vrot.lane.b32.xlu0 %v4642, 110
      %v5040 = vpop.permute.xlu0 %5039
      %5041 = vrot.lane.b32.xlu0 %v4643, 110
      %v5042 = vpop.permute.xlu0 %5041
      %5043 = vrot.lane.b32.xlu0 %v4644, 110
      %v5044 = vpop.permute.xlu0 %5043
      %v5045 = vsel %vm1183, %v5022, %v5024
      %v5046 = vsel %vm1183, %v5024, %v5026
      %v5047 = vsel %vm1183, %v5028, %v5030
      %v5048 = vsel %vm1183, %v5030, %v5032
      %v5049 = vsel %vm1183, %v5034, %v5036
      %v5050 = vsel %vm1183, %v5036, %v5038
      %v5051 = vsel %vm1183, %v5040, %v5042
      %v5052 = vsel %vm1183, %v5042, %v5044
      %v5061 = vld [vmem:[%s7] sm:$0xff]
      %v5062 = vld [vmem:[%s7 + $0x8] sm:$0xff]
      %v5063 = vld [vmem:[%s7 + $0x10] sm:$0xff]
      %v5064 = vld [vmem:[%s7 + $0x18] sm:$0xff]
      %v5065 = vld [vmem:[%s7 + $0x20] sm:$0xff]
      %v5066 = vld [vmem:[%s7 + $0x28] sm:$0xff]
      %v5067 = vld [vmem:[%s7 + $0x30] sm:$0xff]
      %v5068 = vld [vmem:[%s7 + $0x38] sm:$0xff]
      %v5069 = vld [vmem:[%s7 + $0x40] sm:$0xff]
      %v5070 = vld [vmem:[%s7 + $0x48] sm:$0xff]
      %v5071 = vld [vmem:[%s7 + $0x50] sm:$0xff]
      %v5072 = vld [vmem:[%s7 + $0x58] sm:$0xff]
      %v5073 = vld [vmem:[%s8] sm:$0xff]
      %v5074 = vld [vmem:[%s8 + $0x8] sm:$0xff]
      %v5075 = vld [vmem:[%s8 + $0x10] sm:$0xff]
      %v5076 = vld [vmem:[%s8 + $0x18] sm:$0xff]
      %5078 = vset.pattern.permute.xlu0 0
      %5079 = vperm.xlu0 %5078, %v5073
      %v5080 = vpop.permute.xlu0 %5079
      %5083 = vset.pattern.permute.xlu0 0
      %5084 = vperm.xlu0 %5083, %v5074
      %v5085 = vpop.permute.xlu0 %5084
      %5088 = vset.pattern.permute.xlu0 0
      %5089 = vperm.xlu0 %5088, %v5075
      %v5090 = vpop.permute.xlu0 %5089
      %5093 = vset.pattern.permute.xlu0 0
      %5094 = vperm.xlu0 %5093, %v5076
      %v5095 = vpop.permute.xlu0 %5094
      %v5098 = vsel %vm838, %v5063, 0
      %v5101 = vsel %vm838, %v5066, 0
      %v5104 = vsel %vm838, %v5069, 0
      %v5107 = vsel %vm838, %v5072, 0
      %5109 = vmatpush.msra.mxu0 %v4791
      %5110 = vmatpush.msra.mxu0 %v4789
      %5111 = vmatpush.msra.mxu0 %v4787
      %5112 = vmatpush.msra.mxu0 %v4785
      %5113 = vmatpush.msra.mxu0 %v4739
      %5114 = vmatpush.msra.mxu0 %v4737
      %5115 = vmatpush.msra.mxu0 %v4735
      %5116 = vmatpush.msra.mxu0 %v4733
      %5117 = vmatpush.msra.mxu0 %v4687
      %5118 = vmatpush.msra.mxu0 %v4685
      %5119 = vmatpush.msra.mxu0 %v4683
      %5120 = vmatpush.msra.mxu0 %v4681
      %5121 = vmatpush.msra.mxu0 %v4555
      %5122 = vmatpush.msra.mxu0 %v4553
      %5123 = vmatpush.msra.mxu0 %v4551
      %5124 = vmatpush.msra.mxu0 %v4549
      %5125 = vmatmul.f32.gmra.mxu0 %v5061
      %v5126 = vpop.f32.mrf.mxu0
      %v5127 = vadd.f32 %v5080, %v5126
      %5128 = vmatmul.f32.gmra.mxu0 %v5064
      %v5129 = vpop.f32.mrf.mxu0
      %v5130 = vadd.f32 %v5085, %v5129
      %5131 = vmatmul.f32.gmra.mxu0 %v5067
      %v5132 = vpop.f32.mrf.mxu0
      %v5133 = vadd.f32 %v5090, %v5132
      %5134 = vmatmul.f32.gmra.mxu0 %v5070
      %v5135 = vpop.f32.mrf.mxu0
      %v5136 = vadd.f32 %v5095, %v5135
      %5137 = vdwg.mxu0
      %5138 = vmatpush.msra.mxu0 %v4999
      %5139 = vmatpush.msra.mxu0 %v4997
      %5140 = vmatpush.msra.mxu0 %v4995
      %5141 = vmatpush.msra.mxu0 %v4993
      %5142 = vmatpush.msra.mxu0 %v4947
      %5143 = vmatpush.msra.mxu0 %v4945
      %5144 = vmatpush.msra.mxu0 %v4943
      %5145 = vmatpush.msra.mxu0 %v4941
      %5146 = vmatpush.msra.mxu0 %v4895
      %5147 = vmatpush.msra.mxu0 %v4893
      %5148 = vmatpush.msra.mxu0 %v4891
      %5149 = vmatpush.msra.mxu0 %v4889
      %5150 = vmatpush.msra.mxu0 %v4843
      %5151 = vmatpush.msra.mxu0 %v4841
      %5152 = vmatpush.msra.mxu0 %v4839
      %5153 = vmatpush.msra.mxu0 %v4837
      %5154 = vmatmul.f32.gmra.mxu0 %v5062
      %v5155 = vpop.f32.mrf.mxu0
      %v5156 = vadd.f32 %v5127, %v5155
      %5157 = vmatmul.f32.gmra.mxu0 %v5065
      %v5158 = vpop.f32.mrf.mxu0
      %v5159 = vadd.f32 %v5130, %v5158
      %5160 = vmatmul.f32.gmra.mxu0 %v5068
      %v5161 = vpop.f32.mrf.mxu0
      %v5162 = vadd.f32 %v5133, %v5161
      %5163 = vmatmul.f32.gmra.mxu0 %v5071
      %v5164 = vpop.f32.mrf.mxu0
      %v5165 = vadd.f32 %v5136, %v5164
      %5166 = vdwg.mxu0
      %5167 = vmatpush.msra.mxu0 0.0
      %5168 = vmatpush.msra.mxu0 0.0
      %5169 = vmatpush.msra.mxu0 0.0
      %5170 = vmatpush.msra.mxu0 0.0
      %5171 = vmatpush.msra.mxu0 0.0
      %5172 = vmatpush.msra.mxu0 0.0
      %5173 = vmatpush.msra.mxu0 0.0
      %5174 = vmatpush.msra.mxu0 0.0
      %5175 = vmatpush.msra.mxu0 0.0
      %5176 = vmatpush.msra.mxu0 0.0
      %5177 = vmatpush.msra.mxu0 0.0
      %5178 = vmatpush.msra.mxu0 0.0
      %5179 = vmatpush.msra.mxu0 %v5051
      %5180 = vmatpush.msra.mxu0 %v5049
      %5181 = vmatpush.msra.mxu0 %v5047
      %5182 = vmatpush.msra.mxu0 %v5045
      %5183 = vmatmul.f32.gmra.mxu0 %v5098
      %v5184 = vpop.f32.mrf.mxu0
      %v5185 = vadd.f32 %v5156, %v5184
      %5186 = vmatmul.f32.gmra.mxu0 %v5101
      %v5187 = vpop.f32.mrf.mxu0
      %v5188 = vadd.f32 %v5159, %v5187
      %5189 = vmatmul.f32.gmra.mxu0 %v5104
      %v5190 = vpop.f32.mrf.mxu0
      %v5191 = vadd.f32 %v5162, %v5190
      %5192 = vmatmul.f32.gmra.mxu0 %v5107
      %v5193 = vpop.f32.mrf.mxu0
      %v5194 = vadd.f32 %v5165, %v5193
      %5195 = vdwg.mxu0
      %5196 = vmatpush.msra.mxu0 %v4792
      %5197 = vmatpush.msra.mxu0 %v4790
      %5198 = vmatpush.msra.mxu0 %v4788
      %5199 = vmatpush.msra.mxu0 %v4786
      %5200 = vmatpush.msra.mxu0 %v4740
      %5201 = vmatpush.msra.mxu0 %v4738
      %5202 = vmatpush.msra.mxu0 %v4736
      %5203 = vmatpush.msra.mxu0 %v4734
      %5204 = vmatpush.msra.mxu0 %v4688
      %5205 = vmatpush.msra.mxu0 %v4686
      %5206 = vmatpush.msra.mxu0 %v4684
      %5207 = vmatpush.msra.mxu0 %v4682
      %5208 = vmatpush.msra.mxu0 %v4556
      %5209 = vmatpush.msra.mxu0 %v4554
      %5210 = vmatpush.msra.mxu0 %v4552
      %5211 = vmatpush.msra.mxu0 %v4550
      %5212 = vmatmul.f32.gmra.mxu0 %v5061
      %v5213 = vpop.f32.mrf.mxu0
      %v5214 = vadd.f32 %v5080, %v5213
      %5215 = vmatmul.f32.gmra.mxu0 %v5064
      %v5216 = vpop.f32.mrf.mxu0
      %v5217 = vadd.f32 %v5085, %v5216
      %5218 = vmatmul.f32.gmra.mxu0 %v5067
      %v5219 = vpop.f32.mrf.mxu0
      %v5220 = vadd.f32 %v5090, %v5219
      %5221 = vmatmul.f32.gmra.mxu0 %v5070
      %v5222 = vpop.f32.mrf.mxu0
      %v5223 = vadd.f32 %v5095, %v5222
      %5224 = vdwg.mxu0
      %5225 = vmatpush.msra.mxu0 %v5000
      %5226 = vmatpush.msra.mxu0 %v4998
      %5227 = vmatpush.msra.mxu0 %v4996
      %5228 = vmatpush.msra.mxu0 %v4994
      %5229 = vmatpush.msra.mxu0 %v4948
      %5230 = vmatpush.msra.mxu0 %v4946
      %5231 = vmatpush.msra.mxu0 %v4944
      %5232 = vmatpush.msra.mxu0 %v4942
      %5233 = vmatpush.msra.mxu0 %v4896
      %5234 = vmatpush.msra.mxu0 %v4894
      %5235 = vmatpush.msra.mxu0 %v4892
      %5236 = vmatpush.msra.mxu0 %v4890
      %5237 = vmatpush.msra.mxu0 %v4844
      %5238 = vmatpush.msra.mxu0 %v4842
      %5239 = vmatpush.msra.mxu0 %v4840
      %5240 = vmatpush.msra.mxu0 %v4838
      %5241 = vmatmul.f32.gmra.mxu0 %v5062
      %v5242 = vpop.f32.mrf.mxu0
      %v5243 = vadd.f32 %v5214, %v5242
      %5244 = vmatmul.f32.gmra.mxu0 %v5065
      %v5245 = vpop.f32.mrf.mxu0
      %v5246 = vadd.f32 %v5217, %v5245
      %5247 = vmatmul.f32.gmra.mxu0 %v5068
      %v5248 = vpop.f32.mrf.mxu0
      %v5249 = vadd.f32 %v5220, %v5248
      %5250 = vmatmul.f32.gmra.mxu0 %v5071
      %v5251 = vpop.f32.mrf.mxu0
      %v5252 = vadd.f32 %v5223, %v5251
      %5253 = vdwg.mxu0
      %5254 = vmatpush.msra.mxu0 0.0
      %5255 = vmatpush.msra.mxu0 0.0
      %5256 = vmatpush.msra.mxu0 0.0
      %5257 = vmatpush.msra.mxu0 0.0
      %5258 = vmatpush.msra.mxu0 0.0
      %5259 = vmatpush.msra.mxu0 0.0
      %5260 = vmatpush.msra.mxu0 0.0
      %5261 = vmatpush.msra.mxu0 0.0
      %5262 = vmatpush.msra.mxu0 0.0
      %5263 = vmatpush.msra.mxu0 0.0
      %5264 = vmatpush.msra.mxu0 0.0
      %5265 = vmatpush.msra.mxu0 0.0
      %5266 = vmatpush.msra.mxu0 %v5052
      %5267 = vmatpush.msra.mxu0 %v5050
      %5268 = vmatpush.msra.mxu0 %v5048
      %5269 = vmatpush.msra.mxu0 %v5046
      %5270 = vmatmul.f32.gmra.mxu0 %v5098
      %v5271 = vpop.f32.mrf.mxu0
      %v5272 = vadd.f32 %v5243, %v5271
      %5273 = vmatmul.f32.gmra.mxu0 %v5101
      %v5274 = vpop.f32.mrf.mxu0
      %v5275 = vadd.f32 %v5246, %v5274
      %5276 = vmatmul.f32.gmra.mxu0 %v5104
      %v5277 = vpop.f32.mrf.mxu0
      %v5278 = vadd.f32 %v5249, %v5277
      %5279 = vmatmul.f32.gmra.mxu0 %v5107
      %v5280 = vpop.f32.mrf.mxu0
      %v5281 = vadd.f32 %v5252, %v5280
      %5282 = vdwg.mxu0
      %v5283 = vmax.f32 %v5185, 0.0
      %v5284 = vmax.f32 %v5272, 0.0
      %v5285 = vmax.f32 %v5188, 0.0
      %v5286 = vmax.f32 %v5275, 0.0
      %v5287 = vmax.f32 %v5191, 0.0
      %v5288 = vmax.f32 %v5278, 0.0
      %v5289 = vmax.f32 %v5194, 0.0
      %v5290 = vmax.f32 %v5281, 0.0
      %v5291 = vld [vmem:[%s10] sm:$0xff]
      %v5292 = vld [vmem:[%s10 + $0x8] sm:$0xff]
      %v5293 = vld [vmem:[%s10 + $0x10] sm:$0xff]
      %v5294 = vld [vmem:[%s10 + $0x18] sm:$0xff]
      %v5295 = vld [vmem:[%s10 + $0x20] sm:$0xff]
      %v5296 = vld [vmem:[%s10 + $0x28] sm:$0xff]
      %v5297 = vld [vmem:[%s10 + $0x30] sm:$0xff]
      %v5298 = vld [vmem:[%s10 + $0x38] sm:$0xff]
      %v5299 = vld [vmem:[%s10 + $0x40] sm:$0xff]
      %v5300 = vld [vmem:[%s10 + $0x48] sm:$0xff]
      %v5301 = vld [vmem:[%s10 + $0x50] sm:$0xff]
      %v5302 = vld [vmem:[%s10 + $0x58] sm:$0xff]
      %v5303 = vld [vmem:[%s10 + $0x60] sm:$0xff]
      %v5304 = vld [vmem:[%s10 + $0x68] sm:$0xff]
      %v5305 = vld [vmem:[%s10 + $0x70] sm:$0xff]
      %v5306 = vld [vmem:[%s10 + $0x78] sm:$0xff]
      %v5307 = vld [vmem:[%s10 + $0x80] sm:$0xff]
      %v5308 = vld [vmem:[%s10 + $0x88] sm:$0xff]
      %v5309 = vld [vmem:[%s10 + $0x90] sm:$0xff]
      %v5310 = vld [vmem:[%s10 + $0x98] sm:$0xff]
      %v5311 = vld [vmem:[%s10 + $0xa0] sm:$0xff]
      %v5312 = vld [vmem:[%s10 + $0xa8] sm:$0xff]
      %v5313 = vld [vmem:[%s10 + $0xb0] sm:$0xff]
      %v5314 = vld [vmem:[%s10 + $0xb8] sm:$0xff]
      %v5315 = vld [vmem:[%s10 + $0xc0] sm:$0xff]
      %v5316 = vld [vmem:[%s10 + $0xc8] sm:$0xff]
      %v5317 = vld [vmem:[%s10 + $0xd0] sm:$0xff]
      %v5318 = vld [vmem:[%s10 + $0xd8] sm:$0xff]
      %v5319 = vld [vmem:[%s10 + $0xe0] sm:$0xff]
      %v5320 = vld [vmem:[%s10 + $0xe8] sm:$0xff]
      %v5321 = vld [vmem:[%s10 + $0xf0] sm:$0xff]
      %v5322 = vld [vmem:[%s10 + $0xf8] sm:$0xff]
      %v5323 = vld [vmem:[%s10 + $0x100] sm:$0xff]
      %v5324 = vld [vmem:[%s10 + $0x108] sm:$0xff]
      %v5325 = vld [vmem:[%s10 + $0x110] sm:$0xff]
      %v5326 = vld [vmem:[%s10 + $0x118] sm:$0xff]
      %v5327 = vld [vmem:[%s10 + $0x120] sm:$0xff]
      %v5328 = vld [vmem:[%s10 + $0x128] sm:$0xff]
      %v5329 = vld [vmem:[%s10 + $0x130] sm:$0xff]
      %v5330 = vld [vmem:[%s10 + $0x138] sm:$0xff]
      %v5331 = vld [vmem:[%s10 + $0x140] sm:$0xff]
      %v5332 = vld [vmem:[%s10 + $0x148] sm:$0xff]
      %v5333 = vld [vmem:[%s10 + $0x150] sm:$0xff]
      %v5334 = vld [vmem:[%s10 + $0x158] sm:$0xff]
      %v5335 = vld [vmem:[%s10 + $0x160] sm:$0xff]
      %v5336 = vld [vmem:[%s10 + $0x168] sm:$0xff]
      %v5337 = vld [vmem:[%s10 + $0x170] sm:$0xff]
      %v5338 = vld [vmem:[%s10 + $0x178] sm:$0xff]
      %v5339 = vld [vmem:[%s10 + $0x180] sm:$0xff]
      %v5340 = vld [vmem:[%s10 + $0x188] sm:$0xff]
      %v5341 = vld [vmem:[%s10 + $0x190] sm:$0xff]
      %v5342 = vld [vmem:[%s10 + $0x198] sm:$0xff]
      %v5343 = vld [vmem:[%s10 + $0x1a0] sm:$0xff]
      %v5344 = vld [vmem:[%s10 + $0x1a8] sm:$0xff]
      %v5345 = vld [vmem:[%s10 + $0x1b0] sm:$0xff]
      %v5346 = vld [vmem:[%s10 + $0x1b8] sm:$0xff]
      %v5347 = vld [vmem:[%s10 + $0x1c0] sm:$0xff]
      %v5348 = vld [vmem:[%s10 + $0x1c8] sm:$0xff]
      %v5349 = vld [vmem:[%s10 + $0x1d0] sm:$0xff]
      %v5350 = vld [vmem:[%s10 + $0x1d8] sm:$0xff]
      %v5351 = vld [vmem:[%s10 + $0x1e0] sm:$0xff]
      %v5352 = vld [vmem:[%s10 + $0x1e8] sm:$0xff]
      %v5353 = vld [vmem:[%s10 + $0x1f0] sm:$0xff]
      %v5354 = vld [vmem:[%s10 + $0x1f8] sm:$0xff]
      %v5355 = vld [vmem:[%s10 + $0x200] sm:$0xff]
      %v5356 = vld [vmem:[%s10 + $0x208] sm:$0xff]
      %v5357 = vld [vmem:[%s10 + $0x210] sm:$0xff]
      %v5358 = vld [vmem:[%s10 + $0x218] sm:$0xff]
      %v5359 = vld [vmem:[%s10 + $0x220] sm:$0xff]
      %v5360 = vld [vmem:[%s10 + $0x228] sm:$0xff]
      %v5361 = vld [vmem:[%s10 + $0x230] sm:$0xff]
      %v5362 = vld [vmem:[%s10 + $0x238] sm:$0xff]
      %v5363 = vld [vmem:[%s10 + $0x240] sm:$0xff]
      %v5364 = vld [vmem:[%s10 + $0x248] sm:$0xff]
      %v5365 = vld [vmem:[%s10 + $0x250] sm:$0xff]
      %v5366 = vld [vmem:[%s10 + $0x258] sm:$0xff]
      %v5367 = vld [vmem:[%s10 + $0x260] sm:$0xff]
      %v5368 = vld [vmem:[%s10 + $0x268] sm:$0xff]
      %v5369 = vld [vmem:[%s10 + $0x270] sm:$0xff]
      %v5370 = vld [vmem:[%s10 + $0x278] sm:$0xff]
      %v5371 = vld [vmem:[%s10 + $0x280] sm:$0xff]
      %v5372 = vld [vmem:[%s10 + $0x288] sm:$0xff]
      %v5373 = vld [vmem:[%s10 + $0x290] sm:$0xff]
      %v5374 = vld [vmem:[%s10 + $0x298] sm:$0xff]
      %v5375 = vld [vmem:[%s10 + $0x2a0] sm:$0xff]
      %v5376 = vld [vmem:[%s10 + $0x2a8] sm:$0xff]
      %v5377 = vld [vmem:[%s10 + $0x2b0] sm:$0xff]
      %v5378 = vld [vmem:[%s10 + $0x2b8] sm:$0xff]
      %v5379 = vld [vmem:[%s10 + $0x2c0] sm:$0xff]
      %v5380 = vld [vmem:[%s10 + $0x2c8] sm:$0xff]
      %v5381 = vld [vmem:[%s10 + $0x2d0] sm:$0xff]
      %v5382 = vld [vmem:[%s10 + $0x2d8] sm:$0xff]
      %v5383 = vld [vmem:[%s10 + $0x2e0] sm:$0xff]
      %v5384 = vld [vmem:[%s10 + $0x2e8] sm:$0xff]
      %v5385 = vld [vmem:[%s10 + $0x2f0] sm:$0xff]
      %v5386 = vld [vmem:[%s10 + $0x2f8] sm:$0xff]
      %v5387 = vld [vmem:[%s10 + $0x300] sm:$0xff]
      %v5388 = vld [vmem:[%s10 + $0x308] sm:$0xff]
      %v5389 = vld [vmem:[%s10 + $0x310] sm:$0xff]
      %v5390 = vld [vmem:[%s10 + $0x318] sm:$0xff]
      %v5391 = vld [vmem:[%s10 + $0x320] sm:$0xff]
      %v5392 = vld [vmem:[%s10 + $0x328] sm:$0xff]
      %v5393 = vld [vmem:[%s10 + $0x330] sm:$0xff]
      %v5394 = vld [vmem:[%s10 + $0x338] sm:$0xff]
      %v5395 = vld [vmem:[%s10 + $0x340] sm:$0xff]
      %v5396 = vld [vmem:[%s10 + $0x348] sm:$0xff]
      %v5397 = vld [vmem:[%s10 + $0x350] sm:$0xff]
      %v5398 = vld [vmem:[%s10 + $0x358] sm:$0xff]
      %v5399 = vld [vmem:[%s10 + $0x360] sm:$0xff]
      %v5400 = vld [vmem:[%s10 + $0x368] sm:$0xff]
      %v5401 = vld [vmem:[%s10 + $0x370] sm:$0xff]
      %v5402 = vld [vmem:[%s10 + $0x378] sm:$0xff]
      %v5403 = vld [vmem:[%s10 + $0x380] sm:$0xff]
      %v5404 = vld [vmem:[%s10 + $0x388] sm:$0xff]
      %v5405 = vld [vmem:[%s10 + $0x390] sm:$0xff]
      %v5406 = vld [vmem:[%s10 + $0x398] sm:$0xff]
      %v5407 = vld [vmem:[%s10 + $0x3a0] sm:$0xff]
      %v5408 = vld [vmem:[%s10 + $0x3a8] sm:$0xff]
      %v5409 = vld [vmem:[%s10 + $0x3b0] sm:$0xff]
      %v5410 = vld [vmem:[%s10 + $0x3b8] sm:$0xff]
      %v5411 = vld [vmem:[%s10 + $0x3c0] sm:$0xff]
      %v5412 = vld [vmem:[%s10 + $0x3c8] sm:$0xff]
      %v5413 = vld [vmem:[%s10 + $0x3d0] sm:$0xff]
      %v5414 = vld [vmem:[%s10 + $0x3d8] sm:$0xff]
      %v5415 = vld [vmem:[%s10 + $0x3e0] sm:$0xff]
      %v5416 = vld [vmem:[%s10 + $0x3e8] sm:$0xff]
      %v5417 = vld [vmem:[%s10 + $0x3f0] sm:$0xff]
      %v5418 = vld [vmem:[%s10 + $0x3f8] sm:$0xff]
      %v5419 = vld [vmem:[%s10 + $0x400] sm:$0xff]
      %v5420 = vld [vmem:[%s10 + $0x408] sm:$0xff]
      %v5421 = vld [vmem:[%s10 + $0x410] sm:$0xff]
      %v5422 = vld [vmem:[%s10 + $0x418] sm:$0xff]
      %v5423 = vld [vmem:[%s10 + $0x420] sm:$0xff]
      %v5424 = vld [vmem:[%s10 + $0x428] sm:$0xff]
      %v5425 = vld [vmem:[%s10 + $0x430] sm:$0xff]
      %v5426 = vld [vmem:[%s10 + $0x438] sm:$0xff]
      %v5427 = vld [vmem:[%s10 + $0x440] sm:$0xff]
      %v5428 = vld [vmem:[%s10 + $0x448] sm:$0xff]
      %v5429 = vld [vmem:[%s10 + $0x450] sm:$0xff]
      %v5430 = vld [vmem:[%s10 + $0x458] sm:$0xff]
      %v5431 = vld [vmem:[%s10 + $0x460] sm:$0xff]
      %v5432 = vld [vmem:[%s10 + $0x468] sm:$0xff]
      %v5433 = vld [vmem:[%s10 + $0x470] sm:$0xff]
      %v5434 = vld [vmem:[%s10 + $0x478] sm:$0xff]
      %v5435 = vld [vmem:[%s10 + $0x480] sm:$0xff]
      %v5436 = vld [vmem:[%s10 + $0x488] sm:$0xff]
      %v5437 = vld [vmem:[%s10 + $0x490] sm:$0xff]
      %v5438 = vld [vmem:[%s10 + $0x498] sm:$0xff]
      %v5439 = vld [vmem:[%s10 + $0x4a0] sm:$0xff]
      %v5440 = vld [vmem:[%s10 + $0x4a8] sm:$0xff]
      %v5441 = vld [vmem:[%s10 + $0x4b0] sm:$0xff]
      %v5442 = vld [vmem:[%s10 + $0x4b8] sm:$0xff]
      %v5443 = vld [vmem:[%s10 + $0x4c0] sm:$0xff]
      %v5444 = vld [vmem:[%s10 + $0x4c8] sm:$0xff]
      %v5445 = vld [vmem:[%s10 + $0x4d0] sm:$0xff]
      %v5446 = vld [vmem:[%s10 + $0x4d8] sm:$0xff]
      %v5447 = vld [vmem:[%s10 + $0x4e0] sm:$0xff]
      %v5448 = vld [vmem:[%s10 + $0x4e8] sm:$0xff]
      %v5449 = vld [vmem:[%s10 + $0x4f0] sm:$0xff]
      %v5450 = vld [vmem:[%s10 + $0x4f8] sm:$0xff]
      %v5451 = vld [vmem:[%s10 + $0x500] sm:$0xff]
      %v5452 = vld [vmem:[%s10 + $0x508] sm:$0xff]
      %v5453 = vld [vmem:[%s10 + $0x510] sm:$0xff]
      %v5454 = vld [vmem:[%s10 + $0x518] sm:$0xff]
      %v5455 = vld [vmem:[%s10 + $0x520] sm:$0xff]
      %v5456 = vld [vmem:[%s10 + $0x528] sm:$0xff]
      %v5457 = vld [vmem:[%s10 + $0x530] sm:$0xff]
      %v5458 = vld [vmem:[%s10 + $0x538] sm:$0xff]
      %v5459 = vld [vmem:[%s10 + $0x540] sm:$0xff]
      %v5460 = vld [vmem:[%s10 + $0x548] sm:$0xff]
      %v5461 = vld [vmem:[%s10 + $0x550] sm:$0xff]
      %v5462 = vld [vmem:[%s10 + $0x558] sm:$0xff]
      %v5463 = vld [vmem:[%s10 + $0x560] sm:$0xff]
      %v5464 = vld [vmem:[%s10 + $0x568] sm:$0xff]
      %v5465 = vld [vmem:[%s10 + $0x570] sm:$0xff]
      %v5466 = vld [vmem:[%s10 + $0x578] sm:$0xff]
      %v5467 = vld [vmem:[%s10 + $0x580] sm:$0xff]
      %v5468 = vld [vmem:[%s10 + $0x588] sm:$0xff]
      %v5469 = vld [vmem:[%s10 + $0x590] sm:$0xff]
      %v5470 = vld [vmem:[%s10 + $0x598] sm:$0xff]
      %v5471 = vld [vmem:[%s10 + $0x5a0] sm:$0xff]
      %v5472 = vld [vmem:[%s10 + $0x5a8] sm:$0xff]
      %v5473 = vld [vmem:[%s10 + $0x5b0] sm:$0xff]
      %v5474 = vld [vmem:[%s10 + $0x5b8] sm:$0xff]
      %v5475 = vld [vmem:[%s10 + $0x5c0] sm:$0xff]
      %v5476 = vld [vmem:[%s10 + $0x5c8] sm:$0xff]
      %v5477 = vld [vmem:[%s10 + $0x5d0] sm:$0xff]
      %v5478 = vld [vmem:[%s10 + $0x5d8] sm:$0xff]
      %v5479 = vld [vmem:[%s10 + $0x5e0] sm:$0xff]
      %v5480 = vld [vmem:[%s10 + $0x5e8] sm:$0xff]
      %v5481 = vld [vmem:[%s10 + $0x5f0] sm:$0xff]
      %v5482 = vld [vmem:[%s10 + $0x5f8] sm:$0xff]
      %v5483 = vld [vmem:[%s10 + $0x600] sm:$0xff]
      %v5484 = vld [vmem:[%s10 + $0x608] sm:$0xff]
      %v5485 = vld [vmem:[%s10 + $0x610] sm:$0xff]
      %v5486 = vld [vmem:[%s10 + $0x618] sm:$0xff]
      %v5487 = vld [vmem:[%s10 + $0x620] sm:$0xff]
      %v5488 = vld [vmem:[%s10 + $0x628] sm:$0xff]
      %v5489 = vld [vmem:[%s10 + $0x630] sm:$0xff]
      %v5490 = vld [vmem:[%s10 + $0x638] sm:$0xff]
      %v5491 = vld [vmem:[%s10 + $0x640] sm:$0xff]
      %v5492 = vld [vmem:[%s10 + $0x648] sm:$0xff]
      %v5493 = vld [vmem:[%s10 + $0x650] sm:$0xff]
      %v5494 = vld [vmem:[%s10 + $0x658] sm:$0xff]
      %v5495 = vld [vmem:[%s10 + $0x660] sm:$0xff]
      %v5496 = vld [vmem:[%s10 + $0x668] sm:$0xff]
      %v5497 = vld [vmem:[%s10 + $0x670] sm:$0xff]
      %v5498 = vld [vmem:[%s10 + $0x678] sm:$0xff]
      %v5499 = vld [vmem:[%s10 + $0x680] sm:$0xff]
      %v5500 = vld [vmem:[%s10 + $0x688] sm:$0xff]
      %v5501 = vld [vmem:[%s10 + $0x690] sm:$0xff]
      %v5502 = vld [vmem:[%s10 + $0x698] sm:$0xff]
      %v5503 = vld [vmem:[%s10 + $0x6a0] sm:$0xff]
      %v5504 = vld [vmem:[%s10 + $0x6a8] sm:$0xff]
      %v5505 = vld [vmem:[%s10 + $0x6b0] sm:$0xff]
      %v5506 = vld [vmem:[%s10 + $0x6b8] sm:$0xff]
      %v5507 = vld [vmem:[%s10 + $0x6c0] sm:$0xff]
      %v5508 = vld [vmem:[%s10 + $0x6c8] sm:$0xff]
      %v5509 = vld [vmem:[%s10 + $0x6d0] sm:$0xff]
      %v5510 = vld [vmem:[%s10 + $0x6d8] sm:$0xff]
      %v5511 = vld [vmem:[%s10 + $0x6e0] sm:$0xff]
      %v5512 = vld [vmem:[%s10 + $0x6e8] sm:$0xff]
      %v5513 = vld [vmem:[%s10 + $0x6f0] sm:$0xff]
      %v5514 = vld [vmem:[%s10 + $0x6f8] sm:$0xff]
      %v5515 = vld [vmem:[%s10 + $0x700] sm:$0xff]
      %v5516 = vld [vmem:[%s10 + $0x708] sm:$0xff]
      %v5517 = vld [vmem:[%s10 + $0x710] sm:$0xff]
      %v5518 = vld [vmem:[%s10 + $0x718] sm:$0xff]
      %v5519 = vld [vmem:[%s10 + $0x720] sm:$0xff]
      %v5520 = vld [vmem:[%s10 + $0x728] sm:$0xff]
      %v5521 = vld [vmem:[%s10 + $0x730] sm:$0xff]
      %v5522 = vld [vmem:[%s10 + $0x738] sm:$0xff]
      %v5523 = vld [vmem:[%s10 + $0x740] sm:$0xff]
      %v5524 = vld [vmem:[%s10 + $0x748] sm:$0xff]
      %v5525 = vld [vmem:[%s10 + $0x750] sm:$0xff]
      %v5526 = vld [vmem:[%s10 + $0x758] sm:$0xff]
      %v5527 = vld [vmem:[%s10 + $0x760] sm:$0xff]
      %v5528 = vld [vmem:[%s10 + $0x768] sm:$0xff]
      %v5529 = vld [vmem:[%s10 + $0x770] sm:$0xff]
      %v5530 = vld [vmem:[%s10 + $0x778] sm:$0xff]
      %v5531 = vld [vmem:[%s10 + $0x780] sm:$0xff]
      %v5532 = vld [vmem:[%s10 + $0x788] sm:$0xff]
      %v5533 = vld [vmem:[%s10 + $0x790] sm:$0xff]
      %v5534 = vld [vmem:[%s10 + $0x798] sm:$0xff]
      %v5535 = vld [vmem:[%s10 + $0x7a0] sm:$0xff]
      %v5536 = vld [vmem:[%s10 + $0x7a8] sm:$0xff]
      %v5537 = vld [vmem:[%s10 + $0x7b0] sm:$0xff]
      %v5538 = vld [vmem:[%s10 + $0x7b8] sm:$0xff]
      %v5539 = vld [vmem:[%s10 + $0x7c0] sm:$0xff]
      %v5540 = vld [vmem:[%s10 + $0x7c8] sm:$0xff]
      %v5541 = vld [vmem:[%s10 + $0x7d0] sm:$0xff]
      %v5542 = vld [vmem:[%s10 + $0x7d8] sm:$0xff]
      %v5543 = vld [vmem:[%s10 + $0x7e0] sm:$0xff]
      %v5544 = vld [vmem:[%s10 + $0x7e8] sm:$0xff]
      %v5545 = vld [vmem:[%s10 + $0x7f0] sm:$0xff]
      %v5546 = vld [vmem:[%s10 + $0x7f8] sm:$0xff]
      %5547 = vmatpush.msra.mxu0 %v5411
      %5548 = vmatpush.msra.mxu0 %v5403
      %5549 = vmatpush.msra.mxu0 %v5395
      %5550 = vmatpush.msra.mxu0 %v5387
      %5551 = vmatpush.msra.mxu0 %v5379
      %5552 = vmatpush.msra.mxu0 %v5371
      %5553 = vmatpush.msra.mxu0 %v5363
      %5554 = vmatpush.msra.mxu0 %v5355
      %5555 = vmatpush.msra.mxu0 %v5347
      %5556 = vmatpush.msra.mxu0 %v5339
      %5557 = vmatpush.msra.mxu0 %v5331
      %5558 = vmatpush.msra.mxu0 %v5323
      %5559 = vmatpush.msra.mxu0 %v5315
      %5560 = vmatpush.msra.mxu0 %v5307
      %5561 = vmatpush.msra.mxu0 %v5299
      %5562 = vmatpush.msra.mxu0 %v5291
      %5563 = vmatmul.f32.gmra.mxu0 %v5283
      %v5564 = vpop.f32.mrf.mxu0
      %v5565 = vadd.f32 0.0, %v5564
      %5566 = vmatmul.f32.gmra.mxu0 %v5285
      %v5567 = vpop.f32.mrf.mxu0
      %v5568 = vadd.f32 0.0, %v5567
      %5569 = vmatmul.f32.gmra.mxu0 %v5287
      %v5570 = vpop.f32.mrf.mxu0
      %v5571 = vadd.f32 0.0, %v5570
      %5572 = vmatmul.f32.gmra.mxu0 %v5289
      %v5573 = vpop.f32.mrf.mxu0
      %v5574 = vadd.f32 0.0, %v5573
      %5575 = vdwg.mxu0
      %5576 = vmatpush.msra.mxu0 %v5539
      %5577 = vmatpush.msra.mxu0 %v5531
      %5578 = vmatpush.msra.mxu0 %v5523
      %5579 = vmatpush.msra.mxu0 %v5515
      %5580 = vmatpush.msra.mxu0 %v5507
      %5581 = vmatpush.msra.mxu0 %v5499
      %5582 = vmatpush.msra.mxu0 %v5491
      %5583 = vmatpush.msra.mxu0 %v5483
      %5584 = vmatpush.msra.mxu0 %v5475
      %5585 = vmatpush.msra.mxu0 %v5467
      %5586 = vmatpush.msra.mxu0 %v5459
      %5587 = vmatpush.msra.mxu0 %v5451
      %5588 = vmatpush.msra.mxu0 %v5443
      %5589 = vmatpush.msra.mxu0 %v5435
      %5590 = vmatpush.msra.mxu0 %v5427
      %5591 = vmatpush.msra.mxu0 %v5419
      %5592 = vmatmul.f32.gmra.mxu0 %v5284
      %v5593 = vpop.f32.mrf.mxu0
      %v5594 = vadd.f32 %v5565, %v5593
      %5595 = vmatmul.f32.gmra.mxu0 %v5286
      %v5596 = vpop.f32.mrf.mxu0
      %v5597 = vadd.f32 %v5568, %v5596
      %5598 = vmatmul.f32.gmra.mxu0 %v5288
      %v5599 = vpop.f32.mrf.mxu0
      %v5600 = vadd.f32 %v5571, %v5599
      %5601 = vmatmul.f32.gmra.mxu0 %v5290
      %v5602 = vpop.f32.mrf.mxu0
      %v5603 = vadd.f32 %v5574, %v5602
      %5604 = vdwg.mxu0
      %5605 = vmatpush.msra.mxu0 %v5412
      %5606 = vmatpush.msra.mxu0 %v5404
      %5607 = vmatpush.msra.mxu0 %v5396
      %5608 = vmatpush.msra.mxu0 %v5388
      %5609 = vmatpush.msra.mxu0 %v5380
      %5610 = vmatpush.msra.mxu0 %v5372
      %5611 = vmatpush.msra.mxu0 %v5364
      %5612 = vmatpush.msra.mxu0 %v5356
      %5613 = vmatpush.msra.mxu0 %v5348
      %5614 = vmatpush.msra.mxu0 %v5340
      %5615 = vmatpush.msra.mxu0 %v5332
      %5616 = vmatpush.msra.mxu0 %v5324
      %5617 = vmatpush.msra.mxu0 %v5316
      %5618 = vmatpush.msra.mxu0 %v5308
      %5619 = vmatpush.msra.mxu0 %v5300
      %5620 = vmatpush.msra.mxu0 %v5292
      %5621 = vmatmul.f32.gmra.mxu0 %v5283
      %v5622 = vpop.f32.mrf.mxu0
      %v5623 = vadd.f32 0.0, %v5622
      %5624 = vmatmul.f32.gmra.mxu0 %v5285
      %v5625 = vpop.f32.mrf.mxu0
      %v5626 = vadd.f32 0.0, %v5625
      %5627 = vmatmul.f32.gmra.mxu0 %v5287
      %v5628 = vpop.f32.mrf.mxu0
      %v5629 = vadd.f32 0.0, %v5628
      %5630 = vmatmul.f32.gmra.mxu0 %v5289
      %v5631 = vpop.f32.mrf.mxu0
      %v5632 = vadd.f32 0.0, %v5631
      %5633 = vdwg.mxu0
      %5634 = vmatpush.msra.mxu0 %v5540
      %5635 = vmatpush.msra.mxu0 %v5532
      %5636 = vmatpush.msra.mxu0 %v5524
      %5637 = vmatpush.msra.mxu0 %v5516
      %5638 = vmatpush.msra.mxu0 %v5508
      %5639 = vmatpush.msra.mxu0 %v5500
      %5640 = vmatpush.msra.mxu0 %v5492
      %5641 = vmatpush.msra.mxu0 %v5484
      %5642 = vmatpush.msra.mxu0 %v5476
      %5643 = vmatpush.msra.mxu0 %v5468
      %5644 = vmatpush.msra.mxu0 %v5460
      %5645 = vmatpush.msra.mxu0 %v5452
      %5646 = vmatpush.msra.mxu0 %v5444
      %5647 = vmatpush.msra.mxu0 %v5436
      %5648 = vmatpush.msra.mxu0 %v5428
      %5649 = vmatpush.msra.mxu0 %v5420
      %5650 = vmatmul.f32.gmra.mxu0 %v5284
      %v5651 = vpop.f32.mrf.mxu0
      %v5652 = vadd.f32 %v5623, %v5651
      %5653 = vmatmul.f32.gmra.mxu0 %v5286
      %v5654 = vpop.f32.mrf.mxu0
      %v5655 = vadd.f32 %v5626, %v5654
      %5656 = vmatmul.f32.gmra.mxu0 %v5288
      %v5657 = vpop.f32.mrf.mxu0
      %v5658 = vadd.f32 %v5629, %v5657
      %5659 = vmatmul.f32.gmra.mxu0 %v5290
      %v5660 = vpop.f32.mrf.mxu0
      %v5661 = vadd.f32 %v5632, %v5660
      %5662 = vdwg.mxu0
      %5663 = vmatpush.msra.mxu0 %v5413
      %5664 = vmatpush.msra.mxu0 %v5405
      %5665 = vmatpush.msra.mxu0 %v5397
      %5666 = vmatpush.msra.mxu0 %v5389
      %5667 = vmatpush.msra.mxu0 %v5381
      %5668 = vmatpush.msra.mxu0 %v5373
      %5669 = vmatpush.msra.mxu0 %v5365
      %5670 = vmatpush.msra.mxu0 %v5357
      %5671 = vmatpush.msra.mxu0 %v5349
      %5672 = vmatpush.msra.mxu0 %v5341
      %5673 = vmatpush.msra.mxu0 %v5333
      %5674 = vmatpush.msra.mxu0 %v5325
      %5675 = vmatpush.msra.mxu0 %v5317
      %5676 = vmatpush.msra.mxu0 %v5309
      %5677 = vmatpush.msra.mxu0 %v5301
      %5678 = vmatpush.msra.mxu0 %v5293
      %5679 = vmatmul.f32.gmra.mxu0 %v5283
      %v5680 = vpop.f32.mrf.mxu0
      %v5681 = vadd.f32 0.0, %v5680
      %5682 = vmatmul.f32.gmra.mxu0 %v5285
      %v5683 = vpop.f32.mrf.mxu0
      %v5684 = vadd.f32 0.0, %v5683
      %5685 = vmatmul.f32.gmra.mxu0 %v5287
      %v5686 = vpop.f32.mrf.mxu0
      %v5687 = vadd.f32 0.0, %v5686
      %5688 = vmatmul.f32.gmra.mxu0 %v5289
      %v5689 = vpop.f32.mrf.mxu0
      %v5690 = vadd.f32 0.0, %v5689
      %5691 = vdwg.mxu0
      %5692 = vmatpush.msra.mxu0 %v5541
      %5693 = vmatpush.msra.mxu0 %v5533
      %5694 = vmatpush.msra.mxu0 %v5525
      %5695 = vmatpush.msra.mxu0 %v5517
      %5696 = vmatpush.msra.mxu0 %v5509
      %5697 = vmatpush.msra.mxu0 %v5501
      %5698 = vmatpush.msra.mxu0 %v5493
      %5699 = vmatpush.msra.mxu0 %v5485
      %5700 = vmatpush.msra.mxu0 %v5477
      %5701 = vmatpush.msra.mxu0 %v5469
      %5702 = vmatpush.msra.mxu0 %v5461
      %5703 = vmatpush.msra.mxu0 %v5453
      %5704 = vmatpush.msra.mxu0 %v5445
      %5705 = vmatpush.msra.mxu0 %v5437
      %5706 = vmatpush.msra.mxu0 %v5429
      %5707 = vmatpush.msra.mxu0 %v5421
      %5708 = vmatmul.f32.gmra.mxu0 %v5284
      %v5709 = vpop.f32.mrf.mxu0
      %v5710 = vadd.f32 %v5681, %v5709
      %5711 = vmatmul.f32.gmra.mxu0 %v5286
      %v5712 = vpop.f32.mrf.mxu0
      %v5713 = vadd.f32 %v5684, %v5712
      %5714 = vmatmul.f32.gmra.mxu0 %v5288
      %v5715 = vpop.f32.mrf.mxu0
      %v5716 = vadd.f32 %v5687, %v5715
      %5717 = vmatmul.f32.gmra.mxu0 %v5290
      %v5718 = vpop.f32.mrf.mxu0
      %v5719 = vadd.f32 %v5690, %v5718
      %5720 = vdwg.mxu0
      %5721 = vmatpush.msra.mxu0 %v5414
      %5722 = vmatpush.msra.mxu0 %v5406
      %5723 = vmatpush.msra.mxu0 %v5398
      %5724 = vmatpush.msra.mxu0 %v5390
      %5725 = vmatpush.msra.mxu0 %v5382
      %5726 = vmatpush.msra.mxu0 %v5374
      %5727 = vmatpush.msra.mxu0 %v5366
      %5728 = vmatpush.msra.mxu0 %v5358
      %5729 = vmatpush.msra.mxu0 %v5350
      %5730 = vmatpush.msra.mxu0 %v5342
      %5731 = vmatpush.msra.mxu0 %v5334
      %5732 = vmatpush.msra.mxu0 %v5326
      %5733 = vmatpush.msra.mxu0 %v5318
      %5734 = vmatpush.msra.mxu0 %v5310
      %5735 = vmatpush.msra.mxu0 %v5302
      %5736 = vmatpush.msra.mxu0 %v5294
      %5737 = vmatmul.f32.gmra.mxu0 %v5283
      %v5738 = vpop.f32.mrf.mxu0
      %v5739 = vadd.f32 0.0, %v5738
      %5740 = vmatmul.f32.gmra.mxu0 %v5285
      %v5741 = vpop.f32.mrf.mxu0
      %v5742 = vadd.f32 0.0, %v5741
      %5743 = vmatmul.f32.gmra.mxu0 %v5287
      %v5744 = vpop.f32.mrf.mxu0
      %v5745 = vadd.f32 0.0, %v5744
      %5746 = vmatmul.f32.gmra.mxu0 %v5289
      %v5747 = vpop.f32.mrf.mxu0
      %v5748 = vadd.f32 0.0, %v5747
      %5749 = vdwg.mxu0
      %5750 = vmatpush.msra.mxu0 %v5542
      %5751 = vmatpush.msra.mxu0 %v5534
      %5752 = vmatpush.msra.mxu0 %v5526
      %5753 = vmatpush.msra.mxu0 %v5518
      %5754 = vmatpush.msra.mxu0 %v5510
      %5755 = vmatpush.msra.mxu0 %v5502
      %5756 = vmatpush.msra.mxu0 %v5494
      %5757 = vmatpush.msra.mxu0 %v5486
      %5758 = vmatpush.msra.mxu0 %v5478
      %5759 = vmatpush.msra.mxu0 %v5470
      %5760 = vmatpush.msra.mxu0 %v5462
      %5761 = vmatpush.msra.mxu0 %v5454
      %5762 = vmatpush.msra.mxu0 %v5446
      %5763 = vmatpush.msra.mxu0 %v5438
      %5764 = vmatpush.msra.mxu0 %v5430
      %5765 = vmatpush.msra.mxu0 %v5422
      %5766 = vmatmul.f32.gmra.mxu0 %v5284
      %v5767 = vpop.f32.mrf.mxu0
      %v5768 = vadd.f32 %v5739, %v5767
      %5769 = vmatmul.f32.gmra.mxu0 %v5286
      %v5770 = vpop.f32.mrf.mxu0
      %v5771 = vadd.f32 %v5742, %v5770
      %5772 = vmatmul.f32.gmra.mxu0 %v5288
      %v5773 = vpop.f32.mrf.mxu0
      %v5774 = vadd.f32 %v5745, %v5773
      %5775 = vmatmul.f32.gmra.mxu0 %v5290
      %v5776 = vpop.f32.mrf.mxu0
      %v5777 = vadd.f32 %v5748, %v5776
      %5778 = vdwg.mxu0
      %5779 = vmatpush.msra.mxu0 %v5415
      %5780 = vmatpush.msra.mxu0 %v5407
      %5781 = vmatpush.msra.mxu0 %v5399
      %5782 = vmatpush.msra.mxu0 %v5391
      %5783 = vmatpush.msra.mxu0 %v5383
      %5784 = vmatpush.msra.mxu0 %v5375
      %5785 = vmatpush.msra.mxu0 %v5367
      %5786 = vmatpush.msra.mxu0 %v5359
      %5787 = vmatpush.msra.mxu0 %v5351
      %5788 = vmatpush.msra.mxu0 %v5343
      %5789 = vmatpush.msra.mxu0 %v5335
      %5790 = vmatpush.msra.mxu0 %v5327
      %5791 = vmatpush.msra.mxu0 %v5319
      %5792 = vmatpush.msra.mxu0 %v5311
      %5793 = vmatpush.msra.mxu0 %v5303
      %5794 = vmatpush.msra.mxu0 %v5295
      %5795 = vmatmul.f32.gmra.mxu0 %v5283
      %v5796 = vpop.f32.mrf.mxu0
      %v5797 = vadd.f32 0.0, %v5796
      %5798 = vmatmul.f32.gmra.mxu0 %v5285
      %v5799 = vpop.f32.mrf.mxu0
      %v5800 = vadd.f32 0.0, %v5799
      %5801 = vmatmul.f32.gmra.mxu0 %v5287
      %v5802 = vpop.f32.mrf.mxu0
      %v5803 = vadd.f32 0.0, %v5802
      %5804 = vmatmul.f32.gmra.mxu0 %v5289
      %v5805 = vpop.f32.mrf.mxu0
      %v5806 = vadd.f32 0.0, %v5805
      %5807 = vdwg.mxu0
      %5808 = vmatpush.msra.mxu0 %v5543
      %5809 = vmatpush.msra.mxu0 %v5535
      %5810 = vmatpush.msra.mxu0 %v5527
      %5811 = vmatpush.msra.mxu0 %v5519
      %5812 = vmatpush.msra.mxu0 %v5511
      %5813 = vmatpush.msra.mxu0 %v5503
      %5814 = vmatpush.msra.mxu0 %v5495
      %5815 = vmatpush.msra.mxu0 %v5487
      %5816 = vmatpush.msra.mxu0 %v5479
      %5817 = vmatpush.msra.mxu0 %v5471
      %5818 = vmatpush.msra.mxu0 %v5463
      %5819 = vmatpush.msra.mxu0 %v5455
      %5820 = vmatpush.msra.mxu0 %v5447
      %5821 = vmatpush.msra.mxu0 %v5439
      %5822 = vmatpush.msra.mxu0 %v5431
      %5823 = vmatpush.msra.mxu0 %v5423
      %5824 = vmatmul.f32.gmra.mxu0 %v5284
      %v5825 = vpop.f32.mrf.mxu0
      %v5826 = vadd.f32 %v5797, %v5825
      %5827 = vmatmul.f32.gmra.mxu0 %v5286
      %v5828 = vpop.f32.mrf.mxu0
      %v5829 = vadd.f32 %v5800, %v5828
      %5830 = vmatmul.f32.gmra.mxu0 %v5288
      %v5831 = vpop.f32.mrf.mxu0
      %v5832 = vadd.f32 %v5803, %v5831
      %5833 = vmatmul.f32.gmra.mxu0 %v5290
      %v5834 = vpop.f32.mrf.mxu0
      %v5835 = vadd.f32 %v5806, %v5834
      %5836 = vdwg.mxu0
      %5837 = vmatpush.msra.mxu0 %v5416
      %5838 = vmatpush.msra.mxu0 %v5408
      %5839 = vmatpush.msra.mxu0 %v5400
      %5840 = vmatpush.msra.mxu0 %v5392
      %5841 = vmatpush.msra.mxu0 %v5384
      %5842 = vmatpush.msra.mxu0 %v5376
      %5843 = vmatpush.msra.mxu0 %v5368
      %5844 = vmatpush.msra.mxu0 %v5360
      %5845 = vmatpush.msra.mxu0 %v5352
      %5846 = vmatpush.msra.mxu0 %v5344
      %5847 = vmatpush.msra.mxu0 %v5336
      %5848 = vmatpush.msra.mxu0 %v5328
      %5849 = vmatpush.msra.mxu0 %v5320
      %5850 = vmatpush.msra.mxu0 %v5312
      %5851 = vmatpush.msra.mxu0 %v5304
      %5852 = vmatpush.msra.mxu0 %v5296
      %5853 = vmatmul.f32.gmra.mxu0 %v5283
      %v5854 = vpop.f32.mrf.mxu0
      %v5855 = vadd.f32 0.0, %v5854
      %5856 = vmatmul.f32.gmra.mxu0 %v5285
      %v5857 = vpop.f32.mrf.mxu0
      %v5858 = vadd.f32 0.0, %v5857
      %5859 = vmatmul.f32.gmra.mxu0 %v5287
      %v5860 = vpop.f32.mrf.mxu0
      %v5861 = vadd.f32 0.0, %v5860
      %5862 = vmatmul.f32.gmra.mxu0 %v5289
      %v5863 = vpop.f32.mrf.mxu0
      %v5864 = vadd.f32 0.0, %v5863
      %5865 = vdwg.mxu0
      %5866 = vmatpush.msra.mxu0 %v5544
      %5867 = vmatpush.msra.mxu0 %v5536
      %5868 = vmatpush.msra.mxu0 %v5528
      %5869 = vmatpush.msra.mxu0 %v5520
      %5870 = vmatpush.msra.mxu0 %v5512
      %5871 = vmatpush.msra.mxu0 %v5504
      %5872 = vmatpush.msra.mxu0 %v5496
      %5873 = vmatpush.msra.mxu0 %v5488
      %5874 = vmatpush.msra.mxu0 %v5480
      %5875 = vmatpush.msra.mxu0 %v5472
      %5876 = vmatpush.msra.mxu0 %v5464
      %5877 = vmatpush.msra.mxu0 %v5456
      %5878 = vmatpush.msra.mxu0 %v5448
      %5879 = vmatpush.msra.mxu0 %v5440
      %5880 = vmatpush.msra.mxu0 %v5432
      %5881 = vmatpush.msra.mxu0 %v5424
      %5882 = vmatmul.f32.gmra.mxu0 %v5284
      %v5883 = vpop.f32.mrf.mxu0
      %v5884 = vadd.f32 %v5855, %v5883
      %5885 = vmatmul.f32.gmra.mxu0 %v5286
      %v5886 = vpop.f32.mrf.mxu0
      %v5887 = vadd.f32 %v5858, %v5886
      %5888 = vmatmul.f32.gmra.mxu0 %v5288
      %v5889 = vpop.f32.mrf.mxu0
      %v5890 = vadd.f32 %v5861, %v5889
      %5891 = vmatmul.f32.gmra.mxu0 %v5290
      %v5892 = vpop.f32.mrf.mxu0
      %v5893 = vadd.f32 %v5864, %v5892
      %5894 = vdwg.mxu0
      %5895 = vmatpush.msra.mxu0 %v5417
      %5896 = vmatpush.msra.mxu0 %v5409
      %5897 = vmatpush.msra.mxu0 %v5401
      %5898 = vmatpush.msra.mxu0 %v5393
      %5899 = vmatpush.msra.mxu0 %v5385
      %5900 = vmatpush.msra.mxu0 %v5377
      %5901 = vmatpush.msra.mxu0 %v5369
      %5902 = vmatpush.msra.mxu0 %v5361
      %5903 = vmatpush.msra.mxu0 %v5353
      %5904 = vmatpush.msra.mxu0 %v5345
      %5905 = vmatpush.msra.mxu0 %v5337
      %5906 = vmatpush.msra.mxu0 %v5329
      %5907 = vmatpush.msra.mxu0 %v5321
      %5908 = vmatpush.msra.mxu0 %v5313
      %5909 = vmatpush.msra.mxu0 %v5305
      %5910 = vmatpush.msra.mxu0 %v5297
      %5911 = vmatmul.f32.gmra.mxu0 %v5283
      %v5912 = vpop.f32.mrf.mxu0
      %v5913 = vadd.f32 0.0, %v5912
      %5914 = vmatmul.f32.gmra.mxu0 %v5285
      %v5915 = vpop.f32.mrf.mxu0
      %v5916 = vadd.f32 0.0, %v5915
      %5917 = vmatmul.f32.gmra.mxu0 %v5287
      %v5918 = vpop.f32.mrf.mxu0
      %v5919 = vadd.f32 0.0, %v5918
      %5920 = vmatmul.f32.gmra.mxu0 %v5289
      %v5921 = vpop.f32.mrf.mxu0
      %v5922 = vadd.f32 0.0, %v5921
      %5923 = vdwg.mxu0
      %5924 = vmatpush.msra.mxu0 %v5545
      %5925 = vmatpush.msra.mxu0 %v5537
      %5926 = vmatpush.msra.mxu0 %v5529
      %5927 = vmatpush.msra.mxu0 %v5521
      %5928 = vmatpush.msra.mxu0 %v5513
      %5929 = vmatpush.msra.mxu0 %v5505
      %5930 = vmatpush.msra.mxu0 %v5497
      %5931 = vmatpush.msra.mxu0 %v5489
      %5932 = vmatpush.msra.mxu0 %v5481
      %5933 = vmatpush.msra.mxu0 %v5473
      %5934 = vmatpush.msra.mxu0 %v5465
      %5935 = vmatpush.msra.mxu0 %v5457
      %5936 = vmatpush.msra.mxu0 %v5449
      %5937 = vmatpush.msra.mxu0 %v5441
      %5938 = vmatpush.msra.mxu0 %v5433
      %5939 = vmatpush.msra.mxu0 %v5425
      %5940 = vmatmul.f32.gmra.mxu0 %v5284
      %v5941 = vpop.f32.mrf.mxu0
      %v5942 = vadd.f32 %v5913, %v5941
      %5943 = vmatmul.f32.gmra.mxu0 %v5286
      %v5944 = vpop.f32.mrf.mxu0
      %v5945 = vadd.f32 %v5916, %v5944
      %5946 = vmatmul.f32.gmra.mxu0 %v5288
      %v5947 = vpop.f32.mrf.mxu0
      %v5948 = vadd.f32 %v5919, %v5947
      %5949 = vmatmul.f32.gmra.mxu0 %v5290
      %v5950 = vpop.f32.mrf.mxu0
      %v5951 = vadd.f32 %v5922, %v5950
      %5952 = vdwg.mxu0
      %5953 = vmatpush.msra.mxu0 %v5418
      %5954 = vmatpush.msra.mxu0 %v5410
      %5955 = vmatpush.msra.mxu0 %v5402
      %5956 = vmatpush.msra.mxu0 %v5394
      %5957 = vmatpush.msra.mxu0 %v5386
      %5958 = vmatpush.msra.mxu0 %v5378
      %5959 = vmatpush.msra.mxu0 %v5370
      %5960 = vmatpush.msra.mxu0 %v5362
      %5961 = vmatpush.msra.mxu0 %v5354
      %5962 = vmatpush.msra.mxu0 %v5346
      %5963 = vmatpush.msra.mxu0 %v5338
      %5964 = vmatpush.msra.mxu0 %v5330
      %5965 = vmatpush.msra.mxu0 %v5322
      %5966 = vmatpush.msra.mxu0 %v5314
      %5967 = vmatpush.msra.mxu0 %v5306
      %5968 = vmatpush.msra.mxu0 %v5298
      %5969 = vmatmul.f32.gmra.mxu0 %v5283
      %v5970 = vpop.f32.mrf.mxu0
      %v5971 = vadd.f32 0.0, %v5970
      %5972 = vmatmul.f32.gmra.mxu0 %v5285
      %v5973 = vpop.f32.mrf.mxu0
      %v5974 = vadd.f32 0.0, %v5973
      %5975 = vmatmul.f32.gmra.mxu0 %v5287
      %v5976 = vpop.f32.mrf.mxu0
      %v5977 = vadd.f32 0.0, %v5976
      %5978 = vmatmul.f32.gmra.mxu0 %v5289
      %v5979 = vpop.f32.mrf.mxu0
      %v5980 = vadd.f32 0.0, %v5979
      %5981 = vdwg.mxu0
      %5982 = vmatpush.msra.mxu0 %v5546
      %5983 = vmatpush.msra.mxu0 %v5538
      %5984 = vmatpush.msra.mxu0 %v5530
      %5985 = vmatpush.msra.mxu0 %v5522
      %5986 = vmatpush.msra.mxu0 %v5514
      %5987 = vmatpush.msra.mxu0 %v5506
      %5988 = vmatpush.msra.mxu0 %v5498
      %5989 = vmatpush.msra.mxu0 %v5490
      %5990 = vmatpush.msra.mxu0 %v5482
      %5991 = vmatpush.msra.mxu0 %v5474
      %5992 = vmatpush.msra.mxu0 %v5466
      %5993 = vmatpush.msra.mxu0 %v5458
      %5994 = vmatpush.msra.mxu0 %v5450
      %5995 = vmatpush.msra.mxu0 %v5442
      %5996 = vmatpush.msra.mxu0 %v5434
      %5997 = vmatpush.msra.mxu0 %v5426
      %5998 = vmatmul.f32.gmra.mxu0 %v5284
      %v5999 = vpop.f32.mrf.mxu0
      %v6000 = vadd.f32 %v5971, %v5999
      %6001 = vmatmul.f32.gmra.mxu0 %v5286
      %v6002 = vpop.f32.mrf.mxu0
      %v6003 = vadd.f32 %v5974, %v6002
      %6004 = vmatmul.f32.gmra.mxu0 %v5288
      %v6005 = vpop.f32.mrf.mxu0
      %v6006 = vadd.f32 %v5977, %v6005
      %6007 = vmatmul.f32.gmra.mxu0 %v5290
      %v6008 = vpop.f32.mrf.mxu0
      %v6009 = vadd.f32 %v5980, %v6008
      %6010 = vdwg.mxu0
      %6011 = vst [vmem:[%s447] sm:$0xff] %v5594
      %6012 = vst [vmem:[%s447 + $0x8] sm:$0xff] %v5652
      %6013 = vst [vmem:[%s447 + $0x10] sm:$0xff] %v5597
      %6014 = vst [vmem:[%s447 + $0x18] sm:$0xff] %v5655
      %6015 = vst [vmem:[%s447 + $0x20] sm:$0xff] %v5600
      %6016 = vst [vmem:[%s447 + $0x28] sm:$0xff] %v5658
      %6017 = vst [vmem:[%s447 + $0x30] sm:$0xff] %v5603
      %6018 = vst [vmem:[%s447 + $0x38] sm:$0xff] %v5661
      %6019 = vst [vmem:[%s447 + $0x40] sm:$0xff] %v2889
      %6020 = vst [vmem:[%s447 + $0x48] sm:$0xff] %v2890
      %6021 = vst [vmem:[%s447 + $0x50] sm:$0xff] %v2897
      %6022 = vst [vmem:[%s447 + $0x58] sm:$0xff] %v2898
      %s6023 = scalar_lea.vmem %s447, 96
      %6024 = vst [vmem:[%s6023] sm:$0xff] %v5710
      %6025 = vst [vmem:[%s6023 + $0x8] sm:$0xff] %v5768
      %6026 = vst [vmem:[%s6023 + $0x10] sm:$0xff] %v5713
      %6027 = vst [vmem:[%s6023 + $0x18] sm:$0xff] %v5771
      %6028 = vst [vmem:[%s6023 + $0x20] sm:$0xff] %v5716
      %6029 = vst [vmem:[%s6023 + $0x28] sm:$0xff] %v5774
      %6030 = vst [vmem:[%s6023 + $0x30] sm:$0xff] %v5719
      %6031 = vst [vmem:[%s6023 + $0x38] sm:$0xff] %v5777
      %6032 = vst [vmem:[%s6023 + $0x40] sm:$0xff] %v2891
      %6033 = vst [vmem:[%s6023 + $0x48] sm:$0xff] %v2892
      %6034 = vst [vmem:[%s6023 + $0x50] sm:$0xff] %v2899
      %6035 = vst [vmem:[%s6023 + $0x58] sm:$0xff] %v2900
      %s6036 = scalar_lea.vmem %s447, 192
      %6037 = vst [vmem:[%s6036] sm:$0xff] %v5826
      %6038 = vst [vmem:[%s6036 + $0x8] sm:$0xff] %v5884
      %6039 = vst [vmem:[%s6036 + $0x10] sm:$0xff] %v5829
      %6040 = vst [vmem:[%s6036 + $0x18] sm:$0xff] %v5887
      %6041 = vst [vmem:[%s6036 + $0x20] sm:$0xff] %v5832
      %6042 = vst [vmem:[%s6036 + $0x28] sm:$0xff] %v5890
      %6043 = vst [vmem:[%s6036 + $0x30] sm:$0xff] %v5835
      %6044 = vst [vmem:[%s6036 + $0x38] sm:$0xff] %v5893
      %6045 = vst [vmem:[%s6036 + $0x40] sm:$0xff] %v2893
      %6046 = vst [vmem:[%s6036 + $0x48] sm:$0xff] %v2894
      %6047 = vst [vmem:[%s6036 + $0x50] sm:$0xff] %v2901
      %6048 = vst [vmem:[%s6036 + $0x58] sm:$0xff] %v2902
      %s6049 = scalar_lea.vmem %s447, 288
      %6050 = vst [vmem:[%s6049] sm:$0xff] %v5942
      %6051 = vst [vmem:[%s6049 + $0x8] sm:$0xff] %v6000
      %6052 = vst [vmem:[%s6049 + $0x10] sm:$0xff] %v5945
      %6053 = vst [vmem:[%s6049 + $0x18] sm:$0xff] %v6003
      %6054 = vst [vmem:[%s6049 + $0x20] sm:$0xff] %v5948
      %6055 = vst [vmem:[%s6049 + $0x28] sm:$0xff] %v6006
      %6056 = vst [vmem:[%s6049 + $0x30] sm:$0xff] %v5951
      %6057 = vst [vmem:[%s6049 + $0x38] sm:$0xff] %v6009
      %6058 = vst [vmem:[%s6049 + $0x40] sm:$0xff] %v2895
      %6059 = vst [vmem:[%s6049 + $0x48] sm:$0xff] %v2896
      %6060 = vst [vmem:[%s6049 + $0x50] sm:$0xff] %v2903
      %6061 = vst [vmem:[%s6049 + $0x58] sm:$0xff] %v2904
      %s6062 = smul.u32 4, %s24
      %p6063 = scmp.lt.s32.totalorder %s6062, 7
      %s6064 = scalar_select %p6063, %s6062, 7
      %s6065 = smul.addr %s6064, 12
      %s6066 = smul.addr %s6065, 8
      %s6067 = scalar_lea.vmem %s13, %s6066
      // Predicated region
      $region73: #{mini_unet_forward.1} parent=71 // pred_check
        %p6068 = pneg %p320
      $region74: #{mini_unet_forward.1} parent=71 // pred_check_branch
        %6070 = sbr.rel (%p6068) target = $region76
      $region75: #{mini_unet_forward.1} parent=71 // pred_region
        %s6071 = smul.u32 4, %s24
      $region76: #{mini_unet_forward.1} parent=71 // pred_fallthru
        _
    $region72: #{mini_unet_forward.1} parent=5 // pred_fallthru
      _
    %p6072 = scmp.le.s32.totalorder 2, %s19
    // Predicated region
    $region77: #{mini_unet_forward.1} parent=5 // pred_check
      %p6073 = pneg %p6072
    $region78: #{mini_unet_forward.1} parent=5 // pred_check_branch
      %6075 = sbr.rel (%p6073) target = $region80
    $region79: #{mini_unet_forward.1} parent=5 // pred_region
      %s6076 = ssub.s32 %s19, 2
      // Predicated region
      $region81: #{mini_unet_forward.1} parent=79 // pred_check
        %p6077 = pneg %p326
      $region82: #{mini_unet_forward.1} parent=79 // pred_check_branch
        %6079 = sbr.rel (%p6077) target = $region84
      $region83: #{mini_unet_forward.1} parent=79 // pred_region
        %s6080 = smul.u32 4, %s25
        %p6081 = scmp.lt.s32.totalorder %s6080, 7
        %s6082 = scalar_select %p6081, %s6080, 7
        %s6083 = smul.addr %s6082, 12
        %s6084 = smul.addr %s6083, 8
        %s6085 = scalar_lea.vmem %s13, %s6084
      $region84: #{mini_unet_forward.1} parent=79 // pred_fallthru
        _
    $region80: #{mini_unet_forward.1} parent=5 // pred_fallthru
      _
  $region6: #{mini_unet_forward.1} parent=0 // loop_footer
    %s23 = sadd.s32 1, %s19
  $region7: #{mini_unet_forward.1} parent=0 // loop_footer_branch
    %18 = sbr.rel target = $region3
  $region8: #{mini_unet_forward.1} parent=0 // loop_exit
    _

</llo_original>
